<compile_context>
chip_gen: v5e
topology: v5e:2x2
jax: 0.10.0
libtpu: 0.0.40
codegen_flags: <defaults>
</compile_context>

<pallas_src>
import functools

import jax
import jax.numpy as jnp
from jax.experimental import pallas as pl
from jax.experimental.pallas import tpu as pltpu

EPS = 1e-5                      # nn.BatchNorm2d default eps
LANE = 128
VMEM_LIMIT = 48 * 1024 * 1024   # <= ~48-56 MiB so it also fits v7x (64 MiB/TC)


def _rup(x, m):
    return (x + m - 1) // m * m


def _cparams():
    return pltpu.CompilerParams(dimension_semantics=("parallel",),
                                vmem_limit_bytes=VMEM_LIMIT)


# ----------------------------- Pallas kernels ----------------------------- #

def _mm_stats_kernel(x_ref, w_ref, y_ref, st_ref):
    """Stage 1: conv1x1 as a matmul (bf16 -> f32 acc) + per-image per-channel
    sum / sum-of-squares.  Halo / padding rows of x are exactly zero, so they
    contribute nothing to the statistics (count stays N*H*W)."""
    y = jnp.dot(x_ref[0], w_ref[...], preferred_element_type=jnp.float32)
    y_ref[0] = y.astype(y_ref.dtype)
    s = jnp.sum(y, axis=0, keepdims=True)
    q = jnp.sum(y * y, axis=0, keepdims=True)
    st_ref[0] = jnp.concatenate([s, q], axis=0)


def _conv3x3_fused_kernel(y1_ref, sc_ref, sh_ref, min_ref, mout_ref, w_ref,
                          y2_ref, st_ref, a_ref, *, Wp, r_out):
    """Stage 2: fused BN1 + ReLU on the raw conv1 output, then the 3x3 conv as
    nine row-shifted matmuls (tap (di, dj) is a constant row offset di*Wp+dj).

    The input validity mask keeps spatial-halo / row-padding rows exactly
    zero (the conv's zero padding must apply to the *post-BN* activation);
    the output mask keeps invalid padded-width rows out of the statistics.
    """
    cc = y2_ref.shape[2]
    # BN1 epilogue fused on the load: a = relu(y1*scale + shift) * valid_in.
    a = jnp.maximum(y1_ref[0].astype(jnp.float32) * sc_ref[...] + sh_ref[...],
                    0.0)
    a_ref[...] = a * min_ref[...]
    # 9-tap accumulation: slice the activated input, not the f32 output.
    acc = jnp.zeros((r_out, cc), jnp.float32)
    for di in range(3):
        for dj in range(3):
            off = di * Wp + dj
            acc = acc + jnp.dot(
                a_ref[off:off + r_out, :].astype(jnp.bfloat16),
                w_ref[di * 3 + dj],
                preferred_element_type=jnp.float32)
    y2_ref[0] = acc.astype(y2_ref.dtype)
    am = acc * mout_ref[...]          # only valid output pixels enter stats
    s = jnp.sum(am, axis=0, keepdims=True)
    q = jnp.sum(am * acc, axis=0, keepdims=True)
    st_ref[0] = jnp.concatenate([s, q], axis=0)


def _mm_fused_stats_kernel(y2_ref, sc_ref, sh_ref, mout_ref, w_ref,
                           y3_ref, st_ref):
    """Stage 3: fused BN2 + ReLU on the raw conv2 output (invalid padded-width
    rows masked to zero so the stats stay exact), then conv1x1 as a matmul."""
    a = jnp.maximum(y2_ref[0].astype(jnp.float32) * sc_ref[...] + sh_ref[...],
                    0.0)
    a = a * mout_ref[...]
    y = jnp.dot(a.astype(jnp.bfloat16), w_ref[...],
                preferred_element_type=jnp.float32)
    y3_ref[0] = y.astype(y3_ref.dtype)
    s = jnp.sum(y, axis=0, keepdims=True)
    q = jnp.sum(y * y, axis=0, keepdims=True)
    st_ref[0] = jnp.concatenate([s, q], axis=0)


def _bn_id_relu_kernel(y3_ref, sc_ref, sh_ref, id_ref, o_ref, *, Wp, r_out):
    """Stage 4: BN3 (scale/shift) + identity + ReLU.

    The identity operand is the padded bf16 input x1 itself: conv-output row
    oh*Wp + ow (pixel (oh, ow)) corresponds to x1 row oh*Wp + ow + (Wp + 1).
    """
    ident = id_ref[0].astype(jnp.float32)[Wp + 1:Wp + 1 + r_out, :]
    out = y3_ref[0].astype(jnp.float32) * sc_ref[...] + sh_ref[...] + ident
    o_ref[0] = jnp.maximum(out, 0.0)


# ------------------------------ wrappers ---------------------------------- #

def matmul_stats(x, w):
    n, r, kp = x.shape
    cp = w.shape[1]
    return pl.pallas_call(
        _mm_stats_kernel,
        out_shape=(jax.ShapeDtypeStruct((n, r, cp), jnp.bfloat16),
                   jax.ShapeDtypeStruct((n, 2, cp), jnp.float32)),
        grid=(n,),
        in_specs=[pl.BlockSpec((1, r, kp), lambda i: (i, 0, 0)),
                  pl.BlockSpec((kp, cp), lambda i: (0, 0))],
        out_specs=(pl.BlockSpec((1, r, cp), lambda i: (i, 0, 0)),
                   pl.BlockSpec((1, 2, cp), lambda i: (i, 0, 0))),
        compiler_params=_cparams(),
        cost_estimate=pl.CostEstimate(
            flops=2 * n * r * kp * cp, transcendentals=0,
            bytes_accessed=(n * r * (kp + cp) + kp * cp) * 2 + n * 2 * cp * 4),
    )(x, w)


def conv3x3_fused(y1, sc, sh, mask_in, mask_out, w2, *, Wp, r_out):
    # NOTE: grid=(N,) gives one step per image; for tiny batches on v7x a
    # second row-band grid axis would give each TensorCore more steps, and for
    # large channel counts the output channels should get a grid axis so the
    # block fits 64 MiB VMEM.
    n, r_in, c = y1.shape
    cc = w2.shape[2]
    kern = functools.partial(_conv3x3_fused_kernel, Wp=Wp, r_out=r_out)
    return pl.pallas_call(
        kern,
        out_shape=(jax.ShapeDtypeStruct((n, r_out, cc), jnp.bfloat16),
                   jax.ShapeDtypeStruct((n, 2, cc), jnp.float32)),
        grid=(n,),
        in_specs=[pl.BlockSpec((1, r_in, c), lambda i: (i, 0, 0)),
                  pl.BlockSpec((1, c), lambda i: (0, 0)),
                  pl.BlockSpec((1, c), lambda i: (0, 0)),
                  pl.BlockSpec((r_in, 1), lambda i: (0, 0)),
                  pl.BlockSpec((r_out, 1), lambda i: (0, 0)),
                  pl.BlockSpec((9, c, cc), lambda i: (0, 0, 0))],
        out_specs=(pl.BlockSpec((1, r_out, cc), lambda i: (i, 0, 0)),
                   pl.BlockSpec((1, 2, cc), lambda i: (i, 0, 0))),
        scratch_shapes=[pltpu.VMEM((r_in, c), jnp.float32)],
        compiler_params=_cparams(),
        cost_estimate=pl.CostEstimate(
            flops=2 * n * 9 * r_out * c * cc, transcendentals=0,
            bytes_accessed=(n * (r_in * c + r_out * cc) + 9 * c * cc) * 2
            + n * 2 * cc * 4),
    )(y1, sc, sh, mask_in, mask_out, w2)


def matmul_fused_stats(y2, sc, sh, mask_out, w):
    n, r, c = y2.shape
    cp = w.shape[1]
    return pl.pallas_call(
        _mm_fused_stats_kernel,
        out_shape=(jax.ShapeDtypeStruct((n, r, cp), jnp.bfloat16),
                   jax.ShapeDtypeStruct((n, 2, cp), jnp.float32)),
        grid=(n,),
        in_specs=[pl.BlockSpec((1, r, c), lambda i: (i, 0, 0)),
                  pl.BlockSpec((1, c), lambda i: (0, 0)),
                  pl.BlockSpec((1, c), lambda i: (0, 0)),
                  pl.BlockSpec((r, 1), lambda i: (0, 0)),
                  pl.BlockSpec((c, cp), lambda i: (0, 0))],
        out_specs=(pl.BlockSpec((1, r, cp), lambda i: (i, 0, 0)),
                   pl.BlockSpec((1, 2, cp), lambda i: (i, 0, 0))),
        compiler_params=_cparams(),
        cost_estimate=pl.CostEstimate(
            flops=2 * n * r * c * cp, transcendentals=0,
            bytes_accessed=(n * r * (c + cp) + c * cp) * 2 + n * 2 * cp * 4),
    )(y2, sc, sh, mask_out, w)


def bn_identity_relu(y3, sc, sh, x1, *, Wp, r_out):
    n, r, cp = y3.shape
    r_in = x1.shape[1]
    kern = functools.partial(_bn_id_relu_kernel, Wp=Wp, r_out=r_out)
    return pl.pallas_call(
        kern,
        out_shape=jax.ShapeDtypeStruct((n, r, cp), jnp.float32),
        grid=(n,),
        in_specs=[pl.BlockSpec((1, r, cp), lambda i: (i, 0, 0)),
                  pl.BlockSpec((1, cp), lambda i: (0, 0)),
                  pl.BlockSpec((1, cp), lambda i: (0, 0)),
                  pl.BlockSpec((1, r_in, cp), lambda i: (i, 0, 0))],
        out_specs=pl.BlockSpec((1, r, cp), lambda i: (i, 0, 0)),
        compiler_params=_cparams(),
        cost_estimate=pl.CostEstimate(
            flops=3 * n * r * cp, transcendentals=0,
            bytes_accessed=n * ((r + r_in) * cp * 2 + r * cp * 4)),
    )(y3, sc, sh, x1)


def _bn_scale_shift(st, gamma, beta, count):
    """Tiny (1, C) work: exact train-mode BN scale/shift from global sums."""
    s = jnp.sum(st[:, 0, :], axis=0, keepdims=True)
    q = jnp.sum(st[:, 1, :], axis=0, keepdims=True)
    mean = s / count
    var = jnp.maximum(q / count - mean * mean, 0.0)   # E[y^2] - mean^2 (f32)
    scale = gamma * jax.lax.rsqrt(var + EPS)
    shift = beta - mean * scale
    return scale, shift


# ------------------------------- forward ----------------------------------- #

def block_forward(x_nchw, p, *, inter):
    """Bottleneck block forward (identity_downsample=None, stride=1)."""
    n, cin, h, w = x_nchw.shape
    c1, c3 = inter, 4 * inter
    # TODO(synk): identity_downsample (conv+BN skip path), stride > 1 and the
    # BatchNorm running-stat (momentum) updates are not implemented; the
    # module default identity_downsample=None requires stride=1 and
    # in_channels == 4 * intermediate_channels.
    assert cin == c3, "identity_downsample=None requires in_channels == 4*inter"

    kp, c1p = p["w1"].shape
    c3p = p["w3"].shape[1]
    assert kp == c3p
    hp, wp = h + 2, w + 2
    m = n * h * w
    r_out = _rup(h * wp, 8)                 # conv-output rows (padded-width)
    r_in = _rup(r_out + 2 * wp + 2, 8)      # padded-image rows (+ tap reach)

    # ---- input glue: NCHW -> zero-ring-padded rows r = ph*Wp + pw, bf16,
    # channels zero-padded to a lane multiple.  Also serves as the identity.
    x_nhwc = jnp.transpose(x_nchw, (0, 2, 3, 1))
    x_pad = jnp.pad(x_nhwc, ((0, 0), (1, 1), (1, 1), (0, kp - cin)))
    x1 = jnp.pad(x_pad.reshape(n, hp * wp, kp),
                 ((0, 0), (0, r_in - hp * wp), (0, 0))).astype(jnp.bfloat16)

    # Row-validity masks (tiny, constant index_map => fetched once).
    ri = jnp.arange(r_in, dtype=jnp.int32)
    mask_in = (((ri // wp) >= 1) & ((ri // wp) <= h)
               & ((ri % wp) >= 1) & ((ri % wp) <= w))
    mask_in = mask_in.astype(jnp.float32).reshape(r_in, 1)
    ro = jnp.arange(r_out, dtype=jnp.int32)
    mask_out = (((ro % wp) < w) & (ro < h * wp))
    mask_out = mask_out.astype(jnp.float32).reshape(r_out, 1)

    # ---- stage 1: conv1 (1x1) + batch stats --------------------------------
    y1, st1 = matmul_stats(x1, p["w1"])
    sc1, sh1 = _bn_scale_shift(st1, p["g1"], p["b1"], m)

    # ---- stage 2: fused BN1+ReLU -> conv2 (3x3, pad=1) + batch stats -------
    y2, st2 = conv3x3_fused(y1, sc1, sh1, mask_in, mask_out, p["w2"],
                            Wp=wp, r_out=r_out)
    sc2, sh2 = _bn_scale_shift(st2, p["g2"], p["b2"], m)

    # ---- stage 3: fused BN2+ReLU -> conv3 (1x1) + batch stats --------------
    y3, st3 = matmul_fused_stats(y2, sc2, sh2, mask_out, p["w3"])
    sc3, sh3 = _bn_scale_shift(st3, p["g3"], p["b3"], m)

    # ---- stage 4: BN3 + identity + ReLU -------------------------------------
    out = bn_identity_relu(y3, sc3, sh3, x1, Wp=wp, r_out=r_out)

    # ---- output glue: extract valid pixels, back to NCHW f32 ---------------
    out = out[:, :h * wp, :].reshape(n, h, wp, c3p)[:, :, :w, :c3]
    return jnp.transpose(out, (0, 3, 1, 2))


# ----------------------------- parameters ---------------------------------- #

def make_params(key, in_channels, inter):
    """Returns (padded bf16/f32 kernel params, raw f32 params for a reference).

    Conv biases are omitted: exactly cancelled by training-mode BatchNorm.
    Channel axes are zero-padded to x128 so stores are lane-dense (on v6e/v7x
    with real >=256-wide channels, 256-wide tiles would fill the MXU better).
    gamma/beta padding is zero so padded channels stay exactly zero.
    """
    c1, c3 = inter, 4 * inter
    kp = _rup(max(in_channels, LANE), LANE)
    c1p = _rup(max(c1, LANE), LANE)
    c3p = _rup(max(c3, LANE), LANE)
    ks = jax.random.split(key, 9)
    s = 0.1
    raw = {
        "w1": s * jax.random.normal(ks[0], (in_channels, c1), jnp.float32),
        "w2": s * jax.random.normal(ks[1], (3, 3, c1, c1), jnp.float32),
        "w3": s * jax.random.normal(ks[2], (c1, c3), jnp.float32),
        "g1": 1.0 + s * jax.random.normal(ks[3], (c1,), jnp.float32),
        "b1": s * jax.random.normal(ks[4], (c1,), jnp.float32),
        "g2": 1.0 + s * jax.random.normal(ks[5], (c1,), jnp.float32),
        "b2": s * jax.random.normal(ks[6], (c1,), jnp.float32),
        "g3": 1.0 + s * jax.random.normal(ks[7], (c3,), jnp.float32),
        "b3": s * jax.random.normal(ks[8], (c3,), jnp.float32),
    }

    def pad_mat(wm, k, c):
        return jnp.pad(wm, ((0, k - wm.shape[0]),
                            (0, c - wm.shape[1]))).astype(jnp.bfloat16)

    def pad_vec(v, c):
        return jnp.pad(v, (0, c - v.shape[0])).reshape(1, c).astype(jnp.float32)

    padded = {
        "w1": pad_mat(raw["w1"], kp, c1p),
        "w2": jnp.pad(raw["w2"].reshape(9, c1, c1),
                      ((0, 0), (0, c1p - c1),
                       (0, c1p - c1))).astype(jnp.bfloat16),
        "w3": pad_mat(raw["w3"], c1p, c3p),
        "g1": pad_vec(raw["g1"], c1p), "b1": pad_vec(raw["b1"], c1p),
        "g2": pad_vec(raw["g2"], c1p), "b2": pad_vec(raw["b2"], c1p),
        "g3": pad_vec(raw["g3"], c3p), "b3": pad_vec(raw["b3"], c3p),
    }
    return padded, raw


def reference_block(x, raw):
    """Pure-JAX f32 reference of the bottleneck forward (train-mode BN)."""
    def bn(y, g, b):
        mean = jnp.mean(y, axis=(0, 2, 3), keepdims=True)
        var = jnp.mean((y - mean) ** 2, axis=(0, 2, 3), keepdims=True)
        yhat = (y - mean) * jax.lax.rsqrt(var + EPS)
        return yhat * g[None, :, None, None] + b[None, :, None, None]

    def conv1x1(y, w):                       # w: (cin, cout)
        return jnp.einsum("nchw,cd->ndhw", y, w)

    def conv3x3(y, w):                       # w: (3, 3, cin, cout)
        y_nhwc = jnp.transpose(y, (0, 2, 3, 1))
        o = jax.lax.conv_general_dilated(
            y_nhwc, w, window_strides=(1, 1), padding=((1, 1), (1, 1)),
            dimension_numbers=("NHWC", "HWIO", "NHWC"))
        return jnp.transpose(o, (0, 3, 1, 2))

    h1 = jax.nn.relu(bn(conv1x1(x, raw["w1"]), raw["g1"], raw["b1"]))
    h2 = jax.nn.relu(bn(conv3x3(h1, raw["w2"]), raw["g2"], raw["b2"]))
    h3 = bn(conv1x1(h2, raw["w3"]), raw["g3"], raw["b3"])
    return jax.nn.relu(h3 + x)


# --------------------------------- main ------------------------------------ #

if __name__ == "__main__":
    key = jax.random.PRNGKey(0)
    k_x, k_p = jax.random.split(key)

    batch, inter = 2, 4
    cin = 4 * inter          # identity_downsample=None => in == out channels
    height = width = 16

    x = jax.random.normal(k_x, (batch, cin, height, width), jnp.float32)
    params, raw = make_params(k_p, cin, inter)

    fwd = jax.jit(functools.partial(block_forward, inter=inter))
    out = jax.block_until_ready(fwd(x, params))

    assert out.shape == (batch, 4 * inter, height, width), out.shape
    assert bool(jnp.all(jnp.isfinite(out)))
    assert bool(jnp.all(out >= 0.0))          # final ReLU

    # Compare against a pure-JAX f32 reference (bf16 storage => loose tol).
    ref = reference_block(x, raw)
    err = float(jnp.max(jnp.abs(out - ref)))
    assert err < 0.15, f"max abs err vs reference: {err}"

    print("KERNEL_OK")
</pallas_src>

<mosaic_0001>
module attributes {stable_mosaic.version = 11 : i64} {
  func.func @_mm_stats_kernel(%arg0: i32, %arg1: memref<1x328x128xbf16, #tpu.memory_space<vmem>>, %arg2: memref<128x128xbf16, #tpu.memory_space<vmem>>, %arg3: memref<1x328x128xbf16, #tpu.memory_space<vmem>>, %arg4: memref<1x2x128xf32, #tpu.memory_space<vmem>>) attributes {dimension_semantics = [#tpu.dimension_semantics<parallel>], iteration_bounds = array<i64: 2>, scalar_prefetch = 0 : i64, scratch_operands = 0 : i64, tpu.core_type = #tpu.core_type<tc>, window_params = [{transform_indices = @transform_0, window_bounds = array<i64: 1, 328, 128>}, {pipeline_mode = #tpu.pipeline_mode<synchronous>, transform_indices = @transform_1, window_bounds = array<i64: 128, 128>}, {transform_indices = @transform_2, window_bounds = array<i64: 1, 328, 128>}, {transform_indices = @transform_3, window_bounds = array<i64: 1, 2, 128>}]} {
    %c0 = arith.constant 0 : index
    %c0_0 = arith.constant 0 : index
    %c0_1 = arith.constant 0 : index
    %0 = vector.load %arg1[%c0, %c0_0, %c0_1] : memref<1x328x128xbf16, #tpu.memory_space<vmem>>, vector<1x328x128xbf16>
    %1 = vector.shape_cast %0 : vector<1x328x128xbf16> to vector<328x128xbf16>
    %c0_2 = arith.constant 0 : index
    %c0_3 = arith.constant 0 : index
    %2 = vector.load %arg2[%c0_2, %c0_3] : memref<128x128xbf16, #tpu.memory_space<vmem>>, vector<128x128xbf16>
    %cst = arith.constant dense<0.000000e+00> : vector<328x128xf32>
    %3 = tpu.matmul %1, %2, %cst {dimension_numbers = #tpu.dot_dimension_numbers<[1], [0], [0], [1], [0, 0, 1, 1], [], []>} : vector<328x128xbf16>, vector<128x128xbf16>, vector<328x128xf32> -> vector<328x128xf32>
    %4 = arith.truncf %3 : vector<328x128xf32> to vector<328x128xbf16>
    %c0_4 = arith.constant 0 : index
    %c0_5 = arith.constant 0 : index
    %c0_6 = arith.constant 0 : index
    %5 = vector.load %arg3[%c0_4, %c0_5, %c0_6] : memref<1x328x128xbf16, #tpu.memory_space<vmem>>, vector<1x328x128xbf16>
    %6 = vector.shape_cast %5 : vector<1x328x128xbf16> to vector<328x128xbf16>
    %7 = vector.shape_cast %4 : vector<328x128xbf16> to vector<1x328x128xbf16>
    tpu.vector_store %arg3[%c0_4, %c0_5, %c0_6], %7 {strides = array<i32>} : memref<1x328x128xbf16, #tpu.memory_space<vmem>>, vector<1x328x128xbf16>,
    %cst_7 = arith.constant dense<0.000000e+00> : vector<128xf32>
    %8 = vector.multi_reduction <add>, %3, %cst_7 [0] : vector<328x128xf32> to vector<128xf32>
    %9 = vector.shape_cast %8 : vector<128xf32> to vector<1x128xf32>
    %10 = arith.mulf %3, %3 : vector<328x128xf32>
    %cst_8 = arith.constant dense<0.000000e+00> : vector<128xf32>
    %11 = vector.multi_reduction <add>, %10, %cst_8 [0] : vector<328x128xf32> to vector<128xf32>
    %12 = vector.shape_cast %11 : vector<128xf32> to vector<1x128xf32>
    %13 = tpu.concatenate %9, %12 in 0 : vector<1x128xf32>, vector<1x128xf32> -> vector<2x128xf32>
    %c0_9 = arith.constant 0 : index
    %c0_10 = arith.constant 0 : index
    %c0_11 = arith.constant 0 : index
    %14 = vector.load %arg4[%c0_9, %c0_10, %c0_11] : memref<1x2x128xf32, #tpu.memory_space<vmem>>, vector<1x2x128xf32>
    %15 = vector.shape_cast %14 : vector<1x2x128xf32> to vector<2x128xf32>
    %16 = vector.shape_cast %13 : vector<2x128xf32> to vector<1x2x128xf32>
    tpu.vector_store %arg4[%c0_9, %c0_10, %c0_11], %16 {strides = array<i32>} : memref<1x2x128xf32, #tpu.memory_space<vmem>>, vector<1x2x128xf32>,
    return
  }
  func.func @transform_0(%arg0: i32) -> (i32, i32, i32) {
    %c0_i32 = arith.constant 0 : i32
    %c0_i32_0 = arith.constant 0 : i32
    %c0_i32_1 = arith.constant 0 : i32
    return %arg0, %c0_i32, %c0_i32_0 : i32, i32, i32
  }
  func.func @transform_1(%arg0: i32) -> (i32, i32) {
    %c0_i32 = arith.constant 0 : i32
    %c0_i32_0 = arith.constant 0 : i32
    %c0_i32_1 = arith.constant 0 : i32
    return %c0_i32, %c0_i32_0 : i32, i32
  }
  func.func @transform_2(%arg0: i32) -> (i32, i32, i32) {
    %c0_i32 = arith.constant 0 : i32
    %c0_i32_0 = arith.constant 0 : i32
    %c0_i32_1 = arith.constant 0 : i32
    return %arg0, %c0_i32, %c0_i32_0 : i32, i32, i32
  }
  func.func @transform_3(%arg0: i32) -> (i32, i32, i32) {
    %c0_i32 = arith.constant 0 : i32
    %c0_i32_0 = arith.constant 0 : i32
    %c0_i32_1 = arith.constant 0 : i32
    return %arg0, %c0_i32, %c0_i32_0 : i32, i32, i32
  }
}

module attributes {stable_mosaic.version = 11 : i64} {
  func.func @_conv3x3_fused_kernel(%arg0: i32, %arg1: memref<1x328x128xbf16, #tpu.memory_space<vmem>>, %arg2: memref<1x128xf32, #tpu.memory_space<vmem>>, %arg3: memref<1x128xf32, #tpu.memory_space<vmem>>, %arg4: memref<328x1xf32, #tpu.memory_space<vmem>>, %arg5: memref<288x1xf32, #tpu.memory_space<vmem>>, %arg6: memref<9x128x128xbf16, #tpu.memory_space<vmem>>, %arg7: memref<1x288x128xbf16, #tpu.memory_space<vmem>>, %arg8: memref<1x2x128xf32, #tpu.memory_space<vmem>>, %arg9: memref<328x128xf32, #tpu.memory_space<vmem>>) attributes {dimension_semantics = [#tpu.dimension_semantics<parallel>], iteration_bounds = array<i64: 2>, scalar_prefetch = 0 : i64, scratch_operands = 1 : i64, tpu.core_type = #tpu.core_type<tc>, window_params = [{transform_indices = @transform_0, window_bounds = array<i64: 1, 328, 128>}, {pipeline_mode = #tpu.pipeline_mode<synchronous>, transform_indices = @transform_1, window_bounds = array<i64: 1, 128>}, {pipeline_mode = #tpu.pipeline_mode<synchronous>, transform_indices = @transform_2, window_bounds = array<i64: 1, 128>}, {pipeline_mode = #tpu.pipeline_mode<synchronous>, transform_indices = @transform_3, window_bounds = array<i64: 328, 1>}, {pipeline_mode = #tpu.pipeline_mode<synchronous>, transform_indices = @transform_4, window_bounds = array<i64: 288, 1>}, {pipeline_mode = #tpu.pipeline_mode<synchronous>, transform_indices = @transform_5, window_bounds = array<i64: 9, 128, 128>}, {transform_indices = @transform_6, window_bounds = array<i64: 1, 288, 128>}, {transform_indices = @transform_7, window_bounds = array<i64: 1, 2, 128>}]} {
    %c0 = arith.constant 0 : index
    %c0_0 = arith.constant 0 : index
    %c0_1 = arith.constant 0 : index
    %0 = vector.load %arg1[%c0, %c0_0, %c0_1] : memref<1x328x128xbf16, #tpu.memory_space<vmem>>, vector<1x328x128xbf16>
    %1 = vector.shape_cast %0 : vector<1x328x128xbf16> to vector<328x128xbf16>
    %2 = arith.extf %1 : vector<328x128xbf16> to vector<328x128xf32>
    %c0_2 = arith.constant 0 : index
    %c0_3 = arith.constant 0 : index
    %3 = vector.load %arg2[%c0_2, %c0_3] : memref<1x128xf32, #tpu.memory_space<vmem>>, vector<1x128xf32>
    %4 = vector.broadcast %3 : vector<1x128xf32> to vector<328x128xf32>
    %5 = arith.mulf %2, %4 : vector<328x128xf32>
    %c0_4 = arith.constant 0 : index
    %c0_5 = arith.constant 0 : index
    %6 = vector.load %arg3[%c0_4, %c0_5] : memref<1x128xf32, #tpu.memory_space<vmem>>, vector<1x128xf32>
    %7 = vector.broadcast %6 : vector<1x128xf32> to vector<328x128xf32>
    %8 = arith.addf %5, %7 : vector<328x128xf32>
    %cst = arith.constant 0.000000e+00 : f32
    %9 = vector.broadcast %cst : f32 to vector<328x128xf32>
    %10 = arith.maximumf %8, %9 : vector<328x128xf32>
    %c0_6 = arith.constant 0 : index
    %c0_7 = arith.constant 0 : index
    %11 = vector.load %arg4[%c0_6, %c0_7] : memref<328x1xf32, #tpu.memory_space<vmem>>, vector<328x1xf32>
    %12 = vector.broadcast %11 : vector<328x1xf32> to vector<328x128xf32>
    %13 = arith.mulf %10, %12 : vector<328x128xf32>
    %c0_8 = arith.constant 0 : index
    %c0_9 = arith.constant 0 : index
    %14 = vector.load %arg9[%c0_8, %c0_9] : memref<328x128xf32, #tpu.memory_space<vmem>>, vector<328x128xf32>
    tpu.vector_store %arg9[%c0_8, %c0_9], %13 {strides = array<i32>} : memref<328x128xf32, #tpu.memory_space<vmem>>, vector<328x128xf32>,
    %cst_10 = arith.constant 0.000000e+00 : f32
    %15 = vector.broadcast %cst_10 : f32 to vector<288x128xf32>
    %c0_11 = arith.constant 0 : index
    %c0_12 = arith.constant 0 : index
    %16 = vector.load %arg9[%c0_11, %c0_12] : memref<328x128xf32, #tpu.memory_space<vmem>>, vector<288x128xf32>
    %17 = arith.truncf %16 : vector<288x128xf32> to vector<288x128xbf16>
    %c0_13 = arith.constant 0 : index
    %c0_14 = arith.constant 0 : index
    %c0_15 = arith.constant 0 : index
    %18 = vector.load %arg6[%c0_13, %c0_14, %c0_15] : memref<9x128x128xbf16, #tpu.memory_space<vmem>>, vector<1x128x128xbf16>
    %19 = vector.shape_cast %18 : vector<1x128x128xbf16> to vector<128x128xbf16>
    %cst_16 = arith.constant dense<0.000000e+00> : vector<288x128xf32>
    %20 = tpu.matmul %17, %19, %cst_16 {dimension_numbers = #tpu.dot_dimension_numbers<[1], [0], [0], [1], [0, 0, 1, 1], [], []>} : vector<288x128xbf16>, vector<128x128xbf16>, vector<288x128xf32> -> vector<288x128xf32>
    %21 = arith.addf %15, %20 : vector<288x128xf32>
    %c1 = arith.constant 1 : index
    %c0_17 = arith.constant 0 : index
    %22 = vector.load %arg9[%c1, %c0_17] : memref<328x128xf32, #tpu.memory_space<vmem>>, vector<288x128xf32>
    %23 = arith.truncf %22 : vector<288x128xf32> to vector<288x128xbf16>
    %c1_18 = arith.constant 1 : index
    %c0_19 = arith.constant 0 : index
    %c0_20 = arith.constant 0 : index
    %24 = vector.load %arg6[%c1_18, %c0_19, %c0_20] : memref<9x128x128xbf16, #tpu.memory_space<vmem>>, vector<1x128x128xbf16>
    %25 = vector.shape_cast %24 : vector<1x128x128xbf16> to vector<128x128xbf16>
    %cst_21 = arith.constant dense<0.000000e+00> : vector<288x128xf32>
    %26 = tpu.matmul %23, %25, %cst_21 {dimension_numbers = #tpu.dot_dimension_numbers<[1], [0], [0], [1], [0, 0, 1, 1], [], []>} : vector<288x128xbf16>, vector<128x128xbf16>, vector<288x128xf32> -> vector<288x128xf32>
    %27 = arith.addf %21, %26 : vector<288x128xf32>
    %c2 = arith.constant 2 : index
    %c0_22 = arith.constant 0 : index
    %28 = vector.load %arg9[%c2, %c0_22] : memref<328x128xf32, #tpu.memory_space<vmem>>, vector<288x128xf32>
    %29 = arith.truncf %28 : vector<288x128xf32> to vector<288x128xbf16>
    %c2_23 = arith.constant 2 : index
    %c0_24 = arith.constant 0 : index
    %c0_25 = arith.constant 0 : index
    %30 = vector.load %arg6[%c2_23, %c0_24, %c0_25] : memref<9x128x128xbf16, #tpu.memory_space<vmem>>, vector<1x128x128xbf16>
    %31 = vector.shape_cast %30 : vector<1x128x128xbf16> to vector<128x128xbf16>
    %cst_26 = arith.constant dense<0.000000e+00> : vector<288x128xf32>
    %32 = tpu.matmul %29, %31, %cst_26 {dimension_numbers = #tpu.dot_dimension_numbers<[1], [0], [0], [1], [0, 0, 1, 1], [], []>} : vector<288x128xbf16>, vector<128x128xbf16>, vector<288x128xf32> -> vector<288x128xf32>
    %33 = arith.addf %27, %32 : vector<288x128xf32>
    %c18 = arith.constant 18 : index
    %c0_27 = arith.constant 0 : index
    %34 = vector.load %arg9[%c18, %c0_27] : memref<328x128xf32, #tpu.memory_space<vmem>>, vector<288x128xf32>
    %35 = arith.truncf %34 : vector<288x128xf32> to vector<288x128xbf16>
    %c3 = arith.constant 3 : index
    %c0_28 = arith.constant 0 : index
    %c0_29 = arith.constant 0 : index
    %36 = vector.load %arg6[%c3, %c0_28, %c0_29] : memref<9x128x128xbf16, #tpu.memory_space<vmem>>, vector<1x128x128xbf16>
    %37 = vector.shape_cast %36 : vector<1x128x128xbf16> to vector<128x128xbf16>
    %cst_30 = arith.constant dense<0.000000e+00> : vector<288x128xf32>
    %38 = tpu.matmul %35, %37, %cst_30 {dimension_numbers = #tpu.dot_dimension_numbers<[1], [0], [0], [1], [0, 0, 1, 1], [], []>} : vector<288x128xbf16>, vector<128x128xbf16>, vector<288x128xf32> -> vector<288x128xf32>
    %39 = arith.addf %33, %38 : vector<288x128xf32>
    %c19 = arith.constant 19 : index
    %c0_31 = arith.constant 0 : index
    %40 = vector.load %arg9[%c19, %c0_31] : memref<328x128xf32, #tpu.memory_space<vmem>>, vector<288x128xf32>
    %41 = arith.truncf %40 : vector<288x128xf32> to vector<288x128xbf16>
    %c4 = arith.constant 4 : index
    %c0_32 = arith.constant 0 : index
    %c0_33 = arith.constant 0 : index
    %42 = vector.load %arg6[%c4, %c0_32, %c0_33] : memref<9x128x128xbf16, #tpu.memory_space<vmem>>, vector<1x128x128xbf16>
    %43 = vector.shape_cast %42 : vector<1x128x128xbf16> to vector<128x128xbf16>
    %cst_34 = arith.constant dense<0.000000e+00> : vector<288x128xf32>
    %44 = tpu.matmul %41, %43, %cst_34 {dimension_numbers = #tpu.dot_dimension_numbers<[1], [0], [0], [1], [0, 0, 1, 1], [], []>} : vector<288x128xbf16>, vector<128x128xbf16>, vector<288x128xf32> -> vector<288x128xf32>
    %45 = arith.addf %39, %44 : vector<288x128xf32>
    %c20 = arith.constant 20 : index
    %c0_35 = arith.constant 0 : index
    %46 = vector.load %arg9[%c20, %c0_35] : memref<328x128xf32, #tpu.memory_space<vmem>>, vector<288x128xf32>
    %47 = arith.truncf %46 : vector<288x128xf32> to vector<288x128xbf16>
    %c5 = arith.constant 5 : index
    %c0_36 = arith.constant 0 : index
    %c0_37 = arith.constant 0 : index
    %48 = vector.load %arg6[%c5, %c0_36, %c0_37] : memref<9x128x128xbf16, #tpu.memory_space<vmem>>, vector<1x128x128xbf16>
    %49 = vector.shape_cast %48 : vector<1x128x128xbf16> to vector<128x128xbf16>
    %cst_38 = arith.constant dense<0.000000e+00> : vector<288x128xf32>
    %50 = tpu.matmul %47, %49, %cst_38 {dimension_numbers = #tpu.dot_dimension_numbers<[1], [0], [0], [1], [0, 0, 1, 1], [], []>} : vector<288x128xbf16>, vector<128x128xbf16>, vector<288x128xf32> -> vector<288x128xf32>
    %51 = arith.addf %45, %50 : vector<288x128xf32>
    %c36 = arith.constant 36 : index
    %c0_39 = arith.constant 0 : index
    %52 = vector.load %arg9[%c36, %c0_39] : memref<328x128xf32, #tpu.memory_space<vmem>>, vector<288x128xf32>
    %53 = arith.truncf %52 : vector<288x128xf32> to vector<288x128xbf16>
    %c6 = arith.constant 6 : index
    %c0_40 = arith.constant 0 : index
    %c0_41 = arith.constant 0 : index
    %54 = vector.load %arg6[%c6, %c0_40, %c0_41] : memref<9x128x128xbf16, #tpu.memory_space<vmem>>, vector<1x128x128xbf16>
    %55 = vector.shape_cast %54 : vector<1x128x128xbf16> to vector<128x128xbf16>
    %cst_42 = arith.constant dense<0.000000e+00> : vector<288x128xf32>
    %56 = tpu.matmul %53, %55, %cst_42 {dimension_numbers = #tpu.dot_dimension_numbers<[1], [0], [0], [1], [0, 0, 1, 1], [], []>} : vector<288x128xbf16>, vector<128x128xbf16>, vector<288x128xf32> -> vector<288x128xf32>
    %57 = arith.addf %51, %56 : vector<288x128xf32>
    %c37 = arith.constant 37 : index
    %c0_43 = arith.constant 0 : index
    %58 = vector.load %arg9[%c37, %c0_43] : memref<328x128xf32, #tpu.memory_space<vmem>>, vector<288x128xf32>
    %59 = arith.truncf %58 : vector<288x128xf32> to vector<288x128xbf16>
    %c7 = arith.constant 7 : index
    %c0_44 = arith.constant 0 : index
    %c0_45 = arith.constant 0 : index
    %60 = vector.load %arg6[%c7, %c0_44, %c0_45] : memref<9x128x128xbf16, #tpu.memory_space<vmem>>, vector<1x128x128xbf16>
    %61 = vector.shape_cast %60 : vector<1x128x128xbf16> to vector<128x128xbf16>
    %cst_46 = arith.constant dense<0.000000e+00> : vector<288x128xf32>
    %62 = tpu.matmul %59, %61, %cst_46 {dimension_numbers = #tpu.dot_dimension_numbers<[1], [0], [0], [1], [0, 0, 1, 1], [], []>} : vector<288x128xbf16>, vector<128x128xbf16>, vector<288x128xf32> -> vector<288x128xf32>
    %63 = arith.addf %57, %62 : vector<288x128xf32>
    %c38 = arith.constant 38 : index
    %c0_47 = arith.constant 0 : index
    %64 = vector.load %arg9[%c38, %c0_47] : memref<328x128xf32, #tpu.memory_space<vmem>>, vector<288x128xf32>
    %65 = arith.truncf %64 : vector<288x128xf32> to vector<288x128xbf16>
    %c8 = arith.constant 8 : index
    %c0_48 = arith.constant 0 : index
    %c0_49 = arith.constant 0 : index
    %66 = vector.load %arg6[%c8, %c0_48, %c0_49] : memref<9x128x128xbf16, #tpu.memory_space<vmem>>, vector<1x128x128xbf16>
    %67 = vector.shape_cast %66 : vector<1x128x128xbf16> to vector<128x128xbf16>
    %cst_50 = arith.constant dense<0.000000e+00> : vector<288x128xf32>
    %68 = tpu.matmul %65, %67, %cst_50 {dimension_numbers = #tpu.dot_dimension_numbers<[1], [0], [0], [1], [0, 0, 1, 1], [], []>} : vector<288x128xbf16>, vector<128x128xbf16>, vector<288x128xf32> -> vector<288x128xf32>
    %69 = arith.addf %63, %68 : vector<288x128xf32>
    %70 = arith.truncf %69 : vector<288x128xf32> to vector<288x128xbf16>
    %c0_51 = arith.constant 0 : index
    %c0_52 = arith.constant 0 : index
    %c0_53 = arith.constant 0 : index
    %71 = vector.load %arg7[%c0_51, %c0_52, %c0_53] : memref<1x288x128xbf16, #tpu.memory_space<vmem>>, vector<1x288x128xbf16>
    %72 = vector.shape_cast %71 : vector<1x288x128xbf16> to vector<288x128xbf16>
    %73 = vector.shape_cast %70 : vector<288x128xbf16> to vector<1x288x128xbf16>
    tpu.vector_store %arg7[%c0_51, %c0_52, %c0_53], %73 {strides = array<i32>} : memref<1x288x128xbf16, #tpu.memory_space<vmem>>, vector<1x288x128xbf16>,
    %c0_54 = arith.constant 0 : index
    %c0_55 = arith.constant 0 : index
    %74 = vector.load %arg5[%c0_54, %c0_55] : memref<288x1xf32, #tpu.memory_space<vmem>>, vector<288x1xf32>
    %75 = vector.broadcast %74 : vector<288x1xf32> to vector<288x128xf32>
    %76 = arith.mulf %69, %75 : vector<288x128xf32>
    %cst_56 = arith.constant dense<0.000000e+00> : vector<128xf32>
    %77 = vector.multi_reduction <add>, %76, %cst_56 [0] : vector<288x128xf32> to vector<128xf32>
    %78 = vector.shape_cast %77 : vector<128xf32> to vector<1x128xf32>
    %79 = arith.mulf %76, %69 : vector<288x128xf32>
    %cst_57 = arith.constant dense<0.000000e+00> : vector<128xf32>
    %80 = vector.multi_reduction <add>, %79, %cst_57 [0] : vector<288x128xf32> to vector<128xf32>
    %81 = vector.shape_cast %80 : vector<128xf32> to vector<1x128xf32>
    %82 = tpu.concatenate %78, %81 in 0 : vector<1x128xf32>, vector<1x128xf32> -> vector<2x128xf32>
    %c0_58 = arith.constant 0 : index
    %c0_59 = arith.constant 0 : index
    %c0_60 = arith.constant 0 : index
    %83 = vector.load %arg8[%c0_58, %c0_59, %c0_60] : memref<1x2x128xf32, #tpu.memory_space<vmem>>, vector<1x2x128xf32>
    %84 = vector.shape_cast %83 : vector<1x2x128xf32> to vector<2x128xf32>
    %85 = vector.shape_cast %82 : vector<2x128xf32> to vector<1x2x128xf32>
    tpu.vector_store %arg8[%c0_58, %c0_59, %c0_60], %85 {strides = array<i32>} : memref<1x2x128xf32, #tpu.memory_space<vmem>>, vector<1x2x128xf32>,
    return
  }
  func.func @transform_0(%arg0: i32) -> (i32, i32, i32) {
    %c0_i32 = arith.constant 0 : i32
    %c0_i32_0 = arith.constant 0 : i32
    %c0_i32_1 = arith.constant 0 : i32
    return %arg0, %c0_i32, %c0_i32_0 : i32, i32, i32
  }
  func.func @transform_1(%arg0: i32) -> (i32, i32) {
    %c0_i32 = arith.constant 0 : i32
    %c0_i32_0 = arith.constant 0 : i32
    %c0_i32_1 = arith.constant 0 : i32
    return %c0_i32, %c0_i32_0 : i32, i32
  }
  func.func @transform_2(%arg0: i32) -> (i32, i32) {
    %c0_i32 = arith.constant 0 : i32
    %c0_i32_0 = arith.constant 0 : i32
    %c0_i32_1 = arith.constant 0 : i32
    return %c0_i32, %c0_i32_0 : i32, i32
  }
  func.func @transform_3(%arg0: i32) -> (i32, i32) {
    %c0_i32 = arith.constant 0 : i32
    %c0_i32_0 = arith.constant 0 : i32
    %c0_i32_1 = arith.constant 0 : i32
    return %c0_i32, %c0_i32_0 : i32, i32
  }
  func.func @transform_4(%arg0: i32) -> (i32, i32) {
    %c0_i32 = arith.constant 0 : i32
    %c0_i32_0 = arith.constant 0 : i32
    %c0_i32_1 = arith.constant 0 : i32
    return %c0_i32, %c0_i32_0 : i32, i32
  }
  func.func @transform_5(%arg0: i32) -> (i32, i32, i32) {
    %c0_i32 = arith.constant 0 : i32
    %c0_i32_0 = arith.constant 0 : i32
    %c0_i32_1 = arith.constant 0 : i32
    %c0_i32_2 = arith.constant 0 : i32
    return %c0_i32, %c0_i32_0, %c0_i32_1 : i32, i32, i32
  }
  func.func @transform_6(%arg0: i32) -> (i32, i32, i32) {
    %c0_i32 = arith.constant 0 : i32
    %c0_i32_0 = arith.constant 0 : i32
    %c0_i32_1 = arith.constant 0 : i32
    return %arg0, %c0_i32, %c0_i32_0 : i32, i32, i32
  }
  func.func @transform_7(%arg0: i32) -> (i32, i32, i32) {
    %c0_i32 = arith.constant 0 : i32
    %c0_i32_0 = arith.constant 0 : i32
    %c0_i32_1 = arith.constant 0 : i32
    return %arg0, %c0_i32, %c0_i32_0 : i32, i32, i32
  }
}

module attributes {stable_mosaic.version = 11 : i64} {
  func.func @_mm_fused_stats_kernel(%arg0: i32, %arg1: memref<1x288x128xbf16, #tpu.memory_space<vmem>>, %arg2: memref<1x128xf32, #tpu.memory_space<vmem>>, %arg3: memref<1x128xf32, #tpu.memory_space<vmem>>, %arg4: memref<288x1xf32, #tpu.memory_space<vmem>>, %arg5: memref<128x128xbf16, #tpu.memory_space<vmem>>, %arg6: memref<1x288x128xbf16, #tpu.memory_space<vmem>>, %arg7: memref<1x2x128xf32, #tpu.memory_space<vmem>>) attributes {dimension_semantics = [#tpu.dimension_semantics<parallel>], iteration_bounds = array<i64: 2>, scalar_prefetch = 0 : i64, scratch_operands = 0 : i64, tpu.core_type = #tpu.core_type<tc>, window_params = [{transform_indices = @transform_0, window_bounds = array<i64: 1, 288, 128>}, {pipeline_mode = #tpu.pipeline_mode<synchronous>, transform_indices = @transform_1, window_bounds = array<i64: 1, 128>}, {pipeline_mode = #tpu.pipeline_mode<synchronous>, transform_indices = @transform_2, window_bounds = array<i64: 1, 128>}, {pipeline_mode = #tpu.pipeline_mode<synchronous>, transform_indices = @transform_3, window_bounds = array<i64: 288, 1>}, {pipeline_mode = #tpu.pipeline_mode<synchronous>, transform_indices = @transform_4, window_bounds = array<i64: 128, 128>}, {transform_indices = @transform_5, window_bounds = array<i64: 1, 288, 128>}, {transform_indices = @transform_6, window_bounds = array<i64: 1, 2, 128>}]} {
    %c0 = arith.constant 0 : index
    %c0_0 = arith.constant 0 : index
    %c0_1 = arith.constant 0 : index
    %0 = vector.load %arg1[%c0, %c0_0, %c0_1] : memref<1x288x128xbf16, #tpu.memory_space<vmem>>, vector<1x288x128xbf16>
    %1 = vector.shape_cast %0 : vector<1x288x128xbf16> to vector<288x128xbf16>
    %2 = arith.extf %1 : vector<288x128xbf16> to vector<288x128xf32>
    %c0_2 = arith.constant 0 : index
    %c0_3 = arith.constant 0 : index
    %3 = vector.load %arg2[%c0_2, %c0_3] : memref<1x128xf32, #tpu.memory_space<vmem>>, vector<1x128xf32>
    %4 = vector.broadcast %3 : vector<1x128xf32> to vector<288x128xf32>
    %5 = arith.mulf %2, %4 : vector<288x128xf32>
    %c0_4 = arith.constant 0 : index
    %c0_5 = arith.constant 0 : index
    %6 = vector.load %arg3[%c0_4, %c0_5] : memref<1x128xf32, #tpu.memory_space<vmem>>, vector<1x128xf32>
    %7 = vector.broadcast %6 : vector<1x128xf32> to vector<288x128xf32>
    %8 = arith.addf %5, %7 : vector<288x128xf32>
    %cst = arith.constant 0.000000e+00 : f32
    %9 = vector.broadcast %cst : f32 to vector<288x128xf32>
    %10 = arith.maximumf %8, %9 : vector<288x128xf32>
    %c0_6 = arith.constant 0 : index
    %c0_7 = arith.constant 0 : index
    %11 = vector.load %arg4[%c0_6, %c0_7] : memref<288x1xf32, #tpu.memory_space<vmem>>, vector<288x1xf32>
    %12 = vector.broadcast %11 : vector<288x1xf32> to vector<288x128xf32>
    %13 = arith.mulf %10, %12 : vector<288x128xf32>
    %14 = arith.truncf %13 : vector<288x128xf32> to vector<288x128xbf16>
    %c0_8 = arith.constant 0 : index
    %c0_9 = arith.constant 0 : index
    %15 = vector.load %arg5[%c0_8, %c0_9] : memref<128x128xbf16, #tpu.memory_space<vmem>>, vector<128x128xbf16>
    %cst_10 = arith.constant dense<0.000000e+00> : vector<288x128xf32>
    %16 = tpu.matmul %14, %15, %cst_10 {dimension_numbers = #tpu.dot_dimension_numbers<[1], [0], [0], [1], [0, 0, 1, 1], [], []>} : vector<288x128xbf16>, vector<128x128xbf16>, vector<288x128xf32> -> vector<288x128xf32>
    %17 = arith.truncf %16 : vector<288x128xf32> to vector<288x128xbf16>
    %c0_11 = arith.constant 0 : index
    %c0_12 = arith.constant 0 : index
    %c0_13 = arith.constant 0 : index
    %18 = vector.load %arg6[%c0_11, %c0_12, %c0_13] : memref<1x288x128xbf16, #tpu.memory_space<vmem>>, vector<1x288x128xbf16>
    %19 = vector.shape_cast %18 : vector<1x288x128xbf16> to vector<288x128xbf16>
    %20 = vector.shape_cast %17 : vector<288x128xbf16> to vector<1x288x128xbf16>
    tpu.vector_store %arg6[%c0_11, %c0_12, %c0_13], %20 {strides = array<i32>} : memref<1x288x128xbf16, #tpu.memory_space<vmem>>, vector<1x288x128xbf16>,
    %cst_14 = arith.constant dense<0.000000e+00> : vector<128xf32>
    %21 = vector.multi_reduction <add>, %16, %cst_14 [0] : vector<288x128xf32> to vector<128xf32>
    %22 = vector.shape_cast %21 : vector<128xf32> to vector<1x128xf32>
    %23 = arith.mulf %16, %16 : vector<288x128xf32>
    %cst_15 = arith.constant dense<0.000000e+00> : vector<128xf32>
    %24 = vector.multi_reduction <add>, %23, %cst_15 [0] : vector<288x128xf32> to vector<128xf32>
    %25 = vector.shape_cast %24 : vector<128xf32> to vector<1x128xf32>
    %26 = tpu.concatenate %22, %25 in 0 : vector<1x128xf32>, vector<1x128xf32> -> vector<2x128xf32>
    %c0_16 = arith.constant 0 : index
    %c0_17 = arith.constant 0 : index
    %c0_18 = arith.constant 0 : index
    %27 = vector.load %arg7[%c0_16, %c0_17, %c0_18] : memref<1x2x128xf32, #tpu.memory_space<vmem>>, vector<1x2x128xf32>
    %28 = vector.shape_cast %27 : vector<1x2x128xf32> to vector<2x128xf32>
    %29 = vector.shape_cast %26 : vector<2x128xf32> to vector<1x2x128xf32>
    tpu.vector_store %arg7[%c0_16, %c0_17, %c0_18], %29 {strides = array<i32>} : memref<1x2x128xf32, #tpu.memory_space<vmem>>, vector<1x2x128xf32>,
    return
  }
  func.func @transform_0(%arg0: i32) -> (i32, i32, i32) {
    %c0_i32 = arith.constant 0 : i32
    %c0_i32_0 = arith.constant 0 : i32
    %c0_i32_1 = arith.constant 0 : i32
    return %arg0, %c0_i32, %c0_i32_0 : i32, i32, i32
  }
  func.func @transform_1(%arg0: i32) -> (i32, i32) {
    %c0_i32 = arith.constant 0 : i32
    %c0_i32_0 = arith.constant 0 : i32
    %c0_i32_1 = arith.constant 0 : i32
    return %c0_i32, %c0_i32_0 : i32, i32
  }
  func.func @transform_2(%arg0: i32) -> (i32, i32) {
    %c0_i32 = arith.constant 0 : i32
    %c0_i32_0 = arith.constant 0 : i32
    %c0_i32_1 = arith.constant 0 : i32
    return %c0_i32, %c0_i32_0 : i32, i32
  }
  func.func @transform_3(%arg0: i32) -> (i32, i32) {
    %c0_i32 = arith.constant 0 : i32
    %c0_i32_0 = arith.constant 0 : i32
    %c0_i32_1 = arith.constant 0 : i32
    return %c0_i32, %c0_i32_0 : i32, i32
  }
  func.func @transform_4(%arg0: i32) -> (i32, i32) {
    %c0_i32 = arith.constant 0 : i32
    %c0_i32_0 = arith.constant 0 : i32
    %c0_i32_1 = arith.constant 0 : i32
    return %c0_i32, %c0_i32_0 : i32, i32
  }
  func.func @transform_5(%arg0: i32) -> (i32, i32, i32) {
    %c0_i32 = arith.constant 0 : i32
    %c0_i32_0 = arith.constant 0 : i32
    %c0_i32_1 = arith.constant 0 : i32
    return %arg0, %c0_i32, %c0_i32_0 : i32, i32, i32
  }
  func.func @transform_6(%arg0: i32) -> (i32, i32, i32) {
    %c0_i32 = arith.constant 0 : i32
    %c0_i32_0 = arith.constant 0 : i32
    %c0_i32_1 = arith.constant 0 : i32
    return %arg0, %c0_i32, %c0_i32_0 : i32, i32, i32
  }
}

module attributes {stable_mosaic.version = 11 : i64} {
  func.func @_bn_id_relu_kernel(%arg0: i32, %arg1: memref<1x288x128xbf16, #tpu.memory_space<vmem>>, %arg2: memref<1x128xf32, #tpu.memory_space<vmem>>, %arg3: memref<1x128xf32, #tpu.memory_space<vmem>>, %arg4: memref<1x328x128xbf16, #tpu.memory_space<vmem>>, %arg5: memref<1x288x128xf32, #tpu.memory_space<vmem>>) attributes {dimension_semantics = [#tpu.dimension_semantics<parallel>], iteration_bounds = array<i64: 2>, scalar_prefetch = 0 : i64, scratch_operands = 0 : i64, tpu.core_type = #tpu.core_type<tc>, window_params = [{transform_indices = @transform_0, window_bounds = array<i64: 1, 288, 128>}, {pipeline_mode = #tpu.pipeline_mode<synchronous>, transform_indices = @transform_1, window_bounds = array<i64: 1, 128>}, {pipeline_mode = #tpu.pipeline_mode<synchronous>, transform_indices = @transform_2, window_bounds = array<i64: 1, 128>}, {transform_indices = @transform_3, window_bounds = array<i64: 1, 328, 128>}, {transform_indices = @transform_4, window_bounds = array<i64: 1, 288, 128>}]} {
    %c0 = arith.constant 0 : index
    %c0_0 = arith.constant 0 : index
    %c0_1 = arith.constant 0 : index
    %0 = vector.load %arg4[%c0, %c0_0, %c0_1] : memref<1x328x128xbf16, #tpu.memory_space<vmem>>, vector<1x328x128xbf16>
    %1 = vector.shape_cast %0 : vector<1x328x128xbf16> to vector<328x128xbf16>
    %2 = arith.extf %1 : vector<328x128xbf16> to vector<328x128xf32>
    %3 = vector.extract_strided_slice %2 {offsets = [19, 0], sizes = [288, 128], strides = [1, 1]} : vector<328x128xf32> to vector<288x128xf32>
    %c0_2 = arith.constant 0 : index
    %c0_3 = arith.constant 0 : index
    %c0_4 = arith.constant 0 : index
    %4 = vector.load %arg1[%c0_2, %c0_3, %c0_4] : memref<1x288x128xbf16, #tpu.memory_space<vmem>>, vector<1x288x128xbf16>
    %5 = vector.shape_cast %4 : vector<1x288x128xbf16> to vector<288x128xbf16>
    %6 = arith.extf %5 : vector<288x128xbf16> to vector<288x128xf32>
    %c0_5 = arith.constant 0 : index
    %c0_6 = arith.constant 0 : index
    %7 = vector.load %arg2[%c0_5, %c0_6] : memref<1x128xf32, #tpu.memory_space<vmem>>, vector<1x128xf32>
    %8 = vector.broadcast %7 : vector<1x128xf32> to vector<288x128xf32>
    %9 = arith.mulf %6, %8 : vector<288x128xf32>
    %c0_7 = arith.constant 0 : index
    %c0_8 = arith.constant 0 : index
    %10 = vector.load %arg3[%c0_7, %c0_8] : memref<1x128xf32, #tpu.memory_space<vmem>>, vector<1x128xf32>
    %11 = vector.broadcast %10 : vector<1x128xf32> to vector<288x128xf32>
    %12 = arith.addf %9, %11 : vector<288x128xf32>
    %13 = arith.addf %12, %3 : vector<288x128xf32>
    %cst = arith.constant 0.000000e+00 : f32
    %14 = vector.broadcast %cst : f32 to vector<288x128xf32>
    %15 = arith.maximumf %13, %14 : vector<288x128xf32>
    %c0_9 = arith.constant 0 : index
    %c0_10 = arith.constant 0 : index
    %c0_11 = arith.constant 0 : index
    %16 = vector.load %arg5[%c0_9, %c0_10, %c0_11] : memref<1x288x128xf32, #tpu.memory_space<vmem>>, vector<1x288x128xf32>
    %17 = vector.shape_cast %16 : vector<1x288x128xf32> to vector<288x128xf32>
    %18 = vector.shape_cast %15 : vector<288x128xf32> to vector<1x288x128xf32>
    tpu.vector_store %arg5[%c0_9, %c0_10, %c0_11], %18 {strides = array<i32>} : memref<1x288x128xf32, #tpu.memory_space<vmem>>, vector<1x288x128xf32>,
    return
  }
  func.func @transform_0(%arg0: i32) -> (i32, i32, i32) {
    %c0_i32 = arith.constant 0 : i32
    %c0_i32_0 = arith.constant 0 : i32
    %c0_i32_1 = arith.constant 0 : i32
    return %arg0, %c0_i32, %c0_i32_0 : i32, i32, i32
  }
  func.func @transform_1(%arg0: i32) -> (i32, i32) {
    %c0_i32 = arith.constant 0 : i32
    %c0_i32_0 = arith.constant 0 : i32
    %c0_i32_1 = arith.constant 0 : i32
    return %c0_i32, %c0_i32_0 : i32, i32
  }
  func.func @transform_2(%arg0: i32) -> (i32, i32) {
    %c0_i32 = arith.constant 0 : i32
    %c0_i32_0 = arith.constant 0 : i32
    %c0_i32_1 = arith.constant 0 : i32
    return %c0_i32, %c0_i32_0 : i32, i32
  }
  func.func @transform_3(%arg0: i32) -> (i32, i32, i32) {
    %c0_i32 = arith.constant 0 : i32
    %c0_i32_0 = arith.constant 0 : i32
    %c0_i32_1 = arith.constant 0 : i32
    return %arg0, %c0_i32, %c0_i32_0 : i32, i32, i32
  }
  func.func @transform_4(%arg0: i32) -> (i32, i32, i32) {
    %c0_i32 = arith.constant 0 : i32
    %c0_i32_0 = arith.constant 0 : i32
    %c0_i32_1 = arith.constant 0 : i32
    return %arg0, %c0_i32, %c0_i32_0 : i32, i32, i32
  }
}

</mosaic_0001>

<llo_original>
// kernel: block_forward.4
$region0: #{block_forward.4}
  #allocation0 [shape = 'u32[]', space=smem, size = 0x4, offset = 0x4, fixed_abs, tag = 'smem constant byte address 0x4 - core index']
  #allocation1 [shape = 'u32[72,128]{1,0:T(1,128)}', space=vmem, size = 0x9000, scoped, tag = 'internal scratch']
  %s0 = inlined_call_operand.vmem [shape: bf16[2,328,128], index: 0, kind: input, shape index: {}]
  %s1 = inlined_call_operand.vmem [shape: bf16[128,128], index: 1, kind: input, shape index: {}]
  %s2 = inlined_call_operand.vmem [shape: bf16[2,328,128], index: 2, kind: output, shape index: {0}]
  %s3 = inlined_call_operand.vmem [shape: f32[2,2,128], index: 3, kind: output, shape index: {1}]
  %4 = xla_tuple %s2, %s3
  %s5 = sld [smem:[#allocation0]]
  $region49: #{block_forward.4} parent=0
    _
  %s7 = ssub.s32 1, %s5
  %s8 = scalar_select 0, %s7, %s5
  loop: start=0, step=1, limit=4
  $region2: #{block_forward.4} parent=0 // loop_pre_header
    _
  $region3: #{block_forward.4} parent=0 // loop_header
    %s10 = sphi 0, %s14
    %p11 = scmp.ge.s32.totalorder %s10, 4
    %s20 = sphi 0, %s22
    %s23 = sphi 0, %s20
    %s24 = sphi 0, %s23
    %s40 = sphi 0, %s24
    %s44 = sphi 0, %s44
    %s46 = sphi 0, %s44
    %s47 = sphi 0, %s46
    %s61 = sphi 0, %s47
    %s67 = sphi 0, %s69
    %s70 = sphi 0, %s67
    %s71 = sphi 0, %s70
    %s87 = sphi 0, %s71
    %s93 = sphi 0, %s95
    %s96 = sphi 0, %s93
    %s97 = sphi 0, %s96
    %s113 = sphi 0, %s97
  $region4: #{block_forward.4} parent=0 // loop_header_branch
    %13 = sbr.rel (%p11) target = $region8
  $region5: #{block_forward.4} parent=0 // loop_body
    %s15 = ssub.s32 %s10, 1
    %s16 = ssub.s32 %s10, 2
    %s17 = sadd.s32 %s10, 1
    %s18 = ssub.s32 %s10, %s17
    %p19 = scmp.eq.s32.totalorder %s18, 0
    %s21 = sadd.s32 %s20, 1
    %s22 = scalar_select %p19, %s20, %s21
    %p25 = pneg %p19
    %p26 = scmp.eq.s32.totalorder %s10, 1
    %p27 = por %p25, %p26
    %p28 = scmp.ne.s32.totalorder %s20, %s23
    %p29 = scmp.eq.s32.totalorder %s10, 0
    %p30 = por %p28, %p29
    %p31 = scmp.ne.s32.totalorder %s20, %s23
    %p32 = scmp.eq.s32.totalorder %s15, 1
    %p33 = por %p31, %p32
    %p34 = scmp.ne.s32.totalorder %s23, %s24
    %p35 = scmp.eq.s32.totalorder %s15, 0
    %p36 = por %p34, %p35
    %p37 = scmp.ne.s32.totalorder %s23, %s24
    %p38 = scmp.eq.s32.totalorder %s16, 1
    %p39 = por %p37, %p38
    %p41 = scmp.ne.s32.totalorder %s24, %s40
    %p42 = scmp.eq.s32.totalorder %s16, 0
    %p43 = por %p41, %p42
    %s45 = sadd.s32 %s44, 1
    %p48 = scmp.eq.s32.totalorder %s10, 1
    %p49 = scmp.ne.s32.totalorder %s44, %s46
    %p50 = scmp.eq.s32.totalorder %s10, 0
    %p51 = por %p49, %p50
    %p52 = scmp.ne.s32.totalorder %s44, %s46
    %p53 = scmp.eq.s32.totalorder %s15, 1
    %p54 = por %p52, %p53
    %p55 = scmp.ne.s32.totalorder %s46, %s47
    %p56 = scmp.eq.s32.totalorder %s15, 0
    %p57 = por %p55, %p56
    %p58 = scmp.ne.s32.totalorder %s46, %s47
    %p59 = scmp.eq.s32.totalorder %s16, 1
    %p60 = por %p58, %p59
    %p62 = scmp.ne.s32.totalorder %s47, %s61
    %p63 = scmp.eq.s32.totalorder %s16, 0
    %p64 = por %p62, %p63
    %s65 = ssub.s32 %s10, %s17
    %p66 = scmp.eq.s32.totalorder %s65, 0
    %s68 = sadd.s32 %s67, 1
    %s69 = scalar_select %p66, %s67, %s68
    %p72 = pneg %p66
    %p73 = scmp.eq.s32.totalorder %s10, 1
    %p74 = por %p72, %p73
    %p75 = scmp.ne.s32.totalorder %s67, %s70
    %p76 = scmp.eq.s32.totalorder %s10, 0
    %p77 = por %p75, %p76
    %p78 = scmp.ne.s32.totalorder %s67, %s70
    %p79 = scmp.eq.s32.totalorder %s15, 1
    %p80 = por %p78, %p79
    %p81 = scmp.ne.s32.totalorder %s70, %s71
    %p82 = scmp.eq.s32.totalorder %s15, 0
    %p83 = por %p81, %p82
    %p84 = scmp.ne.s32.totalorder %s70, %s71
    %p85 = scmp.eq.s32.totalorder %s16, 1
    %p86 = por %p84, %p85
    %p88 = scmp.ne.s32.totalorder %s71, %s87
    %p89 = scmp.eq.s32.totalorder %s16, 0
    %p90 = por %p88, %p89
    %s91 = ssub.s32 %s10, %s17
    %p92 = scmp.eq.s32.totalorder %s91, 0
    %s94 = sadd.s32 %s93, 1
    %s95 = scalar_select %p92, %s93, %s94
    %p98 = pneg %p92
    %p99 = scmp.eq.s32.totalorder %s10, 1
    %p100 = por %p98, %p99
    %p101 = scmp.ne.s32.totalorder %s93, %s96
    %p102 = scmp.eq.s32.totalorder %s10, 0
    %p103 = por %p101, %p102
    %p104 = scmp.ne.s32.totalorder %s93, %s96
    %p105 = scmp.eq.s32.totalorder %s15, 1
    %p106 = por %p104, %p105
    %p107 = scmp.ne.s32.totalorder %s96, %s97
    %p108 = scmp.eq.s32.totalorder %s15, 0
    %p109 = por %p107, %p108
    %p110 = scmp.ne.s32.totalorder %s96, %s97
    %p111 = scmp.eq.s32.totalorder %s16, 1
    %p112 = por %p110, %p111
    %p114 = scmp.ne.s32.totalorder %s97, %s113
    %p115 = scmp.eq.s32.totalorder %s16, 0
    %p116 = por %p114, %p115
    %p117 = scmp.le.s32.totalorder 1, %s10
    %p118 = scmp.lt.s32.totalorder %s10, 3
    %p119 = pnand %p117, %p118
    %p120 = pneg %p119
    // Predicated region
    $region9: #{block_forward.4} parent=5 // pred_check
      _
    $region10: #{block_forward.4} parent=5 // pred_check_branch
      %122 = sbr.rel (%p119) target = $region12
    $region11: #{block_forward.4} parent=5 // pred_region
      %s123 = ssub.s32 %s10, 1
      // Predicated region
      $region13: #{block_forward.4} parent=11 // pred_check
        %p124 = pneg %p57
      $region14: #{block_forward.4} parent=11 // pred_check_branch
        %126 = sbr.rel (%p124) target = $region16
      $region15: #{block_forward.4} parent=11 // pred_region
        _
      $region16: #{block_forward.4} parent=11 // pred_fallthru
        _
    $region12: #{block_forward.4} parent=5 // pred_fallthru
      _
    %p127 = scmp.lt.s32.totalorder %s10, 2
    // Predicated region
    $region17: #{block_forward.4} parent=5 // pred_check
      %p128 = pneg %p127
    $region18: #{block_forward.4} parent=5 // pred_check_branch
      %130 = sbr.rel (%p128) target = $region20
    $region19: #{block_forward.4} parent=5 // pred_region
      // Predicated region
      $region21: #{block_forward.4} parent=19 // pred_check
        %p131 = pneg %p30
      $region22: #{block_forward.4} parent=19 // pred_check_branch
        %133 = sbr.rel (%p131) target = $region24
      $region23: #{block_forward.4} parent=19 // pred_region
        %p134 = scmp.lt.s32.totalorder %s10, 1
        %s135 = scalar_select %p134, %s10, 1
        %s136 = smul.addr %s135, 41
        %s137 = smul.addr %s136, 4
        %s138 = scalar_lea.vmem %s0, %s137
      $region24: #{block_forward.4} parent=19 // pred_fallthru
        _
    $region20: #{block_forward.4} parent=5 // pred_fallthru
      _
    %p139 = scmp.le.s32.totalorder 1, %s10
    %p140 = scmp.lt.s32.totalorder %s10, 3
    %p141 = pnand %p139, %p140
    %p142 = pneg %p141
    // Predicated region
    $region25: #{block_forward.4} parent=5 // pred_check
      _
    $region26: #{block_forward.4} parent=5 // pred_check_branch
      %144 = sbr.rel (%p141) target = $region28
    $region27: #{block_forward.4} parent=5 // pred_region
      %s145 = ssub.s32 %s10, 1
      %p146 = scmp.lt.s32.totalorder %s15, 1
      %s147 = scalar_select %p146, %s15, 1
      %s148 = smul.addr %s147, 41
      %s149 = smul.addr %s148, 4
      %s150 = scalar_lea.vmem %s0, %s149
      %p151 = pneg %p36
      %p152 = pneg %p33
      %p153 = pneg %p57
      %p154 = pneg %p54
      %p155 = pneg %p83
      %p156 = pneg %p80
      %p157 = scmp.lt.s32.totalorder %s15, 1
      %s158 = scalar_select %p157, %s15, 1
      %s159 = smul.addr %s158, 41
      %s160 = smul.addr %s159, 4
      %s161 = scalar_lea.vmem %s2, %s160
      %p162 = pneg %p109
      %p163 = pneg %p106
      %p164 = scmp.lt.s32.totalorder %s15, 1
      %s165 = scalar_select %p164, %s15, 1
      %s166 = smul.addr %s165, 2
      %s167 = scalar_lea.vmem %s3, %s166
      %p168 = scmp.lt.s32.totalorder %s15, 1
      %s169 = scalar_select %p168, %s15, 1
      %s170 = smul.addr %s169, 41
      %s171 = smul.addr %s170, 4
      %s172 = scalar_lea.vmem %s0, %s171
      %p173 = scmp.lt.s32.totalorder %s15, 1
      %s174 = scalar_select %p173, %s15, 1
      %s175 = smul.addr %s174, 41
      %s176 = smul.addr %s175, 4
      %s177 = scalar_lea.vmem %s2, %s176
      %p178 = scmp.lt.s32.totalorder %s15, 1
      %s179 = scalar_select %p178, %s15, 1
      %s180 = smul.addr %s179, 2
      %s181 = scalar_lea.vmem %s3, %s180
      %v182 = vld [vmem:[%s172] sm:$0xf]
      %v183 = vld [vmem:[%s172 + $0x4] sm:$0xf]
      %v184 = vld [vmem:[%s172 + $0x8] sm:$0xf]
      %v185 = vld [vmem:[%s172 + $0xc] sm:$0xf]
      %v186 = vld [vmem:[%s172 + $0x10] sm:$0xf]
      %v187 = vld [vmem:[%s172 + $0x14] sm:$0xf]
      %v188 = vld [vmem:[%s172 + $0x18] sm:$0xf]
      %v189 = vld [vmem:[%s172 + $0x1c] sm:$0xf]
      %v190 = vld [vmem:[%s172 + $0x20] sm:$0xf]
      %v191 = vld [vmem:[%s172 + $0x24] sm:$0xf]
      %v192 = vld [vmem:[%s172 + $0x28] sm:$0xf]
      %v193 = vld [vmem:[%s172 + $0x2c] sm:$0xf]
      %v194 = vld [vmem:[%s172 + $0x30] sm:$0xf]
      %v195 = vld [vmem:[%s172 + $0x34] sm:$0xf]
      %v196 = vld [vmem:[%s172 + $0x38] sm:$0xf]
      %v197 = vld [vmem:[%s172 + $0x3c] sm:$0xf]
      %v198 = vld [vmem:[%s172 + $0x40] sm:$0xf]
      %v199 = vld [vmem:[%s172 + $0x44] sm:$0xf]
      %v200 = vld [vmem:[%s172 + $0x48] sm:$0xf]
      %v201 = vld [vmem:[%s172 + $0x4c] sm:$0xf]
      %v202 = vld [vmem:[%s172 + $0x50] sm:$0xf]
      %v203 = vld [vmem:[%s172 + $0x54] sm:$0xf]
      %v204 = vld [vmem:[%s172 + $0x58] sm:$0xf]
      %v205 = vld [vmem:[%s172 + $0x5c] sm:$0xf]
      %v206 = vld [vmem:[%s172 + $0x60] sm:$0xf]
      %v207 = vld [vmem:[%s172 + $0x64] sm:$0xf]
      %v208 = vld [vmem:[%s172 + $0x68] sm:$0xf]
      %v209 = vld [vmem:[%s172 + $0x6c] sm:$0xf]
      %v210 = vld [vmem:[%s172 + $0x70] sm:$0xf]
      %v211 = vld [vmem:[%s172 + $0x74] sm:$0xf]
      %v212 = vld [vmem:[%s172 + $0x78] sm:$0xf]
      %v213 = vld [vmem:[%s172 + $0x7c] sm:$0xf]
      %v214 = vld [vmem:[%s172 + $0x80] sm:$0xf]
      %v215 = vld [vmem:[%s172 + $0x84] sm:$0xf]
      %v216 = vld [vmem:[%s172 + $0x88] sm:$0xf]
      %v217 = vld [vmem:[%s172 + $0x8c] sm:$0xf]
      %v218 = vld [vmem:[%s172 + $0x90] sm:$0xf]
      %v219 = vld [vmem:[%s172 + $0x94] sm:$0xf]
      %v220 = vld [vmem:[%s172 + $0x98] sm:$0xf]
      %v221 = vld [vmem:[%s172 + $0x9c] sm:$0xf]
      %v222 = vld [vmem:[%s172 + $0xa0] sm:$0xf]
      %v223 = vld [vmem:[%s1] sm:$0xf]
      %v224 = vld [vmem:[%s1 + $0x4] sm:$0xf]
      %v225 = vld [vmem:[%s1 + $0x8] sm:$0xf]
      %v226 = vld [vmem:[%s1 + $0xc] sm:$0xf]
      %v227 = vld [vmem:[%s1 + $0x10] sm:$0xf]
      %v228 = vld [vmem:[%s1 + $0x14] sm:$0xf]
      %v229 = vld [vmem:[%s1 + $0x18] sm:$0xf]
      %v230 = vld [vmem:[%s1 + $0x1c] sm:$0xf]
      %v231 = vld [vmem:[%s1 + $0x20] sm:$0xf]
      %v232 = vld [vmem:[%s1 + $0x24] sm:$0xf]
      %v233 = vld [vmem:[%s1 + $0x28] sm:$0xf]
      %v234 = vld [vmem:[%s1 + $0x2c] sm:$0xf]
      %v235 = vld [vmem:[%s1 + $0x30] sm:$0xf]
      %v236 = vld [vmem:[%s1 + $0x34] sm:$0xf]
      %v237 = vld [vmem:[%s1 + $0x38] sm:$0xf]
      %v238 = vld [vmem:[%s1 + $0x3c] sm:$0xf]
      %v280 = vunpack.c.l.b16 %v182
      %v281 = vunpack.c.l.b16 %v183
      %v282 = vunpack.c.l.b16 %v184
      %v283 = vunpack.c.l.b16 %v185
      %v284 = vunpack.c.l.b16 %v186
      %v285 = vunpack.c.l.b16 %v187
      %v286 = vunpack.c.l.b16 %v188
      %v287 = vunpack.c.l.b16 %v189
      %v288 = vunpack.c.l.b16 %v190
      %v289 = vunpack.c.l.b16 %v191
      %v290 = vunpack.c.l.b16 %v192
      %v291 = vunpack.c.l.b16 %v193
      %v292 = vunpack.c.l.b16 %v194
      %v293 = vunpack.c.l.b16 %v195
      %v294 = vunpack.c.l.b16 %v196
      %v295 = vunpack.c.l.b16 %v197
      %v296 = vunpack.c.l.b16 %v198
      %v297 = vunpack.c.l.b16 %v199
      %v298 = vunpack.c.l.b16 %v200
      %v299 = vunpack.c.l.b16 %v201
      %v300 = vunpack.c.l.b16 %v202
      %v301 = vunpack.c.l.b16 %v203
      %v302 = vunpack.c.l.b16 %v204
      %v303 = vunpack.c.l.b16 %v205
      %v304 = vunpack.c.l.b16 %v206
      %v305 = vunpack.c.l.b16 %v207
      %v306 = vunpack.c.l.b16 %v208
      %v307 = vunpack.c.l.b16 %v209
      %v308 = vunpack.c.l.b16 %v210
      %v309 = vunpack.c.l.b16 %v211
      %v310 = vunpack.c.l.b16 %v212
      %v311 = vunpack.c.l.b16 %v213
      %v312 = vunpack.c.l.b16 %v214
      %v313 = vunpack.c.l.b16 %v215
      %v314 = vunpack.c.l.b16 %v216
      %v315 = vunpack.c.l.b16 %v217
      %v316 = vunpack.c.l.b16 %v218
      %v317 = vunpack.c.l.b16 %v219
      %v318 = vunpack.c.l.b16 %v220
      %v319 = vunpack.c.l.b16 %v221
      %v320 = vunpack.c.l.b16 %v222
      %v321 = vpack.c.b16 %v281, %v280
      %v322 = vpack.c.b16 %v283, %v282
      %v323 = vpack.c.b16 %v285, %v284
      %v324 = vpack.c.b16 %v287, %v286
      %v325 = vpack.c.b16 %v289, %v288
      %v326 = vpack.c.b16 %v291, %v290
      %v327 = vpack.c.b16 %v293, %v292
      %v328 = vpack.c.b16 %v295, %v294
      %v329 = vpack.c.b16 %v297, %v296
      %v330 = vpack.c.b16 %v299, %v298
      %v331 = vpack.c.b16 %v301, %v300
      %v332 = vpack.c.b16 %v303, %v302
      %v333 = vpack.c.b16 %v305, %v304
      %v334 = vpack.c.b16 %v307, %v306
      %v335 = vpack.c.b16 %v309, %v308
      %v336 = vpack.c.b16 %v311, %v310
      %v337 = vpack.c.b16 %v313, %v312
      %v338 = vpack.c.b16 %v315, %v314
      %v339 = vpack.c.b16 %v317, %v316
      %v340 = vpack.c.b16 %v319, %v318
      %v341 = vpack.c.b16 %v320, %v320
      %v379 = vunpack.c.l.b16 %v223
      %v380 = vunpack.c.l.b16 %v224
      %v381 = vunpack.c.l.b16 %v225
      %v382 = vunpack.c.l.b16 %v226
      %v383 = vunpack.c.l.b16 %v227
      %v384 = vunpack.c.l.b16 %v228
      %v385 = vunpack.c.l.b16 %v229
      %v386 = vunpack.c.l.b16 %v230
      %v387 = vunpack.c.l.b16 %v231
      %v388 = vunpack.c.l.b16 %v232
      %v389 = vunpack.c.l.b16 %v233
      %v390 = vunpack.c.l.b16 %v234
      %v391 = vunpack.c.l.b16 %v235
      %v392 = vunpack.c.l.b16 %v236
      %v393 = vunpack.c.l.b16 %v237
      %v394 = vunpack.c.l.b16 %v238
      %v395 = vpack.c.b16 %v380, %v379
      %v396 = vpack.c.b16 %v382, %v381
      %v397 = vpack.c.b16 %v384, %v383
      %v398 = vpack.c.b16 %v386, %v385
      %v399 = vpack.c.b16 %v388, %v387
      %v400 = vpack.c.b16 %v390, %v389
      %v401 = vpack.c.b16 %v392, %v391
      %v402 = vpack.c.b16 %v394, %v393
      %411 = vmatpush.bf16.msra.mxu0 %v402
      %412 = vmatpush.bf16.msra.mxu0 %v401
      %413 = vmatpush.bf16.msra.mxu0 %v400
      %414 = vmatpush.bf16.msra.mxu0 %v399
      %415 = vmatpush.bf16.msra.mxu0 %v398
      %416 = vmatpush.bf16.msra.mxu0 %v397
      %417 = vmatpush.bf16.msra.mxu0 %v396
      %418 = vmatpush.bf16.msra.mxu0 %v395
      %419 = vmatmul.bf16.gmra.mxu0 %v321
      %v420 = vpop.f32.mrf.mxu0
      %v421 = vadd.f32 0.0, %v420
      %v422 = vpop.f32.mrf.mxu0
      %v423 = vadd.f32 0.0, %v422
      %424 = vmatmul.bf16.gmra.mxu0 %v322
      %v425 = vpop.f32.mrf.mxu0
      %v426 = vadd.f32 0.0, %v425
      %v427 = vpop.f32.mrf.mxu0
      %v428 = vadd.f32 0.0, %v427
      %429 = vmatmul.bf16.gmra.mxu0 %v323
      %v430 = vpop.f32.mrf.mxu0
      %v431 = vadd.f32 0.0, %v430
      %v432 = vpop.f32.mrf.mxu0
      %v433 = vadd.f32 0.0, %v432
      %434 = vmatmul.bf16.gmra.mxu0 %v324
      %v435 = vpop.f32.mrf.mxu0
      %v436 = vadd.f32 0.0, %v435
      %v437 = vpop.f32.mrf.mxu0
      %v438 = vadd.f32 0.0, %v437
      %439 = vmatmul.bf16.gmra.mxu0 %v325
      %v440 = vpop.f32.mrf.mxu0
      %v441 = vadd.f32 0.0, %v440
      %v442 = vpop.f32.mrf.mxu0
      %v443 = vadd.f32 0.0, %v442
      %444 = vmatmul.bf16.gmra.mxu0 %v326
      %v445 = vpop.f32.mrf.mxu0
      %v446 = vadd.f32 0.0, %v445
      %v447 = vpop.f32.mrf.mxu0
      %v448 = vadd.f32 0.0, %v447
      %449 = vmatmul.bf16.gmra.mxu0 %v327
      %v450 = vpop.f32.mrf.mxu0
      %v451 = vadd.f32 0.0, %v450
      %v452 = vpop.f32.mrf.mxu0
      %v453 = vadd.f32 0.0, %v452
      %454 = vmatmul.bf16.gmra.mxu0 %v328
      %v455 = vpop.f32.mrf.mxu0
      %v456 = vadd.f32 0.0, %v455
      %v457 = vpop.f32.mrf.mxu0
      %v458 = vadd.f32 0.0, %v457
      %459 = vmatmul.bf16.gmra.mxu0 %v329
      %v460 = vpop.f32.mrf.mxu0
      %v461 = vadd.f32 0.0, %v460
      %v462 = vpop.f32.mrf.mxu0
      %v463 = vadd.f32 0.0, %v462
      %464 = vmatmul.bf16.gmra.mxu0 %v330
      %v465 = vpop.f32.mrf.mxu0
      %v466 = vadd.f32 0.0, %v465
      %v467 = vpop.f32.mrf.mxu0
      %v468 = vadd.f32 0.0, %v467
      %469 = vmatmul.bf16.gmra.mxu0 %v331
      %v470 = vpop.f32.mrf.mxu0
      %v471 = vadd.f32 0.0, %v470
      %v472 = vpop.f32.mrf.mxu0
      %v473 = vadd.f32 0.0, %v472
      %474 = vmatmul.bf16.gmra.mxu0 %v332
      %v475 = vpop.f32.mrf.mxu0
      %v476 = vadd.f32 0.0, %v475
      %v477 = vpop.f32.mrf.mxu0
      %v478 = vadd.f32 0.0, %v477
      %479 = vmatmul.bf16.gmra.mxu0 %v333
      %v480 = vpop.f32.mrf.mxu0
      %v481 = vadd.f32 0.0, %v480
      %v482 = vpop.f32.mrf.mxu0
      %v483 = vadd.f32 0.0, %v482
      %484 = vmatmul.bf16.gmra.mxu0 %v334
      %v485 = vpop.f32.mrf.mxu0
      %v486 = vadd.f32 0.0, %v485
      %v487 = vpop.f32.mrf.mxu0
      %v488 = vadd.f32 0.0, %v487
      %489 = vmatmul.bf16.gmra.mxu0 %v335
      %v490 = vpop.f32.mrf.mxu0
      %v491 = vadd.f32 0.0, %v490
      %v492 = vpop.f32.mrf.mxu0
      %v493 = vadd.f32 0.0, %v492
      %494 = vmatmul.bf16.gmra.mxu0 %v336
      %v495 = vpop.f32.mrf.mxu0
      %v496 = vadd.f32 0.0, %v495
      %v497 = vpop.f32.mrf.mxu0
      %v498 = vadd.f32 0.0, %v497
      %499 = vmatmul.bf16.gmra.mxu0 %v337
      %v500 = vpop.f32.mrf.mxu0
      %v501 = vadd.f32 0.0, %v500
      %v502 = vpop.f32.mrf.mxu0
      %v503 = vadd.f32 0.0, %v502
      %504 = vmatmul.bf16.gmra.mxu0 %v338
      %v505 = vpop.f32.mrf.mxu0
      %v506 = vadd.f32 0.0, %v505
      %v507 = vpop.f32.mrf.mxu0
      %v508 = vadd.f32 0.0, %v507
      %509 = vmatmul.bf16.gmra.mxu0 %v339
      %v510 = vpop.f32.mrf.mxu0
      %v511 = vadd.f32 0.0, %v510
      %v512 = vpop.f32.mrf.mxu0
      %v513 = vadd.f32 0.0, %v512
      %514 = vmatmul.bf16.gmra.mxu0 %v340
      %v515 = vpop.f32.mrf.mxu0
      %v516 = vadd.f32 0.0, %v515
      %v517 = vpop.f32.mrf.mxu0
      %v518 = vadd.f32 0.0, %v517
      %519 = vmatmul.bf16.gmra.mxu0 %v341
      %v520 = vpop.f32.mrf.mxu0
      %v521 = vadd.f32 0.0, %v520
      %v522 = vpop.f32.mrf.mxu0
      %523 = vdwg.mxu0
      %v524 = vpack.c.bf16 %v421, %v421
      %v525 = vpack.c.bf16 %v423, %v423
      %v526 = vpack.c.bf16 %v426, %v426
      %v527 = vpack.c.bf16 %v428, %v428
      %v528 = vpack.c.bf16 %v431, %v431
      %v529 = vpack.c.bf16 %v433, %v433
      %v530 = vpack.c.bf16 %v436, %v436
      %v531 = vpack.c.bf16 %v438, %v438
      %v532 = vpack.c.bf16 %v441, %v441
      %v533 = vpack.c.bf16 %v443, %v443
      %v534 = vpack.c.bf16 %v446, %v446
      %v535 = vpack.c.bf16 %v448, %v448
      %v536 = vpack.c.bf16 %v451, %v451
      %v537 = vpack.c.bf16 %v453, %v453
      %v538 = vpack.c.bf16 %v456, %v456
      %v539 = vpack.c.bf16 %v458, %v458
      %v540 = vpack.c.bf16 %v461, %v461
      %v541 = vpack.c.bf16 %v463, %v463
      %v542 = vpack.c.bf16 %v466, %v466
      %v543 = vpack.c.bf16 %v468, %v468
      %v544 = vpack.c.bf16 %v471, %v471
      %v545 = vpack.c.bf16 %v473, %v473
      %v546 = vpack.c.bf16 %v476, %v476
      %v547 = vpack.c.bf16 %v478, %v478
      %v548 = vpack.c.bf16 %v481, %v481
      %v549 = vpack.c.bf16 %v483, %v483
      %v550 = vpack.c.bf16 %v486, %v486
      %v551 = vpack.c.bf16 %v488, %v488
      %v552 = vpack.c.bf16 %v491, %v491
      %v553 = vpack.c.bf16 %v493, %v493
      %v554 = vpack.c.bf16 %v496, %v496
      %v555 = vpack.c.bf16 %v498, %v498
      %v556 = vpack.c.bf16 %v501, %v501
      %v557 = vpack.c.bf16 %v503, %v503
      %v558 = vpack.c.bf16 %v506, %v506
      %v559 = vpack.c.bf16 %v508, %v508
      %v560 = vpack.c.bf16 %v511, %v511
      %v561 = vpack.c.bf16 %v513, %v513
      %v562 = vpack.c.bf16 %v516, %v516
      %v563 = vpack.c.bf16 %v518, %v518
      %v564 = vpack.c.bf16 %v521, %v521
      %565 = vst [vmem:[%s177] sm:$0xf] %v524
      %566 = vst [vmem:[%s177 + $0x4] sm:$0xf] %v525
      %567 = vst [vmem:[%s177 + $0x8] sm:$0xf] %v526
      %568 = vst [vmem:[%s177 + $0xc] sm:$0xf] %v527
      %569 = vst [vmem:[%s177 + $0x10] sm:$0xf] %v528
      %570 = vst [vmem:[%s177 + $0x14] sm:$0xf] %v529
      %571 = vst [vmem:[%s177 + $0x18] sm:$0xf] %v530
      %572 = vst [vmem:[%s177 + $0x1c] sm:$0xf] %v531
      %573 = vst [vmem:[%s177 + $0x20] sm:$0xf] %v532
      %574 = vst [vmem:[%s177 + $0x24] sm:$0xf] %v533
      %575 = vst [vmem:[%s177 + $0x28] sm:$0xf] %v534
      %576 = vst [vmem:[%s177 + $0x2c] sm:$0xf] %v535
      %577 = vst [vmem:[%s177 + $0x30] sm:$0xf] %v536
      %578 = vst [vmem:[%s177 + $0x34] sm:$0xf] %v537
      %579 = vst [vmem:[%s177 + $0x38] sm:$0xf] %v538
      %580 = vst [vmem:[%s177 + $0x3c] sm:$0xf] %v539
      %581 = vst [vmem:[%s177 + $0x40] sm:$0xf] %v540
      %582 = vst [vmem:[%s177 + $0x44] sm:$0xf] %v541
      %583 = vst [vmem:[%s177 + $0x48] sm:$0xf] %v542
      %584 = vst [vmem:[%s177 + $0x4c] sm:$0xf] %v543
      %585 = vst [vmem:[%s177 + $0x50] sm:$0xf] %v544
      %586 = vst [vmem:[%s177 + $0x54] sm:$0xf] %v545
      %587 = vst [vmem:[%s177 + $0x58] sm:$0xf] %v546
      %588 = vst [vmem:[%s177 + $0x5c] sm:$0xf] %v547
      %589 = vst [vmem:[%s177 + $0x60] sm:$0xf] %v548
      %590 = vst [vmem:[%s177 + $0x64] sm:$0xf] %v549
      %591 = vst [vmem:[%s177 + $0x68] sm:$0xf] %v550
      %592 = vst [vmem:[%s177 + $0x6c] sm:$0xf] %v551
      %593 = vst [vmem:[%s177 + $0x70] sm:$0xf] %v552
      %594 = vst [vmem:[%s177 + $0x74] sm:$0xf] %v553
      %595 = vst [vmem:[%s177 + $0x78] sm:$0xf] %v554
      %596 = vst [vmem:[%s177 + $0x7c] sm:$0xf] %v555
      %597 = vst [vmem:[%s177 + $0x80] sm:$0xf] %v556
      %598 = vst [vmem:[%s177 + $0x84] sm:$0xf] %v557
      %599 = vst [vmem:[%s177 + $0x88] sm:$0xf] %v558
      %600 = vst [vmem:[%s177 + $0x8c] sm:$0xf] %v559
      %601 = vst [vmem:[%s177 + $0x90] sm:$0xf] %v560
      %602 = vst [vmem:[%s177 + $0x94] sm:$0xf] %v561
      %603 = vst [vmem:[%s177 + $0x98] sm:$0xf] %v562
      %604 = vst [vmem:[%s177 + $0x9c] sm:$0xf] %v563
      %605 = vst [vmem:[%s177 + $0xa0] sm:$0xf] %v564
      %v606 = vadd.f32 %v421, %v423
      %v607 = vadd.f32 %v606, %v426
      %v608 = vadd.f32 %v607, %v428
      %v609 = vadd.f32 %v608, %v431
      %v610 = vadd.f32 %v609, %v433
      %v611 = vadd.f32 %v610, %v436
      %v612 = vadd.f32 %v611, %v438
      %v613 = vadd.f32 %v612, %v441
      %v614 = vadd.f32 %v613, %v443
      %v615 = vadd.f32 %v614, %v446
      %v616 = vadd.f32 %v615, %v448
      %v617 = vadd.f32 %v616, %v451
      %v618 = vadd.f32 %v617, %v453
      %v619 = vadd.f32 %v618, %v456
      %v620 = vadd.f32 %v619, %v458
      %v621 = vadd.f32 %v620, %v461
      %v622 = vadd.f32 %v621, %v463
      %v623 = vadd.f32 %v622, %v466
      %v624 = vadd.f32 %v623, %v468
      %v625 = vadd.f32 %v624, %v471
      %v626 = vadd.f32 %v625, %v473
      %v627 = vadd.f32 %v626, %v476
      %v628 = vadd.f32 %v627, %v478
      %v629 = vadd.f32 %v628, %v481
      %v630 = vadd.f32 %v629, %v483
      %v631 = vadd.f32 %v630, %v486
      %v632 = vadd.f32 %v631, %v488
      %v633 = vadd.f32 %v632, %v491
      %v634 = vadd.f32 %v633, %v493
      %v635 = vadd.f32 %v634, %v496
      %v636 = vadd.f32 %v635, %v498
      %v637 = vadd.f32 %v636, %v501
      %v638 = vadd.f32 %v637, %v503
      %v639 = vadd.f32 %v638, %v506
      %v640 = vadd.f32 %v639, %v508
      %v641 = vadd.f32 %v640, %v511
      %v642 = vadd.f32 %v641, %v513
      %v643 = vadd.f32 %v642, %v516
      %v644 = vadd.f32 %v643, %v518
      %v645 = vadd.f32 %v644, %v521
      %v646 = vrot.slane %v645, 4
      %v647 = vadd.f32 %v645, %v646
      %v648 = vrot.slane %v647, 2
      %v649 = vadd.f32 %v647, %v648
      %v650 = vrot.slane %v649, 1
      %v651 = vadd.f32 %v649, %v650
      %v652 = vmul.f32 %v421, %v421
      %v653 = vmul.f32 %v423, %v423
      %v654 = vmul.f32 %v426, %v426
      %v655 = vmul.f32 %v428, %v428
      %v656 = vmul.f32 %v431, %v431
      %v657 = vmul.f32 %v433, %v433
      %v658 = vmul.f32 %v436, %v436
      %v659 = vmul.f32 %v438, %v438
      %v660 = vmul.f32 %v441, %v441
      %v661 = vmul.f32 %v443, %v443
      %v662 = vmul.f32 %v446, %v446
      %v663 = vmul.f32 %v448, %v448
      %v664 = vmul.f32 %v451, %v451
      %v665 = vmul.f32 %v453, %v453
      %v666 = vmul.f32 %v456, %v456
      %v667 = vmul.f32 %v458, %v458
      %v668 = vmul.f32 %v461, %v461
      %v669 = vmul.f32 %v463, %v463
      %v670 = vmul.f32 %v466, %v466
      %v671 = vmul.f32 %v468, %v468
      %v672 = vmul.f32 %v471, %v471
      %v673 = vmul.f32 %v473, %v473
      %v674 = vmul.f32 %v476, %v476
      %v675 = vmul.f32 %v478, %v478
      %v676 = vmul.f32 %v481, %v481
      %v677 = vmul.f32 %v483, %v483
      %v678 = vmul.f32 %v486, %v486
      %v679 = vmul.f32 %v488, %v488
      %v680 = vmul.f32 %v491, %v491
      %v681 = vmul.f32 %v493, %v493
      %v682 = vmul.f32 %v496, %v496
      %v683 = vmul.f32 %v498, %v498
      %v684 = vmul.f32 %v501, %v501
      %v685 = vmul.f32 %v503, %v503
      %v686 = vmul.f32 %v506, %v506
      %v687 = vmul.f32 %v508, %v508
      %v688 = vmul.f32 %v511, %v511
      %v689 = vmul.f32 %v513, %v513
      %v690 = vmul.f32 %v516, %v516
      %v691 = vmul.f32 %v518, %v518
      %v692 = vmul.f32 %v521, %v521
      %v693 = vadd.f32 %v652, %v653
      %v694 = vadd.f32 %v693, %v654
      %v695 = vadd.f32 %v694, %v655
      %v696 = vadd.f32 %v695, %v656
      %v697 = vadd.f32 %v696, %v657
      %v698 = vadd.f32 %v697, %v658
      %v699 = vadd.f32 %v698, %v659
      %v700 = vadd.f32 %v699, %v660
      %v701 = vadd.f32 %v700, %v661
      %v702 = vadd.f32 %v701, %v662
      %v703 = vadd.f32 %v702, %v663
      %v704 = vadd.f32 %v703, %v664
      %v705 = vadd.f32 %v704, %v665
      %v706 = vadd.f32 %v705, %v666
      %v707 = vadd.f32 %v706, %v667
      %v708 = vadd.f32 %v707, %v668
      %v709 = vadd.f32 %v708, %v669
      %v710 = vadd.f32 %v709, %v670
      %v711 = vadd.f32 %v710, %v671
      %v712 = vadd.f32 %v711, %v672
      %v713 = vadd.f32 %v712, %v673
      %v714 = vadd.f32 %v713, %v674
      %v715 = vadd.f32 %v714, %v675
      %v716 = vadd.f32 %v715, %v676
      %v717 = vadd.f32 %v716, %v677
      %v718 = vadd.f32 %v717, %v678
      %v719 = vadd.f32 %v718, %v679
      %v720 = vadd.f32 %v719, %v680
      %v721 = vadd.f32 %v720, %v681
      %v722 = vadd.f32 %v721, %v682
      %v723 = vadd.f32 %v722, %v683
      %v724 = vadd.f32 %v723, %v684
      %v725 = vadd.f32 %v724, %v685
      %v726 = vadd.f32 %v725, %v686
      %v727 = vadd.f32 %v726, %v687
      %v728 = vadd.f32 %v727, %v688
      %v729 = vadd.f32 %v728, %v689
      %v730 = vadd.f32 %v729, %v690
      %v731 = vadd.f32 %v730, %v691
      %v732 = vadd.f32 %v731, %v692
      %v733 = vrot.slane %v732, 4
      %v734 = vadd.f32 %v732, %v733
      %v735 = vrot.slane %v734, 2
      %v736 = vadd.f32 %v734, %v735
      %v737 = vrot.slane %v736, 1
      %v738 = vadd.f32 %v736, %v737
      %vm739 = vcmask 1040384
      %v740 = vsel %vm739, %v651, %v738
      %741 = vst [vmem:[%s181] sm:$0x3] %v740
      %p742 = scmp.lt.s32.totalorder %s15, 1
      %s743 = scalar_select %p742, %s15, 1
      %s744 = smul.addr %s743, 41
      %s745 = smul.addr %s744, 4
      %s746 = scalar_lea.vmem %s2, %s745
      %p747 = scmp.lt.s32.totalorder %s15, 1
      %s748 = scalar_select %p747, %s15, 1
      %s749 = smul.addr %s748, 2
      %s750 = scalar_lea.vmem %s3, %s749
      // Predicated region
      $region29: #{block_forward.4} parent=27 // pred_check
        %p751 = pneg %p80
      $region30: #{block_forward.4} parent=27 // pred_check_branch
        %753 = sbr.rel (%p751) target = $region32
      $region31: #{block_forward.4} parent=27 // pred_region
        _
      $region32: #{block_forward.4} parent=27 // pred_fallthru
        _
      // Predicated region
      $region33: #{block_forward.4} parent=27 // pred_check
        %p754 = pneg %p106
      $region34: #{block_forward.4} parent=27 // pred_check_branch
        %756 = sbr.rel (%p754) target = $region36
      $region35: #{block_forward.4} parent=27 // pred_region
        _
      $region36: #{block_forward.4} parent=27 // pred_fallthru
        _
    $region28: #{block_forward.4} parent=5 // pred_fallthru
      _
    %p757 = scmp.le.s32.totalorder 2, %s10
    // Predicated region
    $region37: #{block_forward.4} parent=5 // pred_check
      %p758 = pneg %p757
    $region38: #{block_forward.4} parent=5 // pred_check_branch
      %760 = sbr.rel (%p758) target = $region40
    $region39: #{block_forward.4} parent=5 // pred_region
      %s761 = ssub.s32 %s10, 2
      // Predicated region
      $region41: #{block_forward.4} parent=39 // pred_check
        %p762 = pneg %p86
      $region42: #{block_forward.4} parent=39 // pred_check_branch
        %764 = sbr.rel (%p762) target = $region44
      $region43: #{block_forward.4} parent=39 // pred_region
        %p765 = scmp.lt.s32.totalorder %s16, 1
        %s766 = scalar_select %p765, %s16, 1
        %s767 = smul.addr %s766, 41
        %s768 = smul.addr %s767, 4
        %s769 = scalar_lea.vmem %s2, %s768
      $region44: #{block_forward.4} parent=39 // pred_fallthru
        _
      // Predicated region
      $region45: #{block_forward.4} parent=39 // pred_check
        %p770 = pneg %p112
      $region46: #{block_forward.4} parent=39 // pred_check_branch
        %772 = sbr.rel (%p770) target = $region48
      $region47: #{block_forward.4} parent=39 // pred_region
        %p773 = scmp.lt.s32.totalorder %s16, 1
        %s774 = scalar_select %p773, %s16, 1
        %s775 = smul.addr %s774, 2
        %s776 = scalar_lea.vmem %s3, %s775
      $region48: #{block_forward.4} parent=39 // pred_fallthru
        _
    $region40: #{block_forward.4} parent=5 // pred_fallthru
      _
  $region6: #{block_forward.4} parent=0 // loop_footer
    %s14 = sadd.s32 1, %s10
  $region7: #{block_forward.4} parent=0 // loop_footer_branch
    %9 = sbr.rel target = $region3
  $region8: #{block_forward.4} parent=0 // loop_exit
    _

// kernel: block_forward.7
$region0: #{block_forward.7}
  #allocation0 [shape = 'u32[]', space=smem, size = 0x4, offset = 0x4, fixed_abs, tag = 'smem constant byte address 0x4 - core index']
  #allocation1 [shape = 'u32[72,128]{1,0:T(1,128)}', space=vmem, size = 0x9000, scoped, tag = 'internal scratch']
  %s0 = inlined_call_operand.vmem [shape: bf16[2,288,128], index: 0, kind: input, shape index: {}]
  %s1 = inlined_call_operand.vmem [shape: f32[1,128], index: 1, kind: input, shape index: {}]
  %s2 = inlined_call_operand.vmem [shape: f32[1,128], index: 2, kind: input, shape index: {}]
  %s3 = inlined_call_operand.vmem [shape: bf16[2,328,128], index: 3, kind: input, shape index: {}]
  %s4 = inlined_call_operand.vmem [shape: f32[2,288,128], index: 4, kind: output, shape index: {}]
  %s5 = sld [smem:[#allocation0]]
  $region49: #{block_forward.7} parent=0
    _
  %s7 = ssub.s32 1, %s5
  %s8 = scalar_select 0, %s7, %s5
  loop: start=0, step=1, limit=4
  $region2: #{block_forward.7} parent=0 // loop_pre_header
    _
  $region3: #{block_forward.7} parent=0 // loop_header
    %s10 = sphi 0, %s14
    %p11 = scmp.ge.s32.totalorder %s10, 4
    %s20 = sphi 0, %s22
    %s23 = sphi 0, %s20
    %s24 = sphi 0, %s23
    %s40 = sphi 0, %s24
    %s44 = sphi 0, %s44
    %s46 = sphi 0, %s44
    %s47 = sphi 0, %s46
    %s61 = sphi 0, %s47
    %s65 = sphi 0, %s65
    %s67 = sphi 0, %s65
    %s68 = sphi 0, %s67
    %s82 = sphi 0, %s68
    %s88 = sphi 0, %s90
    %s91 = sphi 0, %s88
    %s92 = sphi 0, %s91
    %s108 = sphi 0, %s92
    %s114 = sphi 0, %s116
    %s117 = sphi 0, %s114
    %s118 = sphi 0, %s117
    %s134 = sphi 0, %s118
  $region4: #{block_forward.7} parent=0 // loop_header_branch
    %13 = sbr.rel (%p11) target = $region8
  $region5: #{block_forward.7} parent=0 // loop_body
    %s15 = ssub.s32 %s10, 1
    %s16 = ssub.s32 %s10, 2
    %s17 = sadd.s32 %s10, 1
    %s18 = ssub.s32 %s10, %s17
    %p19 = scmp.eq.s32.totalorder %s18, 0
    %s21 = sadd.s32 %s20, 1
    %s22 = scalar_select %p19, %s20, %s21
    %p25 = pneg %p19
    %p26 = scmp.eq.s32.totalorder %s10, 1
    %p27 = por %p25, %p26
    %p28 = scmp.ne.s32.totalorder %s20, %s23
    %p29 = scmp.eq.s32.totalorder %s10, 0
    %p30 = por %p28, %p29
    %p31 = scmp.ne.s32.totalorder %s20, %s23
    %p32 = scmp.eq.s32.totalorder %s15, 1
    %p33 = por %p31, %p32
    %p34 = scmp.ne.s32.totalorder %s23, %s24
    %p35 = scmp.eq.s32.totalorder %s15, 0
    %p36 = por %p34, %p35
    %p37 = scmp.ne.s32.totalorder %s23, %s24
    %p38 = scmp.eq.s32.totalorder %s16, 1
    %p39 = por %p37, %p38
    %p41 = scmp.ne.s32.totalorder %s24, %s40
    %p42 = scmp.eq.s32.totalorder %s16, 0
    %p43 = por %p41, %p42
    %s45 = sadd.s32 %s44, 1
    %p48 = scmp.eq.s32.totalorder %s10, 1
    %p49 = scmp.ne.s32.totalorder %s44, %s46
    %p50 = scmp.eq.s32.totalorder %s10, 0
    %p51 = por %p49, %p50
    %p52 = scmp.ne.s32.totalorder %s44, %s46
    %p53 = scmp.eq.s32.totalorder %s15, 1
    %p54 = por %p52, %p53
    %p55 = scmp.ne.s32.totalorder %s46, %s47
    %p56 = scmp.eq.s32.totalorder %s15, 0
    %p57 = por %p55, %p56
    %p58 = scmp.ne.s32.totalorder %s46, %s47
    %p59 = scmp.eq.s32.totalorder %s16, 1
    %p60 = por %p58, %p59
    %p62 = scmp.ne.s32.totalorder %s47, %s61
    %p63 = scmp.eq.s32.totalorder %s16, 0
    %p64 = por %p62, %p63
    %s66 = sadd.s32 %s65, 1
    %p69 = scmp.eq.s32.totalorder %s10, 1
    %p70 = scmp.ne.s32.totalorder %s65, %s67
    %p71 = scmp.eq.s32.totalorder %s10, 0
    %p72 = por %p70, %p71
    %p73 = scmp.ne.s32.totalorder %s65, %s67
    %p74 = scmp.eq.s32.totalorder %s15, 1
    %p75 = por %p73, %p74
    %p76 = scmp.ne.s32.totalorder %s67, %s68
    %p77 = scmp.eq.s32.totalorder %s15, 0
    %p78 = por %p76, %p77
    %p79 = scmp.ne.s32.totalorder %s67, %s68
    %p80 = scmp.eq.s32.totalorder %s16, 1
    %p81 = por %p79, %p80
    %p83 = scmp.ne.s32.totalorder %s68, %s82
    %p84 = scmp.eq.s32.totalorder %s16, 0
    %p85 = por %p83, %p84
    %s86 = ssub.s32 %s10, %s17
    %p87 = scmp.eq.s32.totalorder %s86, 0
    %s89 = sadd.s32 %s88, 1
    %s90 = scalar_select %p87, %s88, %s89
    %p93 = pneg %p87
    %p94 = scmp.eq.s32.totalorder %s10, 1
    %p95 = por %p93, %p94
    %p96 = scmp.ne.s32.totalorder %s88, %s91
    %p97 = scmp.eq.s32.totalorder %s10, 0
    %p98 = por %p96, %p97
    %p99 = scmp.ne.s32.totalorder %s88, %s91
    %p100 = scmp.eq.s32.totalorder %s15, 1
    %p101 = por %p99, %p100
    %p102 = scmp.ne.s32.totalorder %s91, %s92
    %p103 = scmp.eq.s32.totalorder %s15, 0
    %p104 = por %p102, %p103
    %p105 = scmp.ne.s32.totalorder %s91, %s92
    %p106 = scmp.eq.s32.totalorder %s16, 1
    %p107 = por %p105, %p106
    %p109 = scmp.ne.s32.totalorder %s92, %s108
    %p110 = scmp.eq.s32.totalorder %s16, 0
    %p111 = por %p109, %p110
    %s112 = ssub.s32 %s10, %s17
    %p113 = scmp.eq.s32.totalorder %s112, 0
    %s115 = sadd.s32 %s114, 1
    %s116 = scalar_select %p113, %s114, %s115
    %p119 = pneg %p113
    %p120 = scmp.eq.s32.totalorder %s10, 1
    %p121 = por %p119, %p120
    %p122 = scmp.ne.s32.totalorder %s114, %s117
    %p123 = scmp.eq.s32.totalorder %s10, 0
    %p124 = por %p122, %p123
    %p125 = scmp.ne.s32.totalorder %s114, %s117
    %p126 = scmp.eq.s32.totalorder %s15, 1
    %p127 = por %p125, %p126
    %p128 = scmp.ne.s32.totalorder %s117, %s118
    %p129 = scmp.eq.s32.totalorder %s15, 0
    %p130 = por %p128, %p129
    %p131 = scmp.ne.s32.totalorder %s117, %s118
    %p132 = scmp.eq.s32.totalorder %s16, 1
    %p133 = por %p131, %p132
    %p135 = scmp.ne.s32.totalorder %s118, %s134
    %p136 = scmp.eq.s32.totalorder %s16, 0
    %p137 = por %p135, %p136
    %p138 = scmp.le.s32.totalorder 1, %s10
    %p139 = scmp.lt.s32.totalorder %s10, 3
    %p140 = pnand %p138, %p139
    %p141 = pneg %p140
    // Predicated region
    $region9: #{block_forward.7} parent=5 // pred_check
      _
    $region10: #{block_forward.7} parent=5 // pred_check_branch
      %143 = sbr.rel (%p140) target = $region12
    $region11: #{block_forward.7} parent=5 // pred_region
      %s144 = ssub.s32 %s10, 1
      // Predicated region
      $region13: #{block_forward.7} parent=11 // pred_check
        %p145 = pneg %p57
      $region14: #{block_forward.7} parent=11 // pred_check_branch
        %147 = sbr.rel (%p145) target = $region16
      $region15: #{block_forward.7} parent=11 // pred_region
        _
      $region16: #{block_forward.7} parent=11 // pred_fallthru
        _
      // Predicated region
      $region17: #{block_forward.7} parent=11 // pred_check
        %p148 = pneg %p78
      $region18: #{block_forward.7} parent=11 // pred_check_branch
        %150 = sbr.rel (%p148) target = $region20
      $region19: #{block_forward.7} parent=11 // pred_region
        _
      $region20: #{block_forward.7} parent=11 // pred_fallthru
        _
    $region12: #{block_forward.7} parent=5 // pred_fallthru
      _
    %p151 = scmp.lt.s32.totalorder %s10, 2
    // Predicated region
    $region21: #{block_forward.7} parent=5 // pred_check
      %p152 = pneg %p151
    $region22: #{block_forward.7} parent=5 // pred_check_branch
      %154 = sbr.rel (%p152) target = $region24
    $region23: #{block_forward.7} parent=5 // pred_region
      // Predicated region
      $region25: #{block_forward.7} parent=23 // pred_check
        %p155 = pneg %p30
      $region26: #{block_forward.7} parent=23 // pred_check_branch
        %157 = sbr.rel (%p155) target = $region28
      $region27: #{block_forward.7} parent=23 // pred_region
        %p158 = scmp.lt.s32.totalorder %s10, 1
        %s159 = scalar_select %p158, %s10, 1
        %s160 = smul.addr %s159, 36
        %s161 = smul.addr %s160, 4
        %s162 = scalar_lea.vmem %s0, %s161
      $region28: #{block_forward.7} parent=23 // pred_fallthru
        _
      // Predicated region
      $region29: #{block_forward.7} parent=23 // pred_check
        %p163 = pneg %p98
      $region30: #{block_forward.7} parent=23 // pred_check_branch
        %165 = sbr.rel (%p163) target = $region32
      $region31: #{block_forward.7} parent=23 // pred_region
        %p166 = scmp.lt.s32.totalorder %s10, 1
        %s167 = scalar_select %p166, %s10, 1
        %s168 = smul.addr %s167, 41
        %s169 = smul.addr %s168, 4
        %s170 = scalar_lea.vmem %s3, %s169
      $region32: #{block_forward.7} parent=23 // pred_fallthru
        _
    $region24: #{block_forward.7} parent=5 // pred_fallthru
      _
    %p171 = scmp.le.s32.totalorder 1, %s10
    %p172 = scmp.lt.s32.totalorder %s10, 3
    %p173 = pnand %p171, %p172
    %p174 = pneg %p173
    // Predicated region
    $region33: #{block_forward.7} parent=5 // pred_check
      _
    $region34: #{block_forward.7} parent=5 // pred_check_branch
      %176 = sbr.rel (%p173) target = $region36
    $region35: #{block_forward.7} parent=5 // pred_region
      %s177 = ssub.s32 %s10, 1
      %p178 = scmp.lt.s32.totalorder %s15, 1
      %s179 = scalar_select %p178, %s15, 1
      %s180 = smul.addr %s179, 36
      %s181 = smul.addr %s180, 4
      %s182 = scalar_lea.vmem %s0, %s181
      %p183 = pneg %p36
      %p184 = pneg %p33
      %p185 = pneg %p57
      %p186 = pneg %p54
      %p187 = pneg %p78
      %p188 = pneg %p75
      %p189 = scmp.lt.s32.totalorder %s15, 1
      %s190 = scalar_select %p189, %s15, 1
      %s191 = smul.addr %s190, 41
      %s192 = smul.addr %s191, 4
      %s193 = scalar_lea.vmem %s3, %s192
      %p194 = pneg %p104
      %p195 = pneg %p101
      %p196 = pneg %p130
      %p197 = pneg %p127
      %p198 = scmp.lt.s32.totalorder %s15, 1
      %s199 = scalar_select %p198, %s15, 1
      %s200 = smul.addr %s199, 36
      %s201 = smul.addr %s200, 8
      %s202 = scalar_lea.vmem %s4, %s201
      %p203 = scmp.lt.s32.totalorder %s15, 1
      %s204 = scalar_select %p203, %s15, 1
      %s205 = smul.addr %s204, 36
      %s206 = smul.addr %s205, 4
      %s207 = scalar_lea.vmem %s0, %s206
      %p208 = scmp.lt.s32.totalorder %s15, 1
      %s209 = scalar_select %p208, %s15, 1
      %s210 = smul.addr %s209, 41
      %s211 = smul.addr %s210, 4
      %s212 = scalar_lea.vmem %s3, %s211
      %p213 = scmp.lt.s32.totalorder %s15, 1
      %s214 = scalar_select %p213, %s15, 1
      %s215 = smul.addr %s214, 36
      %s216 = smul.addr %s215, 8
      %s217 = scalar_lea.vmem %s4, %s216
      %v218 = vld [vmem:[%s212 + $0x8] sm:$0xf]
      %v219 = vld [vmem:[%s212 + $0xc] sm:$0xf]
      %v220 = vld [vmem:[%s212 + $0x10] sm:$0xf]
      %v221 = vld [vmem:[%s212 + $0x14] sm:$0xf]
      %v222 = vld [vmem:[%s212 + $0x18] sm:$0xf]
      %v223 = vld [vmem:[%s212 + $0x1c] sm:$0xf]
      %v224 = vld [vmem:[%s212 + $0x20] sm:$0xf]
      %v225 = vld [vmem:[%s212 + $0x24] sm:$0xf]
      %v226 = vld [vmem:[%s212 + $0x28] sm:$0xf]
      %v227 = vld [vmem:[%s212 + $0x2c] sm:$0xf]
      %v228 = vld [vmem:[%s212 + $0x30] sm:$0xf]
      %v229 = vld [vmem:[%s212 + $0x34] sm:$0xf]
      %v230 = vld [vmem:[%s212 + $0x38] sm:$0xf]
      %v231 = vld [vmem:[%s212 + $0x3c] sm:$0xf]
      %v232 = vld [vmem:[%s212 + $0x40] sm:$0xf]
      %v233 = vld [vmem:[%s212 + $0x44] sm:$0xf]
      %v234 = vld [vmem:[%s212 + $0x48] sm:$0xf]
      %v235 = vld [vmem:[%s212 + $0x4c] sm:$0xf]
      %v236 = vld [vmem:[%s212 + $0x50] sm:$0xf]
      %v237 = vld [vmem:[%s212 + $0x54] sm:$0xf]
      %v238 = vld [vmem:[%s212 + $0x58] sm:$0xf]
      %v239 = vld [vmem:[%s212 + $0x5c] sm:$0xf]
      %v240 = vld [vmem:[%s212 + $0x60] sm:$0xf]
      %v241 = vld [vmem:[%s212 + $0x64] sm:$0xf]
      %v242 = vld [vmem:[%s212 + $0x68] sm:$0xf]
      %v243 = vld [vmem:[%s212 + $0x6c] sm:$0xf]
      %v244 = vld [vmem:[%s212 + $0x70] sm:$0xf]
      %v245 = vld [vmem:[%s212 + $0x74] sm:$0xf]
      %v246 = vld [vmem:[%s212 + $0x78] sm:$0xf]
      %v247 = vld [vmem:[%s212 + $0x7c] sm:$0xf]
      %v248 = vld [vmem:[%s212 + $0x80] sm:$0xf]
      %v249 = vld [vmem:[%s212 + $0x84] sm:$0xf]
      %v250 = vld [vmem:[%s212 + $0x88] sm:$0xf]
      %v251 = vld [vmem:[%s212 + $0x8c] sm:$0xf]
      %v252 = vld [vmem:[%s212 + $0x90] sm:$0xf]
      %v253 = vld [vmem:[%s212 + $0x94] sm:$0xf]
      %v254 = vld [vmem:[%s212 + $0x98] sm:$0xf]
      %v255 = vunpack.c.l.bf16 %v218
      %v256 = vunpack.c.l.bf16 %v219
      %v257 = vunpack.c.l.bf16 %v220
      %v258 = vunpack.c.l.bf16 %v221
      %v259 = vunpack.c.l.bf16 %v222
      %v260 = vunpack.c.l.bf16 %v223
      %v261 = vunpack.c.l.bf16 %v224
      %v262 = vunpack.c.l.bf16 %v225
      %v263 = vunpack.c.l.bf16 %v226
      %v264 = vunpack.c.l.bf16 %v227
      %v265 = vunpack.c.l.bf16 %v228
      %v266 = vunpack.c.l.bf16 %v229
      %v267 = vunpack.c.l.bf16 %v230
      %v268 = vunpack.c.l.bf16 %v231
      %v269 = vunpack.c.l.bf16 %v232
      %v270 = vunpack.c.l.bf16 %v233
      %v271 = vunpack.c.l.bf16 %v234
      %v272 = vunpack.c.l.bf16 %v235
      %v273 = vunpack.c.l.bf16 %v236
      %v274 = vunpack.c.l.bf16 %v237
      %v275 = vunpack.c.l.bf16 %v238
      %v276 = vunpack.c.l.bf16 %v239
      %v277 = vunpack.c.l.bf16 %v240
      %v278 = vunpack.c.l.bf16 %v241
      %v279 = vunpack.c.l.bf16 %v242
      %v280 = vunpack.c.l.bf16 %v243
      %v281 = vunpack.c.l.bf16 %v244
      %v282 = vunpack.c.l.bf16 %v245
      %v283 = vunpack.c.l.bf16 %v246
      %v284 = vunpack.c.l.bf16 %v247
      %v285 = vunpack.c.l.bf16 %v248
      %v286 = vunpack.c.l.bf16 %v249
      %v287 = vunpack.c.l.bf16 %v250
      %v288 = vunpack.c.l.bf16 %v251
      %v289 = vunpack.c.l.bf16 %v252
      %v290 = vunpack.c.l.bf16 %v253
      %v291 = vunpack.c.l.bf16 %v254
      %v292 = vld [vmem:[%s207] sm:$0xf]
      %v293 = vld [vmem:[%s207 + $0x4] sm:$0xf]
      %v294 = vld [vmem:[%s207 + $0x8] sm:$0xf]
      %v295 = vld [vmem:[%s207 + $0xc] sm:$0xf]
      %v296 = vld [vmem:[%s207 + $0x10] sm:$0xf]
      %v297 = vld [vmem:[%s207 + $0x14] sm:$0xf]
      %v298 = vld [vmem:[%s207 + $0x18] sm:$0xf]
      %v299 = vld [vmem:[%s207 + $0x1c] sm:$0xf]
      %v300 = vld [vmem:[%s207 + $0x20] sm:$0xf]
      %v301 = vld [vmem:[%s207 + $0x24] sm:$0xf]
      %v302 = vld [vmem:[%s207 + $0x28] sm:$0xf]
      %v303 = vld [vmem:[%s207 + $0x2c] sm:$0xf]
      %v304 = vld [vmem:[%s207 + $0x30] sm:$0xf]
      %v305 = vld [vmem:[%s207 + $0x34] sm:$0xf]
      %v306 = vld [vmem:[%s207 + $0x38] sm:$0xf]
      %v307 = vld [vmem:[%s207 + $0x3c] sm:$0xf]
      %v308 = vld [vmem:[%s207 + $0x40] sm:$0xf]
      %v309 = vld [vmem:[%s207 + $0x44] sm:$0xf]
      %v310 = vld [vmem:[%s207 + $0x48] sm:$0xf]
      %v311 = vld [vmem:[%s207 + $0x4c] sm:$0xf]
      %v312 = vld [vmem:[%s207 + $0x50] sm:$0xf]
      %v313 = vld [vmem:[%s207 + $0x54] sm:$0xf]
      %v314 = vld [vmem:[%s207 + $0x58] sm:$0xf]
      %v315 = vld [vmem:[%s207 + $0x5c] sm:$0xf]
      %v316 = vld [vmem:[%s207 + $0x60] sm:$0xf]
      %v317 = vld [vmem:[%s207 + $0x64] sm:$0xf]
      %v318 = vld [vmem:[%s207 + $0x68] sm:$0xf]
      %v319 = vld [vmem:[%s207 + $0x6c] sm:$0xf]
      %v320 = vld [vmem:[%s207 + $0x70] sm:$0xf]
      %v321 = vld [vmem:[%s207 + $0x74] sm:$0xf]
      %v322 = vld [vmem:[%s207 + $0x78] sm:$0xf]
      %v323 = vld [vmem:[%s207 + $0x7c] sm:$0xf]
      %v324 = vld [vmem:[%s207 + $0x80] sm:$0xf]
      %v325 = vld [vmem:[%s207 + $0x84] sm:$0xf]
      %v326 = vld [vmem:[%s207 + $0x88] sm:$0xf]
      %v327 = vld [vmem:[%s207 + $0x8c] sm:$0xf]
      %v328 = vunpack.c.l.bf16 %v292
      %v329 = vunpack.c.l.bf16 %v293
      %v330 = vunpack.c.l.bf16 %v294
      %v331 = vunpack.c.l.bf16 %v295
      %v332 = vunpack.c.l.bf16 %v296
      %v333 = vunpack.c.l.bf16 %v297
      %v334 = vunpack.c.l.bf16 %v298
      %v335 = vunpack.c.l.bf16 %v299
      %v336 = vunpack.c.l.bf16 %v300
      %v337 = vunpack.c.l.bf16 %v301
      %v338 = vunpack.c.l.bf16 %v302
      %v339 = vunpack.c.l.bf16 %v303
      %v340 = vunpack.c.l.bf16 %v304
      %v341 = vunpack.c.l.bf16 %v305
      %v342 = vunpack.c.l.bf16 %v306
      %v343 = vunpack.c.l.bf16 %v307
      %v344 = vunpack.c.l.bf16 %v308
      %v345 = vunpack.c.l.bf16 %v309
      %v346 = vunpack.c.l.bf16 %v310
      %v347 = vunpack.c.l.bf16 %v311
      %v348 = vunpack.c.l.bf16 %v312
      %v349 = vunpack.c.l.bf16 %v313
      %v350 = vunpack.c.l.bf16 %v314
      %v351 = vunpack.c.l.bf16 %v315
      %v352 = vunpack.c.l.bf16 %v316
      %v353 = vunpack.c.l.bf16 %v317
      %v354 = vunpack.c.l.bf16 %v318
      %v355 = vunpack.c.l.bf16 %v319
      %v356 = vunpack.c.l.bf16 %v320
      %v357 = vunpack.c.l.bf16 %v321
      %v358 = vunpack.c.l.bf16 %v322
      %v359 = vunpack.c.l.bf16 %v323
      %v360 = vunpack.c.l.bf16 %v324
      %v361 = vunpack.c.l.bf16 %v325
      %v362 = vunpack.c.l.bf16 %v326
      %v363 = vunpack.c.l.bf16 %v327
      %v364 = vld [vmem:[%s1] sm:$0x1]
      %v366 = vperm.slane %v364, 0
      %v368 = vmul.f32 %v328, %v366
      %v369 = vmul.f32 %v329, %v366
      %v370 = vmul.f32 %v330, %v366
      %v371 = vmul.f32 %v331, %v366
      %v372 = vmul.f32 %v332, %v366
      %v373 = vmul.f32 %v333, %v366
      %v374 = vmul.f32 %v334, %v366
      %v375 = vmul.f32 %v335, %v366
      %v376 = vmul.f32 %v336, %v366
      %v377 = vmul.f32 %v337, %v366
      %v378 = vmul.f32 %v338, %v366
      %v379 = vmul.f32 %v339, %v366
      %v380 = vmul.f32 %v340, %v366
      %v381 = vmul.f32 %v341, %v366
      %v382 = vmul.f32 %v342, %v366
      %v383 = vmul.f32 %v343, %v366
      %v384 = vmul.f32 %v344, %v366
      %v385 = vmul.f32 %v345, %v366
      %v386 = vmul.f32 %v346, %v366
      %v387 = vmul.f32 %v347, %v366
      %v388 = vmul.f32 %v348, %v366
      %v389 = vmul.f32 %v349, %v366
      %v390 = vmul.f32 %v350, %v366
      %v391 = vmul.f32 %v351, %v366
      %v392 = vmul.f32 %v352, %v366
      %v393 = vmul.f32 %v353, %v366
      %v394 = vmul.f32 %v354, %v366
      %v395 = vmul.f32 %v355, %v366
      %v396 = vmul.f32 %v356, %v366
      %v397 = vmul.f32 %v357, %v366
      %v398 = vmul.f32 %v358, %v366
      %v399 = vmul.f32 %v359, %v366
      %v400 = vmul.f32 %v360, %v366
      %v401 = vmul.f32 %v361, %v366
      %v402 = vmul.f32 %v362, %v366
      %v403 = vmul.f32 %v363, %v366
      %v404 = vld [vmem:[%s2] sm:$0x1]
      %v406 = vperm.slane %v404, 0
      %v408 = vadd.f32 %v368, %v406
      %v409 = vadd.f32 %v369, %v406
      %v410 = vadd.f32 %v370, %v406
      %v411 = vadd.f32 %v371, %v406
      %v412 = vadd.f32 %v372, %v406
      %v413 = vadd.f32 %v373, %v406
      %v414 = vadd.f32 %v374, %v406
      %v415 = vadd.f32 %v375, %v406
      %v416 = vadd.f32 %v376, %v406
      %v417 = vadd.f32 %v377, %v406
      %v418 = vadd.f32 %v378, %v406
      %v419 = vadd.f32 %v379, %v406
      %v420 = vadd.f32 %v380, %v406
      %v421 = vadd.f32 %v381, %v406
      %v422 = vadd.f32 %v382, %v406
      %v423 = vadd.f32 %v383, %v406
      %v424 = vadd.f32 %v384, %v406
      %v425 = vadd.f32 %v385, %v406
      %v426 = vadd.f32 %v386, %v406
      %v427 = vadd.f32 %v387, %v406
      %v428 = vadd.f32 %v388, %v406
      %v429 = vadd.f32 %v389, %v406
      %v430 = vadd.f32 %v390, %v406
      %v431 = vadd.f32 %v391, %v406
      %v432 = vadd.f32 %v392, %v406
      %v433 = vadd.f32 %v393, %v406
      %v434 = vadd.f32 %v394, %v406
      %v435 = vadd.f32 %v395, %v406
      %v436 = vadd.f32 %v396, %v406
      %v437 = vadd.f32 %v397, %v406
      %v438 = vadd.f32 %v398, %v406
      %v439 = vadd.f32 %v399, %v406
      %v440 = vadd.f32 %v400, %v406
      %v441 = vadd.f32 %v401, %v406
      %v442 = vadd.f32 %v402, %v406
      %v443 = vadd.f32 %v403, %v406
      %vm481 = vcmask 1044480
      %v482 = vrot.slane %v255, 3
      %v483 = vrot.slane %v256, 3
      %v484 = vsel %vm481, %v482, %v483
      %v485 = vrot.slane %v257, 3
      %v486 = vsel %vm481, %v483, %v485
      %v487 = vrot.slane %v258, 3
      %v488 = vsel %vm481, %v485, %v487
      %v489 = vrot.slane %v259, 3
      %v490 = vsel %vm481, %v487, %v489
      %v491 = vrot.slane %v260, 3
      %v492 = vsel %vm481, %v489, %v491
      %v493 = vrot.slane %v261, 3
      %v494 = vsel %vm481, %v491, %v493
      %v495 = vrot.slane %v262, 3
      %v496 = vsel %vm481, %v493, %v495
      %v497 = vrot.slane %v263, 3
      %v498 = vsel %vm481, %v495, %v497
      %v499 = vrot.slane %v264, 3
      %v500 = vsel %vm481, %v497, %v499
      %v501 = vrot.slane %v265, 3
      %v502 = vsel %vm481, %v499, %v501
      %v503 = vrot.slane %v266, 3
      %v504 = vsel %vm481, %v501, %v503
      %v505 = vrot.slane %v267, 3
      %v506 = vsel %vm481, %v503, %v505
      %v507 = vrot.slane %v268, 3
      %v508 = vsel %vm481, %v505, %v507
      %v509 = vrot.slane %v269, 3
      %v510 = vsel %vm481, %v507, %v509
      %v511 = vrot.slane %v270, 3
      %v512 = vsel %vm481, %v509, %v511
      %v513 = vrot.slane %v271, 3
      %v514 = vsel %vm481, %v511, %v513
      %v515 = vrot.slane %v272, 3
      %v516 = vsel %vm481, %v513, %v515
      %v517 = vrot.slane %v273, 3
      %v518 = vsel %vm481, %v515, %v517
      %v519 = vrot.slane %v274, 3
      %v520 = vsel %vm481, %v517, %v519
      %v521 = vrot.slane %v275, 3
      %v522 = vsel %vm481, %v519, %v521
      %v523 = vrot.slane %v276, 3
      %v524 = vsel %vm481, %v521, %v523
      %v525 = vrot.slane %v277, 3
      %v526 = vsel %vm481, %v523, %v525
      %v527 = vrot.slane %v278, 3
      %v528 = vsel %vm481, %v525, %v527
      %v529 = vrot.slane %v279, 3
      %v530 = vsel %vm481, %v527, %v529
      %v531 = vrot.slane %v280, 3
      %v532 = vsel %vm481, %v529, %v531
      %v533 = vrot.slane %v281, 3
      %v534 = vsel %vm481, %v531, %v533
      %v535 = vrot.slane %v282, 3
      %v536 = vsel %vm481, %v533, %v535
      %v537 = vrot.slane %v283, 3
      %v538 = vsel %vm481, %v535, %v537
      %v539 = vrot.slane %v284, 3
      %v540 = vsel %vm481, %v537, %v539
      %v541 = vrot.slane %v285, 3
      %v542 = vsel %vm481, %v539, %v541
      %v543 = vrot.slane %v286, 3
      %v544 = vsel %vm481, %v541, %v543
      %v545 = vrot.slane %v287, 3
      %v546 = vsel %vm481, %v543, %v545
      %v547 = vrot.slane %v288, 3
      %v548 = vsel %vm481, %v545, %v547
      %v549 = vrot.slane %v289, 3
      %v550 = vsel %vm481, %v547, %v549
      %v551 = vrot.slane %v290, 3
      %v552 = vsel %vm481, %v549, %v551
      %v553 = vrot.slane %v291, 3
      %v554 = vsel %vm481, %v551, %v553
      %v591 = vadd.f32 %v408, %v484
      %v592 = vadd.f32 %v409, %v486
      %v593 = vadd.f32 %v410, %v488
      %v594 = vadd.f32 %v411, %v490
      %v595 = vadd.f32 %v412, %v492
      %v596 = vadd.f32 %v413, %v494
      %v597 = vadd.f32 %v414, %v496
      %v598 = vadd.f32 %v415, %v498
      %v599 = vadd.f32 %v416, %v500
      %v600 = vadd.f32 %v417, %v502
      %v601 = vadd.f32 %v418, %v504
      %v602 = vadd.f32 %v419, %v506
      %v603 = vadd.f32 %v420, %v508
      %v604 = vadd.f32 %v421, %v510
      %v605 = vadd.f32 %v422, %v512
      %v606 = vadd.f32 %v423, %v514
      %v607 = vadd.f32 %v424, %v516
      %v608 = vadd.f32 %v425, %v518
      %v609 = vadd.f32 %v426, %v520
      %v610 = vadd.f32 %v427, %v522
      %v611 = vadd.f32 %v428, %v524
      %v612 = vadd.f32 %v429, %v526
      %v613 = vadd.f32 %v430, %v528
      %v614 = vadd.f32 %v431, %v530
      %v615 = vadd.f32 %v432, %v532
      %v616 = vadd.f32 %v433, %v534
      %v617 = vadd.f32 %v434, %v536
      %v618 = vadd.f32 %v435, %v538
      %v619 = vadd.f32 %v436, %v540
      %v620 = vadd.f32 %v437, %v542
      %v621 = vadd.f32 %v438, %v544
      %v622 = vadd.f32 %v439, %v546
      %v623 = vadd.f32 %v440, %v548
      %v624 = vadd.f32 %v441, %v550
      %v625 = vadd.f32 %v442, %v552
      %v626 = vadd.f32 %v443, %v554
      %v627 = vmax.f32 %v591, 0.0
      %v628 = vmax.f32 %v592, 0.0
      %v629 = vmax.f32 %v593, 0.0
      %v630 = vmax.f32 %v594, 0.0
      %v631 = vmax.f32 %v595, 0.0
      %v632 = vmax.f32 %v596, 0.0
      %v633 = vmax.f32 %v597, 0.0
      %v634 = vmax.f32 %v598, 0.0
      %v635 = vmax.f32 %v599, 0.0
      %v636 = vmax.f32 %v600, 0.0
      %v637 = vmax.f32 %v601, 0.0
      %v638 = vmax.f32 %v602, 0.0
      %v639 = vmax.f32 %v603, 0.0
      %v640 = vmax.f32 %v604, 0.0
      %v641 = vmax.f32 %v605, 0.0
      %v642 = vmax.f32 %v606, 0.0
      %v643 = vmax.f32 %v607, 0.0
      %v644 = vmax.f32 %v608, 0.0
      %v645 = vmax.f32 %v609, 0.0
      %v646 = vmax.f32 %v610, 0.0
      %v647 = vmax.f32 %v611, 0.0
      %v648 = vmax.f32 %v612, 0.0
      %v649 = vmax.f32 %v613, 0.0
      %v650 = vmax.f32 %v614, 0.0
      %v651 = vmax.f32 %v615, 0.0
      %v652 = vmax.f32 %v616, 0.0
      %v653 = vmax.f32 %v617, 0.0
      %v654 = vmax.f32 %v618, 0.0
      %v655 = vmax.f32 %v619, 0.0
      %v656 = vmax.f32 %v620, 0.0
      %v657 = vmax.f32 %v621, 0.0
      %v658 = vmax.f32 %v622, 0.0
      %v659 = vmax.f32 %v623, 0.0
      %v660 = vmax.f32 %v624, 0.0
      %v661 = vmax.f32 %v625, 0.0
      %v662 = vmax.f32 %v626, 0.0
      %663 = vst [vmem:[%s217] sm:$0xff] %v627
      %664 = vst [vmem:[%s217 + $0x8] sm:$0xff] %v628
      %665 = vst [vmem:[%s217 + $0x10] sm:$0xff] %v629
      %666 = vst [vmem:[%s217 + $0x18] sm:$0xff] %v630
      %667 = vst [vmem:[%s217 + $0x20] sm:$0xff] %v631
      %668 = vst [vmem:[%s217 + $0x28] sm:$0xff] %v632
      %669 = vst [vmem:[%s217 + $0x30] sm:$0xff] %v633
      %670 = vst [vmem:[%s217 + $0x38] sm:$0xff] %v634
      %671 = vst [vmem:[%s217 + $0x40] sm:$0xff] %v635
      %672 = vst [vmem:[%s217 + $0x48] sm:$0xff] %v636
      %673 = vst [vmem:[%s217 + $0x50] sm:$0xff] %v637
      %674 = vst [vmem:[%s217 + $0x58] sm:$0xff] %v638
      %675 = vst [vmem:[%s217 + $0x60] sm:$0xff] %v639
      %676 = vst [vmem:[%s217 + $0x68] sm:$0xff] %v640
      %677 = vst [vmem:[%s217 + $0x70] sm:$0xff] %v641
      %678 = vst [vmem:[%s217 + $0x78] sm:$0xff] %v642
      %679 = vst [vmem:[%s217 + $0x80] sm:$0xff] %v643
      %680 = vst [vmem:[%s217 + $0x88] sm:$0xff] %v644
      %681 = vst [vmem:[%s217 + $0x90] sm:$0xff] %v645
      %682 = vst [vmem:[%s217 + $0x98] sm:$0xff] %v646
      %683 = vst [vmem:[%s217 + $0xa0] sm:$0xff] %v647
      %684 = vst [vmem:[%s217 + $0xa8] sm:$0xff] %v648
      %685 = vst [vmem:[%s217 + $0xb0] sm:$0xff] %v649
      %686 = vst [vmem:[%s217 + $0xb8] sm:$0xff] %v650
      %687 = vst [vmem:[%s217 + $0xc0] sm:$0xff] %v651
      %688 = vst [vmem:[%s217 + $0xc8] sm:$0xff] %v652
      %689 = vst [vmem:[%s217 + $0xd0] sm:$0xff] %v653
      %690 = vst [vmem:[%s217 + $0xd8] sm:$0xff] %v654
      %691 = vst [vmem:[%s217 + $0xe0] sm:$0xff] %v655
      %692 = vst [vmem:[%s217 + $0xe8] sm:$0xff] %v656
      %693 = vst [vmem:[%s217 + $0xf0] sm:$0xff] %v657
      %694 = vst [vmem:[%s217 + $0xf8] sm:$0xff] %v658
      %695 = vst [vmem:[%s217 + $0x100] sm:$0xff] %v659
      %696 = vst [vmem:[%s217 + $0x108] sm:$0xff] %v660
      %697 = vst [vmem:[%s217 + $0x110] sm:$0xff] %v661
      %698 = vst [vmem:[%s217 + $0x118] sm:$0xff] %v662
      %p699 = scmp.lt.s32.totalorder %s15, 1
      %s700 = scalar_select %p699, %s15, 1
      %s701 = smul.addr %s700, 36
      %s702 = smul.addr %s701, 8
      %s703 = scalar_lea.vmem %s4, %s702
      // Predicated region
      $region37: #{block_forward.7} parent=35 // pred_check
        %p704 = pneg %p127
      $region38: #{block_forward.7} parent=35 // pred_check_branch
        %706 = sbr.rel (%p704) target = $region40
      $region39: #{block_forward.7} parent=35 // pred_region
        _
      $region40: #{block_forward.7} parent=35 // pred_fallthru
        _
    $region36: #{block_forward.7} parent=5 // pred_fallthru
      _
    %p707 = scmp.le.s32.totalorder 2, %s10
    // Predicated region
    $region41: #{block_forward.7} parent=5 // pred_check
      %p708 = pneg %p707
    $region42: #{block_forward.7} parent=5 // pred_check_branch
      %710 = sbr.rel (%p708) target = $region44
    $region43: #{block_forward.7} parent=5 // pred_region
      %s711 = ssub.s32 %s10, 2
      // Predicated region
      $region45: #{block_forward.7} parent=43 // pred_check
        %p712 = pneg %p133
      $region46: #{block_forward.7} parent=43 // pred_check_branch
        %714 = sbr.rel (%p712) target = $region48
      $region47: #{block_forward.7} parent=43 // pred_region
        %p715 = scmp.lt.s32.totalorder %s16, 1
        %s716 = scalar_select %p715, %s16, 1
        %s717 = smul.addr %s716, 36
        %s718 = smul.addr %s717, 8
        %s719 = scalar_lea.vmem %s4, %s718
      $region48: #{block_forward.7} parent=43 // pred_fallthru
        _
    $region44: #{block_forward.7} parent=5 // pred_fallthru
      _
  $region6: #{block_forward.7} parent=0 // loop_footer
    %s14 = sadd.s32 1, %s10
  $region7: #{block_forward.7} parent=0 // loop_footer_branch
    %9 = sbr.rel target = $region3
  $region8: #{block_forward.7} parent=0 // loop_exit
    _

// kernel: block_forward.6
$region0: #{block_forward.6}
  #allocation0 [shape = 'u32[]', space=smem, size = 0x4, offset = 0x4, fixed_abs, tag = 'smem constant byte address 0x4 - core index']
  #allocation1 [shape = 'u32[72,128]{1,0:T(1,128)}', space=vmem, size = 0x9000, scoped, tag = 'internal scratch']
  %s0 = inlined_call_operand.vmem [shape: bf16[2,288,128], index: 0, kind: input, shape index: {}]
  %s1 = inlined_call_operand.vmem [shape: f32[1,128], index: 1, kind: input, shape index: {}]
  %s2 = inlined_call_operand.vmem [shape: f32[1,128], index: 2, kind: input, shape index: {}]
  %s3 = inlined_call_operand.vmem [shape: f32[288,1], index: 3, kind: input, shape index: {}]
  %s4 = inlined_call_operand.vmem [shape: bf16[128,128], index: 4, kind: input, shape index: {}]
  %s5 = inlined_call_operand.vmem [shape: bf16[2,288,128], index: 5, kind: output, shape index: {0}]
  %s6 = inlined_call_operand.vmem [shape: f32[2,2,128], index: 6, kind: output, shape index: {1}]
  %7 = xla_tuple %s5, %s6
  %s8 = sld [smem:[#allocation0]]
  $region61: #{block_forward.6} parent=0
    _
  %s10 = ssub.s32 1, %s8
  %s11 = scalar_select 0, %s10, %s8
  loop: start=0, step=1, limit=4
  $region2: #{block_forward.6} parent=0 // loop_pre_header
    _
  $region3: #{block_forward.6} parent=0 // loop_header
    %s13 = sphi 0, %s17
    %p14 = scmp.ge.s32.totalorder %s13, 4
    %s23 = sphi 0, %s25
    %s26 = sphi 0, %s23
    %s27 = sphi 0, %s26
    %s43 = sphi 0, %s27
    %s47 = sphi 0, %s47
    %s49 = sphi 0, %s47
    %s50 = sphi 0, %s49
    %s64 = sphi 0, %s50
    %s68 = sphi 0, %s68
    %s70 = sphi 0, %s68
    %s71 = sphi 0, %s70
    %s85 = sphi 0, %s71
    %s89 = sphi 0, %s89
    %s91 = sphi 0, %s89
    %s92 = sphi 0, %s91
    %s106 = sphi 0, %s92
    %s110 = sphi 0, %s110
    %s112 = sphi 0, %s110
    %s113 = sphi 0, %s112
    %s127 = sphi 0, %s113
    %s133 = sphi 0, %s135
    %s136 = sphi 0, %s133
    %s137 = sphi 0, %s136
    %s153 = sphi 0, %s137
    %s159 = sphi 0, %s161
    %s162 = sphi 0, %s159
    %s163 = sphi 0, %s162
    %s179 = sphi 0, %s163
  $region4: #{block_forward.6} parent=0 // loop_header_branch
    %16 = sbr.rel (%p14) target = $region8
  $region5: #{block_forward.6} parent=0 // loop_body
    %s18 = ssub.s32 %s13, 1
    %s19 = ssub.s32 %s13, 2
    %s20 = sadd.s32 %s13, 1
    %s21 = ssub.s32 %s13, %s20
    %p22 = scmp.eq.s32.totalorder %s21, 0
    %s24 = sadd.s32 %s23, 1
    %s25 = scalar_select %p22, %s23, %s24
    %p28 = pneg %p22
    %p29 = scmp.eq.s32.totalorder %s13, 1
    %p30 = por %p28, %p29
    %p31 = scmp.ne.s32.totalorder %s23, %s26
    %p32 = scmp.eq.s32.totalorder %s13, 0
    %p33 = por %p31, %p32
    %p34 = scmp.ne.s32.totalorder %s23, %s26
    %p35 = scmp.eq.s32.totalorder %s18, 1
    %p36 = por %p34, %p35
    %p37 = scmp.ne.s32.totalorder %s26, %s27
    %p38 = scmp.eq.s32.totalorder %s18, 0
    %p39 = por %p37, %p38
    %p40 = scmp.ne.s32.totalorder %s26, %s27
    %p41 = scmp.eq.s32.totalorder %s19, 1
    %p42 = por %p40, %p41
    %p44 = scmp.ne.s32.totalorder %s27, %s43
    %p45 = scmp.eq.s32.totalorder %s19, 0
    %p46 = por %p44, %p45
    %s48 = sadd.s32 %s47, 1
    %p51 = scmp.eq.s32.totalorder %s13, 1
    %p52 = scmp.ne.s32.totalorder %s47, %s49
    %p53 = scmp.eq.s32.totalorder %s13, 0
    %p54 = por %p52, %p53
    %p55 = scmp.ne.s32.totalorder %s47, %s49
    %p56 = scmp.eq.s32.totalorder %s18, 1
    %p57 = por %p55, %p56
    %p58 = scmp.ne.s32.totalorder %s49, %s50
    %p59 = scmp.eq.s32.totalorder %s18, 0
    %p60 = por %p58, %p59
    %p61 = scmp.ne.s32.totalorder %s49, %s50
    %p62 = scmp.eq.s32.totalorder %s19, 1
    %p63 = por %p61, %p62
    %p65 = scmp.ne.s32.totalorder %s50, %s64
    %p66 = scmp.eq.s32.totalorder %s19, 0
    %p67 = por %p65, %p66
    %s69 = sadd.s32 %s68, 1
    %p72 = scmp.eq.s32.totalorder %s13, 1
    %p73 = scmp.ne.s32.totalorder %s68, %s70
    %p74 = scmp.eq.s32.totalorder %s13, 0
    %p75 = por %p73, %p74
    %p76 = scmp.ne.s32.totalorder %s68, %s70
    %p77 = scmp.eq.s32.totalorder %s18, 1
    %p78 = por %p76, %p77
    %p79 = scmp.ne.s32.totalorder %s70, %s71
    %p80 = scmp.eq.s32.totalorder %s18, 0
    %p81 = por %p79, %p80
    %p82 = scmp.ne.s32.totalorder %s70, %s71
    %p83 = scmp.eq.s32.totalorder %s19, 1
    %p84 = por %p82, %p83
    %p86 = scmp.ne.s32.totalorder %s71, %s85
    %p87 = scmp.eq.s32.totalorder %s19, 0
    %p88 = por %p86, %p87
    %s90 = sadd.s32 %s89, 1
    %p93 = scmp.eq.s32.totalorder %s13, 1
    %p94 = scmp.ne.s32.totalorder %s89, %s91
    %p95 = scmp.eq.s32.totalorder %s13, 0
    %p96 = por %p94, %p95
    %p97 = scmp.ne.s32.totalorder %s89, %s91
    %p98 = scmp.eq.s32.totalorder %s18, 1
    %p99 = por %p97, %p98
    %p100 = scmp.ne.s32.totalorder %s91, %s92
    %p101 = scmp.eq.s32.totalorder %s18, 0
    %p102 = por %p100, %p101
    %p103 = scmp.ne.s32.totalorder %s91, %s92
    %p104 = scmp.eq.s32.totalorder %s19, 1
    %p105 = por %p103, %p104
    %p107 = scmp.ne.s32.totalorder %s92, %s106
    %p108 = scmp.eq.s32.totalorder %s19, 0
    %p109 = por %p107, %p108
    %s111 = sadd.s32 %s110, 1
    %p114 = scmp.eq.s32.totalorder %s13, 1
    %p115 = scmp.ne.s32.totalorder %s110, %s112
    %p116 = scmp.eq.s32.totalorder %s13, 0
    %p117 = por %p115, %p116
    %p118 = scmp.ne.s32.totalorder %s110, %s112
    %p119 = scmp.eq.s32.totalorder %s18, 1
    %p120 = por %p118, %p119
    %p121 = scmp.ne.s32.totalorder %s112, %s113
    %p122 = scmp.eq.s32.totalorder %s18, 0
    %p123 = por %p121, %p122
    %p124 = scmp.ne.s32.totalorder %s112, %s113
    %p125 = scmp.eq.s32.totalorder %s19, 1
    %p126 = por %p124, %p125
    %p128 = scmp.ne.s32.totalorder %s113, %s127
    %p129 = scmp.eq.s32.totalorder %s19, 0
    %p130 = por %p128, %p129
    %s131 = ssub.s32 %s13, %s20
    %p132 = scmp.eq.s32.totalorder %s131, 0
    %s134 = sadd.s32 %s133, 1
    %s135 = scalar_select %p132, %s133, %s134
    %p138 = pneg %p132
    %p139 = scmp.eq.s32.totalorder %s13, 1
    %p140 = por %p138, %p139
    %p141 = scmp.ne.s32.totalorder %s133, %s136
    %p142 = scmp.eq.s32.totalorder %s13, 0
    %p143 = por %p141, %p142
    %p144 = scmp.ne.s32.totalorder %s133, %s136
    %p145 = scmp.eq.s32.totalorder %s18, 1
    %p146 = por %p144, %p145
    %p147 = scmp.ne.s32.totalorder %s136, %s137
    %p148 = scmp.eq.s32.totalorder %s18, 0
    %p149 = por %p147, %p148
    %p150 = scmp.ne.s32.totalorder %s136, %s137
    %p151 = scmp.eq.s32.totalorder %s19, 1
    %p152 = por %p150, %p151
    %p154 = scmp.ne.s32.totalorder %s137, %s153
    %p155 = scmp.eq.s32.totalorder %s19, 0
    %p156 = por %p154, %p155
    %s157 = ssub.s32 %s13, %s20
    %p158 = scmp.eq.s32.totalorder %s157, 0
    %s160 = sadd.s32 %s159, 1
    %s161 = scalar_select %p158, %s159, %s160
    %p164 = pneg %p158
    %p165 = scmp.eq.s32.totalorder %s13, 1
    %p166 = por %p164, %p165
    %p167 = scmp.ne.s32.totalorder %s159, %s162
    %p168 = scmp.eq.s32.totalorder %s13, 0
    %p169 = por %p167, %p168
    %p170 = scmp.ne.s32.totalorder %s159, %s162
    %p171 = scmp.eq.s32.totalorder %s18, 1
    %p172 = por %p170, %p171
    %p173 = scmp.ne.s32.totalorder %s162, %s163
    %p174 = scmp.eq.s32.totalorder %s18, 0
    %p175 = por %p173, %p174
    %p176 = scmp.ne.s32.totalorder %s162, %s163
    %p177 = scmp.eq.s32.totalorder %s19, 1
    %p178 = por %p176, %p177
    %p180 = scmp.ne.s32.totalorder %s163, %s179
    %p181 = scmp.eq.s32.totalorder %s19, 0
    %p182 = por %p180, %p181
    %p183 = scmp.le.s32.totalorder 1, %s13
    %p184 = scmp.lt.s32.totalorder %s13, 3
    %p185 = pnand %p183, %p184
    %p186 = pneg %p185
    // Predicated region
    $region9: #{block_forward.6} parent=5 // pred_check
      _
    $region10: #{block_forward.6} parent=5 // pred_check_branch
      %188 = sbr.rel (%p185) target = $region12
    $region11: #{block_forward.6} parent=5 // pred_region
      %s189 = ssub.s32 %s13, 1
      // Predicated region
      $region13: #{block_forward.6} parent=11 // pred_check
        %p190 = pneg %p60
      $region14: #{block_forward.6} parent=11 // pred_check_branch
        %192 = sbr.rel (%p190) target = $region16
      $region15: #{block_forward.6} parent=11 // pred_region
        _
      $region16: #{block_forward.6} parent=11 // pred_fallthru
        _
      // Predicated region
      $region17: #{block_forward.6} parent=11 // pred_check
        %p193 = pneg %p81
      $region18: #{block_forward.6} parent=11 // pred_check_branch
        %195 = sbr.rel (%p193) target = $region20
      $region19: #{block_forward.6} parent=11 // pred_region
        _
      $region20: #{block_forward.6} parent=11 // pred_fallthru
        _
      // Predicated region
      $region21: #{block_forward.6} parent=11 // pred_check
        %p196 = pneg %p102
      $region22: #{block_forward.6} parent=11 // pred_check_branch
        %198 = sbr.rel (%p196) target = $region24
      $region23: #{block_forward.6} parent=11 // pred_region
        _
      $region24: #{block_forward.6} parent=11 // pred_fallthru
        _
      // Predicated region
      $region25: #{block_forward.6} parent=11 // pred_check
        %p199 = pneg %p123
      $region26: #{block_forward.6} parent=11 // pred_check_branch
        %201 = sbr.rel (%p199) target = $region28
      $region27: #{block_forward.6} parent=11 // pred_region
        _
      $region28: #{block_forward.6} parent=11 // pred_fallthru
        _
    $region12: #{block_forward.6} parent=5 // pred_fallthru
      _
    %p202 = scmp.lt.s32.totalorder %s13, 2
    // Predicated region
    $region29: #{block_forward.6} parent=5 // pred_check
      %p203 = pneg %p202
    $region30: #{block_forward.6} parent=5 // pred_check_branch
      %205 = sbr.rel (%p203) target = $region32
    $region31: #{block_forward.6} parent=5 // pred_region
      // Predicated region
      $region33: #{block_forward.6} parent=31 // pred_check
        %p206 = pneg %p33
      $region34: #{block_forward.6} parent=31 // pred_check_branch
        %208 = sbr.rel (%p206) target = $region36
      $region35: #{block_forward.6} parent=31 // pred_region
        %p209 = scmp.lt.s32.totalorder %s13, 1
        %s210 = scalar_select %p209, %s13, 1
        %s211 = smul.addr %s210, 36
        %s212 = smul.addr %s211, 4
        %s213 = scalar_lea.vmem %s0, %s212
      $region36: #{block_forward.6} parent=31 // pred_fallthru
        _
    $region32: #{block_forward.6} parent=5 // pred_fallthru
      _
    %p214 = scmp.le.s32.totalorder 1, %s13
    %p215 = scmp.lt.s32.totalorder %s13, 3
    %p216 = pnand %p214, %p215
    %p217 = pneg %p216
    // Predicated region
    $region37: #{block_forward.6} parent=5 // pred_check
      _
    $region38: #{block_forward.6} parent=5 // pred_check_branch
      %219 = sbr.rel (%p216) target = $region40
    $region39: #{block_forward.6} parent=5 // pred_region
      %s220 = ssub.s32 %s13, 1
      %p221 = scmp.lt.s32.totalorder %s18, 1
      %s222 = scalar_select %p221, %s18, 1
      %s223 = smul.addr %s222, 36
      %s224 = smul.addr %s223, 4
      %s225 = scalar_lea.vmem %s0, %s224
      %p226 = pneg %p39
      %p227 = pneg %p36
      %p228 = pneg %p60
      %p229 = pneg %p57
      %p230 = pneg %p81
      %p231 = pneg %p78
      %p232 = pneg %p102
      %p233 = pneg %p99
      %p234 = pneg %p123
      %p235 = pneg %p120
      %p236 = pneg %p149
      %p237 = pneg %p146
      %p238 = scmp.lt.s32.totalorder %s18, 1
      %s239 = scalar_select %p238, %s18, 1
      %s240 = smul.addr %s239, 36
      %s241 = smul.addr %s240, 4
      %s242 = scalar_lea.vmem %s5, %s241
      %p243 = pneg %p175
      %p244 = pneg %p172
      %p245 = scmp.lt.s32.totalorder %s18, 1
      %s246 = scalar_select %p245, %s18, 1
      %s247 = smul.addr %s246, 2
      %s248 = scalar_lea.vmem %s6, %s247
      %p249 = scmp.lt.s32.totalorder %s18, 1
      %s250 = scalar_select %p249, %s18, 1
      %s251 = smul.addr %s250, 36
      %s252 = smul.addr %s251, 4
      %s253 = scalar_lea.vmem %s0, %s252
      %p254 = scmp.lt.s32.totalorder %s18, 1
      %s255 = scalar_select %p254, %s18, 1
      %s256 = smul.addr %s255, 36
      %s257 = smul.addr %s256, 4
      %s258 = scalar_lea.vmem %s5, %s257
      %p259 = scmp.lt.s32.totalorder %s18, 1
      %s260 = scalar_select %p259, %s18, 1
      %s261 = smul.addr %s260, 2
      %s262 = scalar_lea.vmem %s6, %s261
      %v263 = vld [vmem:[%s253] sm:$0xf]
      %v264 = vld [vmem:[%s253 + $0x4] sm:$0xf]
      %v265 = vld [vmem:[%s253 + $0x8] sm:$0xf]
      %v266 = vld [vmem:[%s253 + $0xc] sm:$0xf]
      %v267 = vld [vmem:[%s253 + $0x10] sm:$0xf]
      %v268 = vld [vmem:[%s253 + $0x14] sm:$0xf]
      %v269 = vld [vmem:[%s253 + $0x18] sm:$0xf]
      %v270 = vld [vmem:[%s253 + $0x1c] sm:$0xf]
      %v271 = vld [vmem:[%s253 + $0x20] sm:$0xf]
      %v272 = vld [vmem:[%s253 + $0x24] sm:$0xf]
      %v273 = vld [vmem:[%s253 + $0x28] sm:$0xf]
      %v274 = vld [vmem:[%s253 + $0x2c] sm:$0xf]
      %v275 = vld [vmem:[%s253 + $0x30] sm:$0xf]
      %v276 = vld [vmem:[%s253 + $0x34] sm:$0xf]
      %v277 = vld [vmem:[%s253 + $0x38] sm:$0xf]
      %v278 = vld [vmem:[%s253 + $0x3c] sm:$0xf]
      %v279 = vld [vmem:[%s253 + $0x40] sm:$0xf]
      %v280 = vld [vmem:[%s253 + $0x44] sm:$0xf]
      %v281 = vld [vmem:[%s253 + $0x48] sm:$0xf]
      %v282 = vld [vmem:[%s253 + $0x4c] sm:$0xf]
      %v283 = vld [vmem:[%s253 + $0x50] sm:$0xf]
      %v284 = vld [vmem:[%s253 + $0x54] sm:$0xf]
      %v285 = vld [vmem:[%s253 + $0x58] sm:$0xf]
      %v286 = vld [vmem:[%s253 + $0x5c] sm:$0xf]
      %v287 = vld [vmem:[%s253 + $0x60] sm:$0xf]
      %v288 = vld [vmem:[%s253 + $0x64] sm:$0xf]
      %v289 = vld [vmem:[%s253 + $0x68] sm:$0xf]
      %v290 = vld [vmem:[%s253 + $0x6c] sm:$0xf]
      %v291 = vld [vmem:[%s253 + $0x70] sm:$0xf]
      %v292 = vld [vmem:[%s253 + $0x74] sm:$0xf]
      %v293 = vld [vmem:[%s253 + $0x78] sm:$0xf]
      %v294 = vld [vmem:[%s253 + $0x7c] sm:$0xf]
      %v295 = vld [vmem:[%s253 + $0x80] sm:$0xf]
      %v296 = vld [vmem:[%s253 + $0x84] sm:$0xf]
      %v297 = vld [vmem:[%s253 + $0x88] sm:$0xf]
      %v298 = vld [vmem:[%s253 + $0x8c] sm:$0xf]
      %v299 = vunpack.c.l.bf16 %v263
      %v300 = vunpack.c.l.bf16 %v264
      %v301 = vunpack.c.l.bf16 %v265
      %v302 = vunpack.c.l.bf16 %v266
      %v303 = vunpack.c.l.bf16 %v267
      %v304 = vunpack.c.l.bf16 %v268
      %v305 = vunpack.c.l.bf16 %v269
      %v306 = vunpack.c.l.bf16 %v270
      %v307 = vunpack.c.l.bf16 %v271
      %v308 = vunpack.c.l.bf16 %v272
      %v309 = vunpack.c.l.bf16 %v273
      %v310 = vunpack.c.l.bf16 %v274
      %v311 = vunpack.c.l.bf16 %v275
      %v312 = vunpack.c.l.bf16 %v276
      %v313 = vunpack.c.l.bf16 %v277
      %v314 = vunpack.c.l.bf16 %v278
      %v315 = vunpack.c.l.bf16 %v279
      %v316 = vunpack.c.l.bf16 %v280
      %v317 = vunpack.c.l.bf16 %v281
      %v318 = vunpack.c.l.bf16 %v282
      %v319 = vunpack.c.l.bf16 %v283
      %v320 = vunpack.c.l.bf16 %v284
      %v321 = vunpack.c.l.bf16 %v285
      %v322 = vunpack.c.l.bf16 %v286
      %v323 = vunpack.c.l.bf16 %v287
      %v324 = vunpack.c.l.bf16 %v288
      %v325 = vunpack.c.l.bf16 %v289
      %v326 = vunpack.c.l.bf16 %v290
      %v327 = vunpack.c.l.bf16 %v291
      %v328 = vunpack.c.l.bf16 %v292
      %v329 = vunpack.c.l.bf16 %v293
      %v330 = vunpack.c.l.bf16 %v294
      %v331 = vunpack.c.l.bf16 %v295
      %v332 = vunpack.c.l.bf16 %v296
      %v333 = vunpack.c.l.bf16 %v297
      %v334 = vunpack.c.l.bf16 %v298
      %v335 = vld [vmem:[%s1] sm:$0x1]
      %v337 = vperm.slane %v335, 0
      %v339 = vmul.f32 %v299, %v337
      %v340 = vmul.f32 %v300, %v337
      %v341 = vmul.f32 %v301, %v337
      %v342 = vmul.f32 %v302, %v337
      %v343 = vmul.f32 %v303, %v337
      %v344 = vmul.f32 %v304, %v337
      %v345 = vmul.f32 %v305, %v337
      %v346 = vmul.f32 %v306, %v337
      %v347 = vmul.f32 %v307, %v337
      %v348 = vmul.f32 %v308, %v337
      %v349 = vmul.f32 %v309, %v337
      %v350 = vmul.f32 %v310, %v337
      %v351 = vmul.f32 %v311, %v337
      %v352 = vmul.f32 %v312, %v337
      %v353 = vmul.f32 %v313, %v337
      %v354 = vmul.f32 %v314, %v337
      %v355 = vmul.f32 %v315, %v337
      %v356 = vmul.f32 %v316, %v337
      %v357 = vmul.f32 %v317, %v337
      %v358 = vmul.f32 %v318, %v337
      %v359 = vmul.f32 %v319, %v337
      %v360 = vmul.f32 %v320, %v337
      %v361 = vmul.f32 %v321, %v337
      %v362 = vmul.f32 %v322, %v337
      %v363 = vmul.f32 %v323, %v337
      %v364 = vmul.f32 %v324, %v337
      %v365 = vmul.f32 %v325, %v337
      %v366 = vmul.f32 %v326, %v337
      %v367 = vmul.f32 %v327, %v337
      %v368 = vmul.f32 %v328, %v337
      %v369 = vmul.f32 %v329, %v337
      %v370 = vmul.f32 %v330, %v337
      %v371 = vmul.f32 %v331, %v337
      %v372 = vmul.f32 %v332, %v337
      %v373 = vmul.f32 %v333, %v337
      %v374 = vmul.f32 %v334, %v337
      %v375 = vld [vmem:[%s2] sm:$0x1]
      %v377 = vperm.slane %v375, 0
      %v379 = vadd.f32 %v339, %v377
      %v380 = vadd.f32 %v340, %v377
      %v381 = vadd.f32 %v341, %v377
      %v382 = vadd.f32 %v342, %v377
      %v383 = vadd.f32 %v343, %v377
      %v384 = vadd.f32 %v344, %v377
      %v385 = vadd.f32 %v345, %v377
      %v386 = vadd.f32 %v346, %v377
      %v387 = vadd.f32 %v347, %v377
      %v388 = vadd.f32 %v348, %v377
      %v389 = vadd.f32 %v349, %v377
      %v390 = vadd.f32 %v350, %v377
      %v391 = vadd.f32 %v351, %v377
      %v392 = vadd.f32 %v352, %v377
      %v393 = vadd.f32 %v353, %v377
      %v394 = vadd.f32 %v354, %v377
      %v395 = vadd.f32 %v355, %v377
      %v396 = vadd.f32 %v356, %v377
      %v397 = vadd.f32 %v357, %v377
      %v398 = vadd.f32 %v358, %v377
      %v399 = vadd.f32 %v359, %v377
      %v400 = vadd.f32 %v360, %v377
      %v401 = vadd.f32 %v361, %v377
      %v402 = vadd.f32 %v362, %v377
      %v403 = vadd.f32 %v363, %v377
      %v404 = vadd.f32 %v364, %v377
      %v405 = vadd.f32 %v365, %v377
      %v406 = vadd.f32 %v366, %v377
      %v407 = vadd.f32 %v367, %v377
      %v408 = vadd.f32 %v368, %v377
      %v409 = vadd.f32 %v369, %v377
      %v410 = vadd.f32 %v370, %v377
      %v411 = vadd.f32 %v371, %v377
      %v412 = vadd.f32 %v372, %v377
      %v413 = vadd.f32 %v373, %v377
      %v414 = vadd.f32 %v374, %v377
      %v415 = vmax.f32 %v379, 0.0
      %v416 = vmax.f32 %v380, 0.0
      %v417 = vmax.f32 %v381, 0.0
      %v418 = vmax.f32 %v382, 0.0
      %v419 = vmax.f32 %v383, 0.0
      %v420 = vmax.f32 %v384, 0.0
      %v421 = vmax.f32 %v385, 0.0
      %v422 = vmax.f32 %v386, 0.0
      %v423 = vmax.f32 %v387, 0.0
      %v424 = vmax.f32 %v388, 0.0
      %v425 = vmax.f32 %v389, 0.0
      %v426 = vmax.f32 %v390, 0.0
      %v427 = vmax.f32 %v391, 0.0
      %v428 = vmax.f32 %v392, 0.0
      %v429 = vmax.f32 %v393, 0.0
      %v430 = vmax.f32 %v394, 0.0
      %v431 = vmax.f32 %v395, 0.0
      %v432 = vmax.f32 %v396, 0.0
      %v433 = vmax.f32 %v397, 0.0
      %v434 = vmax.f32 %v398, 0.0
      %v435 = vmax.f32 %v399, 0.0
      %v436 = vmax.f32 %v400, 0.0
      %v437 = vmax.f32 %v401, 0.0
      %v438 = vmax.f32 %v402, 0.0
      %v439 = vmax.f32 %v403, 0.0
      %v440 = vmax.f32 %v404, 0.0
      %v441 = vmax.f32 %v405, 0.0
      %v442 = vmax.f32 %v406, 0.0
      %v443 = vmax.f32 %v407, 0.0
      %v444 = vmax.f32 %v408, 0.0
      %v445 = vmax.f32 %v409, 0.0
      %v446 = vmax.f32 %v410, 0.0
      %v447 = vmax.f32 %v411, 0.0
      %v448 = vmax.f32 %v412, 0.0
      %v449 = vmax.f32 %v413, 0.0
      %v450 = vmax.f32 %v414, 0.0
      %v451 = vld [vmem:[%s3] sm:$0xff]
      %v452 = vld [vmem:[%s3 + $0x8] sm:$0xff]
      %v453 = vld [vmem:[%s3 + $0x10] sm:$0xff]
      %v454 = vld [vmem:[%s3 + $0x18] sm:$0xff]
      %v455 = vld [vmem:[%s3 + $0x20] sm:$0xff]
      %v456 = vld [vmem:[%s3 + $0x28] sm:$0xff]
      %v457 = vld [vmem:[%s3 + $0x30] sm:$0xff]
      %v458 = vld [vmem:[%s3 + $0x38] sm:$0xff]
      %v459 = vld [vmem:[%s3 + $0x40] sm:$0xff]
      %v460 = vld [vmem:[%s3 + $0x48] sm:$0xff]
      %v461 = vld [vmem:[%s3 + $0x50] sm:$0xff]
      %v462 = vld [vmem:[%s3 + $0x58] sm:$0xff]
      %v463 = vld [vmem:[%s3 + $0x60] sm:$0xff]
      %v464 = vld [vmem:[%s3 + $0x68] sm:$0xff]
      %v465 = vld [vmem:[%s3 + $0x70] sm:$0xff]
      %v466 = vld [vmem:[%s3 + $0x78] sm:$0xff]
      %v467 = vld [vmem:[%s3 + $0x80] sm:$0xff]
      %v468 = vld [vmem:[%s3 + $0x88] sm:$0xff]
      %v469 = vld [vmem:[%s3 + $0x90] sm:$0xff]
      %v470 = vld [vmem:[%s3 + $0x98] sm:$0xff]
      %v471 = vld [vmem:[%s3 + $0xa0] sm:$0xff]
      %v472 = vld [vmem:[%s3 + $0xa8] sm:$0xff]
      %v473 = vld [vmem:[%s3 + $0xb0] sm:$0xff]
      %v474 = vld [vmem:[%s3 + $0xb8] sm:$0xff]
      %v475 = vld [vmem:[%s3 + $0xc0] sm:$0xff]
      %v476 = vld [vmem:[%s3 + $0xc8] sm:$0xff]
      %v477 = vld [vmem:[%s3 + $0xd0] sm:$0xff]
      %v478 = vld [vmem:[%s3 + $0xd8] sm:$0xff]
      %v479 = vld [vmem:[%s3 + $0xe0] sm:$0xff]
      %v480 = vld [vmem:[%s3 + $0xe8] sm:$0xff]
      %v481 = vld [vmem:[%s3 + $0xf0] sm:$0xff]
      %v482 = vld [vmem:[%s3 + $0xf8] sm:$0xff]
      %v483 = vld [vmem:[%s3 + $0x100] sm:$0xff]
      %v484 = vld [vmem:[%s3 + $0x108] sm:$0xff]
      %v485 = vld [vmem:[%s3 + $0x110] sm:$0xff]
      %v486 = vld [vmem:[%s3 + $0x118] sm:$0xff]
      %488 = vset.pattern.permute.xlu0 0
      %489 = vperm.xlu0 %488, %v451
      %v490 = vpop.permute.xlu0 %489
      %493 = vset.pattern.permute.xlu0 0
      %494 = vperm.xlu0 %493, %v452
      %v495 = vpop.permute.xlu0 %494
      %498 = vset.pattern.permute.xlu0 0
      %499 = vperm.xlu0 %498, %v453
      %v500 = vpop.permute.xlu0 %499
      %503 = vset.pattern.permute.xlu0 0
      %504 = vperm.xlu0 %503, %v454
      %v505 = vpop.permute.xlu0 %504
      %508 = vset.pattern.permute.xlu0 0
      %509 = vperm.xlu0 %508, %v455
      %v510 = vpop.permute.xlu0 %509
      %513 = vset.pattern.permute.xlu0 0
      %514 = vperm.xlu0 %513, %v456
      %v515 = vpop.permute.xlu0 %514
      %518 = vset.pattern.permute.xlu0 0
      %519 = vperm.xlu0 %518, %v457
      %v520 = vpop.permute.xlu0 %519
      %523 = vset.pattern.permute.xlu0 0
      %524 = vperm.xlu0 %523, %v458
      %v525 = vpop.permute.xlu0 %524
      %528 = vset.pattern.permute.xlu0 0
      %529 = vperm.xlu0 %528, %v459
      %v530 = vpop.permute.xlu0 %529
      %533 = vset.pattern.permute.xlu0 0
      %534 = vperm.xlu0 %533, %v460
      %v535 = vpop.permute.xlu0 %534
      %538 = vset.pattern.permute.xlu0 0
      %539 = vperm.xlu0 %538, %v461
      %v540 = vpop.permute.xlu0 %539
      %543 = vset.pattern.permute.xlu0 0
      %544 = vperm.xlu0 %543, %v462
      %v545 = vpop.permute.xlu0 %544
      %548 = vset.pattern.permute.xlu0 0
      %549 = vperm.xlu0 %548, %v463
      %v550 = vpop.permute.xlu0 %549
      %553 = vset.pattern.permute.xlu0 0
      %554 = vperm.xlu0 %553, %v464
      %v555 = vpop.permute.xlu0 %554
      %558 = vset.pattern.permute.xlu0 0
      %559 = vperm.xlu0 %558, %v465
      %v560 = vpop.permute.xlu0 %559
      %563 = vset.pattern.permute.xlu0 0
      %564 = vperm.xlu0 %563, %v466
      %v565 = vpop.permute.xlu0 %564
      %568 = vset.pattern.permute.xlu0 0
      %569 = vperm.xlu0 %568, %v467
      %v570 = vpop.permute.xlu0 %569
      %573 = vset.pattern.permute.xlu0 0
      %574 = vperm.xlu0 %573, %v468
      %v575 = vpop.permute.xlu0 %574
      %578 = vset.pattern.permute.xlu0 0
      %579 = vperm.xlu0 %578, %v469
      %v580 = vpop.permute.xlu0 %579
      %583 = vset.pattern.permute.xlu0 0
      %584 = vperm.xlu0 %583, %v470
      %v585 = vpop.permute.xlu0 %584
      %588 = vset.pattern.permute.xlu0 0
      %589 = vperm.xlu0 %588, %v471
      %v590 = vpop.permute.xlu0 %589
      %593 = vset.pattern.permute.xlu0 0
      %594 = vperm.xlu0 %593, %v472
      %v595 = vpop.permute.xlu0 %594
      %598 = vset.pattern.permute.xlu0 0
      %599 = vperm.xlu0 %598, %v473
      %v600 = vpop.permute.xlu0 %599
      %603 = vset.pattern.permute.xlu0 0
      %604 = vperm.xlu0 %603, %v474
      %v605 = vpop.permute.xlu0 %604
      %608 = vset.pattern.permute.xlu0 0
      %609 = vperm.xlu0 %608, %v475
      %v610 = vpop.permute.xlu0 %609
      %613 = vset.pattern.permute.xlu0 0
      %614 = vperm.xlu0 %613, %v476
      %v615 = vpop.permute.xlu0 %614
      %618 = vset.pattern.permute.xlu0 0
      %619 = vperm.xlu0 %618, %v477
      %v620 = vpop.permute.xlu0 %619
      %623 = vset.pattern.permute.xlu0 0
      %624 = vperm.xlu0 %623, %v478
      %v625 = vpop.permute.xlu0 %624
      %628 = vset.pattern.permute.xlu0 0
      %629 = vperm.xlu0 %628, %v479
      %v630 = vpop.permute.xlu0 %629
      %633 = vset.pattern.permute.xlu0 0
      %634 = vperm.xlu0 %633, %v480
      %v635 = vpop.permute.xlu0 %634
      %638 = vset.pattern.permute.xlu0 0
      %639 = vperm.xlu0 %638, %v481
      %v640 = vpop.permute.xlu0 %639
      %643 = vset.pattern.permute.xlu0 0
      %644 = vperm.xlu0 %643, %v482
      %v645 = vpop.permute.xlu0 %644
      %648 = vset.pattern.permute.xlu0 0
      %649 = vperm.xlu0 %648, %v483
      %v650 = vpop.permute.xlu0 %649
      %653 = vset.pattern.permute.xlu0 0
      %654 = vperm.xlu0 %653, %v484
      %v655 = vpop.permute.xlu0 %654
      %658 = vset.pattern.permute.xlu0 0
      %659 = vperm.xlu0 %658, %v485
      %v660 = vpop.permute.xlu0 %659
      %663 = vset.pattern.permute.xlu0 0
      %664 = vperm.xlu0 %663, %v486
      %v665 = vpop.permute.xlu0 %664
      %v667 = vmul.f32 %v415, %v490
      %v668 = vmul.f32 %v416, %v495
      %v669 = vmul.f32 %v417, %v500
      %v670 = vmul.f32 %v418, %v505
      %v671 = vmul.f32 %v419, %v510
      %v672 = vmul.f32 %v420, %v515
      %v673 = vmul.f32 %v421, %v520
      %v674 = vmul.f32 %v422, %v525
      %v675 = vmul.f32 %v423, %v530
      %v676 = vmul.f32 %v424, %v535
      %v677 = vmul.f32 %v425, %v540
      %v678 = vmul.f32 %v426, %v545
      %v679 = vmul.f32 %v427, %v550
      %v680 = vmul.f32 %v428, %v555
      %v681 = vmul.f32 %v429, %v560
      %v682 = vmul.f32 %v430, %v565
      %v683 = vmul.f32 %v431, %v570
      %v684 = vmul.f32 %v432, %v575
      %v685 = vmul.f32 %v433, %v580
      %v686 = vmul.f32 %v434, %v585
      %v687 = vmul.f32 %v435, %v590
      %v688 = vmul.f32 %v436, %v595
      %v689 = vmul.f32 %v437, %v600
      %v690 = vmul.f32 %v438, %v605
      %v691 = vmul.f32 %v439, %v610
      %v692 = vmul.f32 %v440, %v615
      %v693 = vmul.f32 %v441, %v620
      %v694 = vmul.f32 %v442, %v625
      %v695 = vmul.f32 %v443, %v630
      %v696 = vmul.f32 %v444, %v635
      %v697 = vmul.f32 %v445, %v640
      %v698 = vmul.f32 %v446, %v645
      %v699 = vmul.f32 %v447, %v650
      %v700 = vmul.f32 %v448, %v655
      %v701 = vmul.f32 %v449, %v660
      %v702 = vmul.f32 %v450, %v665
      %v703 = vpack.c.bf16 %v668, %v667
      %v704 = vpack.c.bf16 %v670, %v669
      %v705 = vpack.c.bf16 %v672, %v671
      %v706 = vpack.c.bf16 %v674, %v673
      %v707 = vpack.c.bf16 %v676, %v675
      %v708 = vpack.c.bf16 %v678, %v677
      %v709 = vpack.c.bf16 %v680, %v679
      %v710 = vpack.c.bf16 %v682, %v681
      %v711 = vpack.c.bf16 %v684, %v683
      %v712 = vpack.c.bf16 %v686, %v685
      %v713 = vpack.c.bf16 %v688, %v687
      %v714 = vpack.c.bf16 %v690, %v689
      %v715 = vpack.c.bf16 %v692, %v691
      %v716 = vpack.c.bf16 %v694, %v693
      %v717 = vpack.c.bf16 %v696, %v695
      %v718 = vpack.c.bf16 %v698, %v697
      %v719 = vpack.c.bf16 %v700, %v699
      %v720 = vpack.c.bf16 %v702, %v701
      %v721 = vld [vmem:[%s4] sm:$0xf]
      %v722 = vld [vmem:[%s4 + $0x4] sm:$0xf]
      %v723 = vld [vmem:[%s4 + $0x8] sm:$0xf]
      %v724 = vld [vmem:[%s4 + $0xc] sm:$0xf]
      %v725 = vld [vmem:[%s4 + $0x10] sm:$0xf]
      %v726 = vld [vmem:[%s4 + $0x14] sm:$0xf]
      %v727 = vld [vmem:[%s4 + $0x18] sm:$0xf]
      %v728 = vld [vmem:[%s4 + $0x1c] sm:$0xf]
      %v729 = vld [vmem:[%s4 + $0x20] sm:$0xf]
      %v730 = vld [vmem:[%s4 + $0x24] sm:$0xf]
      %v731 = vld [vmem:[%s4 + $0x28] sm:$0xf]
      %v732 = vld [vmem:[%s4 + $0x2c] sm:$0xf]
      %v733 = vld [vmem:[%s4 + $0x30] sm:$0xf]
      %v734 = vld [vmem:[%s4 + $0x34] sm:$0xf]
      %v735 = vld [vmem:[%s4 + $0x38] sm:$0xf]
      %v736 = vld [vmem:[%s4 + $0x3c] sm:$0xf]
      %v753 = vunpack.c.l.b16 %v721
      %v754 = vunpack.c.l.b16 %v722
      %v755 = vunpack.c.l.b16 %v723
      %v756 = vunpack.c.l.b16 %v724
      %v757 = vunpack.c.l.b16 %v725
      %v758 = vunpack.c.l.b16 %v726
      %v759 = vunpack.c.l.b16 %v727
      %v760 = vunpack.c.l.b16 %v728
      %v761 = vunpack.c.l.b16 %v729
      %v762 = vunpack.c.l.b16 %v730
      %v763 = vunpack.c.l.b16 %v731
      %v764 = vunpack.c.l.b16 %v732
      %v765 = vunpack.c.l.b16 %v733
      %v766 = vunpack.c.l.b16 %v734
      %v767 = vunpack.c.l.b16 %v735
      %v768 = vunpack.c.l.b16 %v736
      %v769 = vpack.c.b16 %v754, %v753
      %v770 = vpack.c.b16 %v756, %v755
      %v771 = vpack.c.b16 %v758, %v757
      %v772 = vpack.c.b16 %v760, %v759
      %v773 = vpack.c.b16 %v762, %v761
      %v774 = vpack.c.b16 %v764, %v763
      %v775 = vpack.c.b16 %v766, %v765
      %v776 = vpack.c.b16 %v768, %v767
      %785 = vmatpush.bf16.msra.mxu0 %v776
      %786 = vmatpush.bf16.msra.mxu0 %v775
      %787 = vmatpush.bf16.msra.mxu0 %v774
      %788 = vmatpush.bf16.msra.mxu0 %v773
      %789 = vmatpush.bf16.msra.mxu0 %v772
      %790 = vmatpush.bf16.msra.mxu0 %v771
      %791 = vmatpush.bf16.msra.mxu0 %v770
      %792 = vmatpush.bf16.msra.mxu0 %v769
      %793 = vmatmul.bf16.gmra.mxu0 %v703
      %v794 = vpop.f32.mrf.mxu0
      %v795 = vadd.f32 0.0, %v794
      %v796 = vpop.f32.mrf.mxu0
      %v797 = vadd.f32 0.0, %v796
      %798 = vmatmul.bf16.gmra.mxu0 %v704
      %v799 = vpop.f32.mrf.mxu0
      %v800 = vadd.f32 0.0, %v799
      %v801 = vpop.f32.mrf.mxu0
      %v802 = vadd.f32 0.0, %v801
      %803 = vmatmul.bf16.gmra.mxu0 %v705
      %v804 = vpop.f32.mrf.mxu0
      %v805 = vadd.f32 0.0, %v804
      %v806 = vpop.f32.mrf.mxu0
      %v807 = vadd.f32 0.0, %v806
      %808 = vmatmul.bf16.gmra.mxu0 %v706
      %v809 = vpop.f32.mrf.mxu0
      %v810 = vadd.f32 0.0, %v809
      %v811 = vpop.f32.mrf.mxu0
      %v812 = vadd.f32 0.0, %v811
      %813 = vmatmul.bf16.gmra.mxu0 %v707
      %v814 = vpop.f32.mrf.mxu0
      %v815 = vadd.f32 0.0, %v814
      %v816 = vpop.f32.mrf.mxu0
      %v817 = vadd.f32 0.0, %v816
      %818 = vmatmul.bf16.gmra.mxu0 %v708
      %v819 = vpop.f32.mrf.mxu0
      %v820 = vadd.f32 0.0, %v819
      %v821 = vpop.f32.mrf.mxu0
      %v822 = vadd.f32 0.0, %v821
      %823 = vmatmul.bf16.gmra.mxu0 %v709
      %v824 = vpop.f32.mrf.mxu0
      %v825 = vadd.f32 0.0, %v824
      %v826 = vpop.f32.mrf.mxu0
      %v827 = vadd.f32 0.0, %v826
      %828 = vmatmul.bf16.gmra.mxu0 %v710
      %v829 = vpop.f32.mrf.mxu0
      %v830 = vadd.f32 0.0, %v829
      %v831 = vpop.f32.mrf.mxu0
      %v832 = vadd.f32 0.0, %v831
      %833 = vmatmul.bf16.gmra.mxu0 %v711
      %v834 = vpop.f32.mrf.mxu0
      %v835 = vadd.f32 0.0, %v834
      %v836 = vpop.f32.mrf.mxu0
      %v837 = vadd.f32 0.0, %v836
      %838 = vmatmul.bf16.gmra.mxu0 %v712
      %v839 = vpop.f32.mrf.mxu0
      %v840 = vadd.f32 0.0, %v839
      %v841 = vpop.f32.mrf.mxu0
      %v842 = vadd.f32 0.0, %v841
      %843 = vmatmul.bf16.gmra.mxu0 %v713
      %v844 = vpop.f32.mrf.mxu0
      %v845 = vadd.f32 0.0, %v844
      %v846 = vpop.f32.mrf.mxu0
      %v847 = vadd.f32 0.0, %v846
      %848 = vmatmul.bf16.gmra.mxu0 %v714
      %v849 = vpop.f32.mrf.mxu0
      %v850 = vadd.f32 0.0, %v849
      %v851 = vpop.f32.mrf.mxu0
      %v852 = vadd.f32 0.0, %v851
      %853 = vmatmul.bf16.gmra.mxu0 %v715
      %v854 = vpop.f32.mrf.mxu0
      %v855 = vadd.f32 0.0, %v854
      %v856 = vpop.f32.mrf.mxu0
      %v857 = vadd.f32 0.0, %v856
      %858 = vmatmul.bf16.gmra.mxu0 %v716
      %v859 = vpop.f32.mrf.mxu0
      %v860 = vadd.f32 0.0, %v859
      %v861 = vpop.f32.mrf.mxu0
      %v862 = vadd.f32 0.0, %v861
      %863 = vmatmul.bf16.gmra.mxu0 %v717
      %v864 = vpop.f32.mrf.mxu0
      %v865 = vadd.f32 0.0, %v864
      %v866 = vpop.f32.mrf.mxu0
      %v867 = vadd.f32 0.0, %v866
      %868 = vmatmul.bf16.gmra.mxu0 %v718
      %v869 = vpop.f32.mrf.mxu0
      %v870 = vadd.f32 0.0, %v869
      %v871 = vpop.f32.mrf.mxu0
      %v872 = vadd.f32 0.0, %v871
      %873 = vmatmul.bf16.gmra.mxu0 %v719
      %v874 = vpop.f32.mrf.mxu0
      %v875 = vadd.f32 0.0, %v874
      %v876 = vpop.f32.mrf.mxu0
      %v877 = vadd.f32 0.0, %v876
      %878 = vmatmul.bf16.gmra.mxu0 %v720
      %v879 = vpop.f32.mrf.mxu0
      %v880 = vadd.f32 0.0, %v879
      %v881 = vpop.f32.mrf.mxu0
      %v882 = vadd.f32 0.0, %v881
      %883 = vdwg.mxu0
      %v884 = vpack.c.bf16 %v795, %v795
      %v885 = vpack.c.bf16 %v797, %v797
      %v886 = vpack.c.bf16 %v800, %v800
      %v887 = vpack.c.bf16 %v802, %v802
      %v888 = vpack.c.bf16 %v805, %v805
      %v889 = vpack.c.bf16 %v807, %v807
      %v890 = vpack.c.bf16 %v810, %v810
      %v891 = vpack.c.bf16 %v812, %v812
      %v892 = vpack.c.bf16 %v815, %v815
      %v893 = vpack.c.bf16 %v817, %v817
      %v894 = vpack.c.bf16 %v820, %v820
      %v895 = vpack.c.bf16 %v822, %v822
      %v896 = vpack.c.bf16 %v825, %v825
      %v897 = vpack.c.bf16 %v827, %v827
      %v898 = vpack.c.bf16 %v830, %v830
      %v899 = vpack.c.bf16 %v832, %v832
      %v900 = vpack.c.bf16 %v835, %v835
      %v901 = vpack.c.bf16 %v837, %v837
      %v902 = vpack.c.bf16 %v840, %v840
      %v903 = vpack.c.bf16 %v842, %v842
      %v904 = vpack.c.bf16 %v845, %v845
      %v905 = vpack.c.bf16 %v847, %v847
      %v906 = vpack.c.bf16 %v850, %v850
      %v907 = vpack.c.bf16 %v852, %v852
      %v908 = vpack.c.bf16 %v855, %v855
      %v909 = vpack.c.bf16 %v857, %v857
      %v910 = vpack.c.bf16 %v860, %v860
      %v911 = vpack.c.bf16 %v862, %v862
      %v912 = vpack.c.bf16 %v865, %v865
      %v913 = vpack.c.bf16 %v867, %v867
      %v914 = vpack.c.bf16 %v870, %v870
      %v915 = vpack.c.bf16 %v872, %v872
      %v916 = vpack.c.bf16 %v875, %v875
      %v917 = vpack.c.bf16 %v877, %v877
      %v918 = vpack.c.bf16 %v880, %v880
      %v919 = vpack.c.bf16 %v882, %v882
      %920 = vst [vmem:[%s258] sm:$0xf] %v884
      %921 = vst [vmem:[%s258 + $0x4] sm:$0xf] %v885
      %922 = vst [vmem:[%s258 + $0x8] sm:$0xf] %v886
      %923 = vst [vmem:[%s258 + $0xc] sm:$0xf] %v887
      %924 = vst [vmem:[%s258 + $0x10] sm:$0xf] %v888
      %925 = vst [vmem:[%s258 + $0x14] sm:$0xf] %v889
      %926 = vst [vmem:[%s258 + $0x18] sm:$0xf] %v890
      %927 = vst [vmem:[%s258 + $0x1c] sm:$0xf] %v891
      %928 = vst [vmem:[%s258 + $0x20] sm:$0xf] %v892
      %929 = vst [vmem:[%s258 + $0x24] sm:$0xf] %v893
      %930 = vst [vmem:[%s258 + $0x28] sm:$0xf] %v894
      %931 = vst [vmem:[%s258 + $0x2c] sm:$0xf] %v895
      %932 = vst [vmem:[%s258 + $0x30] sm:$0xf] %v896
      %933 = vst [vmem:[%s258 + $0x34] sm:$0xf] %v897
      %934 = vst [vmem:[%s258 + $0x38] sm:$0xf] %v898
      %935 = vst [vmem:[%s258 + $0x3c] sm:$0xf] %v899
      %936 = vst [vmem:[%s258 + $0x40] sm:$0xf] %v900
      %937 = vst [vmem:[%s258 + $0x44] sm:$0xf] %v901
      %938 = vst [vmem:[%s258 + $0x48] sm:$0xf] %v902
      %939 = vst [vmem:[%s258 + $0x4c] sm:$0xf] %v903
      %940 = vst [vmem:[%s258 + $0x50] sm:$0xf] %v904
      %941 = vst [vmem:[%s258 + $0x54] sm:$0xf] %v905
      %942 = vst [vmem:[%s258 + $0x58] sm:$0xf] %v906
      %943 = vst [vmem:[%s258 + $0x5c] sm:$0xf] %v907
      %944 = vst [vmem:[%s258 + $0x60] sm:$0xf] %v908
      %945 = vst [vmem:[%s258 + $0x64] sm:$0xf] %v909
      %946 = vst [vmem:[%s258 + $0x68] sm:$0xf] %v910
      %947 = vst [vmem:[%s258 + $0x6c] sm:$0xf] %v911
      %948 = vst [vmem:[%s258 + $0x70] sm:$0xf] %v912
      %949 = vst [vmem:[%s258 + $0x74] sm:$0xf] %v913
      %950 = vst [vmem:[%s258 + $0x78] sm:$0xf] %v914
      %951 = vst [vmem:[%s258 + $0x7c] sm:$0xf] %v915
      %952 = vst [vmem:[%s258 + $0x80] sm:$0xf] %v916
      %953 = vst [vmem:[%s258 + $0x84] sm:$0xf] %v917
      %954 = vst [vmem:[%s258 + $0x88] sm:$0xf] %v918
      %955 = vst [vmem:[%s258 + $0x8c] sm:$0xf] %v919
      %v956 = vadd.f32 %v795, %v797
      %v957 = vadd.f32 %v956, %v800
      %v958 = vadd.f32 %v957, %v802
      %v959 = vadd.f32 %v958, %v805
      %v960 = vadd.f32 %v959, %v807
      %v961 = vadd.f32 %v960, %v810
      %v962 = vadd.f32 %v961, %v812
      %v963 = vadd.f32 %v962, %v815
      %v964 = vadd.f32 %v963, %v817
      %v965 = vadd.f32 %v964, %v820
      %v966 = vadd.f32 %v965, %v822
      %v967 = vadd.f32 %v966, %v825
      %v968 = vadd.f32 %v967, %v827
      %v969 = vadd.f32 %v968, %v830
      %v970 = vadd.f32 %v969, %v832
      %v971 = vadd.f32 %v970, %v835
      %v972 = vadd.f32 %v971, %v837
      %v973 = vadd.f32 %v972, %v840
      %v974 = vadd.f32 %v973, %v842
      %v975 = vadd.f32 %v974, %v845
      %v976 = vadd.f32 %v975, %v847
      %v977 = vadd.f32 %v976, %v850
      %v978 = vadd.f32 %v977, %v852
      %v979 = vadd.f32 %v978, %v855
      %v980 = vadd.f32 %v979, %v857
      %v981 = vadd.f32 %v980, %v860
      %v982 = vadd.f32 %v981, %v862
      %v983 = vadd.f32 %v982, %v865
      %v984 = vadd.f32 %v983, %v867
      %v985 = vadd.f32 %v984, %v870
      %v986 = vadd.f32 %v985, %v872
      %v987 = vadd.f32 %v986, %v875
      %v988 = vadd.f32 %v987, %v877
      %v989 = vadd.f32 %v988, %v880
      %v990 = vadd.f32 %v989, %v882
      %v991 = vrot.slane %v990, 4
      %v992 = vadd.f32 %v990, %v991
      %v993 = vrot.slane %v992, 2
      %v994 = vadd.f32 %v992, %v993
      %v995 = vrot.slane %v994, 1
      %v996 = vadd.f32 %v994, %v995
      %v997 = vmul.f32 %v795, %v795
      %v998 = vmul.f32 %v797, %v797
      %v999 = vmul.f32 %v800, %v800
      %v1000 = vmul.f32 %v802, %v802
      %v1001 = vmul.f32 %v805, %v805
      %v1002 = vmul.f32 %v807, %v807
      %v1003 = vmul.f32 %v810, %v810
      %v1004 = vmul.f32 %v812, %v812
      %v1005 = vmul.f32 %v815, %v815
      %v1006 = vmul.f32 %v817, %v817
      %v1007 = vmul.f32 %v820, %v820
      %v1008 = vmul.f32 %v822, %v822
      %v1009 = vmul.f32 %v825, %v825
      %v1010 = vmul.f32 %v827, %v827
      %v1011 = vmul.f32 %v830, %v830
      %v1012 = vmul.f32 %v832, %v832
      %v1013 = vmul.f32 %v835, %v835
      %v1014 = vmul.f32 %v837, %v837
      %v1015 = vmul.f32 %v840, %v840
      %v1016 = vmul.f32 %v842, %v842
      %v1017 = vmul.f32 %v845, %v845
      %v1018 = vmul.f32 %v847, %v847
      %v1019 = vmul.f32 %v850, %v850
      %v1020 = vmul.f32 %v852, %v852
      %v1021 = vmul.f32 %v855, %v855
      %v1022 = vmul.f32 %v857, %v857
      %v1023 = vmul.f32 %v860, %v860
      %v1024 = vmul.f32 %v862, %v862
      %v1025 = vmul.f32 %v865, %v865
      %v1026 = vmul.f32 %v867, %v867
      %v1027 = vmul.f32 %v870, %v870
      %v1028 = vmul.f32 %v872, %v872
      %v1029 = vmul.f32 %v875, %v875
      %v1030 = vmul.f32 %v877, %v877
      %v1031 = vmul.f32 %v880, %v880
      %v1032 = vmul.f32 %v882, %v882
      %v1033 = vadd.f32 %v997, %v998
      %v1034 = vadd.f32 %v1033, %v999
      %v1035 = vadd.f32 %v1034, %v1000
      %v1036 = vadd.f32 %v1035, %v1001
      %v1037 = vadd.f32 %v1036, %v1002
      %v1038 = vadd.f32 %v1037, %v1003
      %v1039 = vadd.f32 %v1038, %v1004
      %v1040 = vadd.f32 %v1039, %v1005
      %v1041 = vadd.f32 %v1040, %v1006
      %v1042 = vadd.f32 %v1041, %v1007
      %v1043 = vadd.f32 %v1042, %v1008
      %v1044 = vadd.f32 %v1043, %v1009
      %v1045 = vadd.f32 %v1044, %v1010
      %v1046 = vadd.f32 %v1045, %v1011
      %v1047 = vadd.f32 %v1046, %v1012
      %v1048 = vadd.f32 %v1047, %v1013
      %v1049 = vadd.f32 %v1048, %v1014
      %v1050 = vadd.f32 %v1049, %v1015
      %v1051 = vadd.f32 %v1050, %v1016
      %v1052 = vadd.f32 %v1051, %v1017
      %v1053 = vadd.f32 %v1052, %v1018
      %v1054 = vadd.f32 %v1053, %v1019
      %v1055 = vadd.f32 %v1054, %v1020
      %v1056 = vadd.f32 %v1055, %v1021
      %v1057 = vadd.f32 %v1056, %v1022
      %v1058 = vadd.f32 %v1057, %v1023
      %v1059 = vadd.f32 %v1058, %v1024
      %v1060 = vadd.f32 %v1059, %v1025
      %v1061 = vadd.f32 %v1060, %v1026
      %v1062 = vadd.f32 %v1061, %v1027
      %v1063 = vadd.f32 %v1062, %v1028
      %v1064 = vadd.f32 %v1063, %v1029
      %v1065 = vadd.f32 %v1064, %v1030
      %v1066 = vadd.f32 %v1065, %v1031
      %v1067 = vadd.f32 %v1066, %v1032
      %v1068 = vrot.slane %v1067, 4
      %v1069 = vadd.f32 %v1067, %v1068
      %v1070 = vrot.slane %v1069, 2
      %v1071 = vadd.f32 %v1069, %v1070
      %v1072 = vrot.slane %v1071, 1
      %v1073 = vadd.f32 %v1071, %v1072
      %vm1074 = vcmask 1040384
      %v1075 = vsel %vm1074, %v996, %v1073
      %1076 = vst [vmem:[%s262] sm:$0x3] %v1075
      %p1077 = scmp.lt.s32.totalorder %s18, 1
      %s1078 = scalar_select %p1077, %s18, 1
      %s1079 = smul.addr %s1078, 36
      %s1080 = smul.addr %s1079, 4
      %s1081 = scalar_lea.vmem %s5, %s1080
      %p1082 = scmp.lt.s32.totalorder %s18, 1
      %s1083 = scalar_select %p1082, %s18, 1
      %s1084 = smul.addr %s1083, 2
      %s1085 = scalar_lea.vmem %s6, %s1084
      // Predicated region
      $region41: #{block_forward.6} parent=39 // pred_check
        %p1086 = pneg %p146
      $region42: #{block_forward.6} parent=39 // pred_check_branch
        %1088 = sbr.rel (%p1086) target = $region44
      $region43: #{block_forward.6} parent=39 // pred_region
        _
      $region44: #{block_forward.6} parent=39 // pred_fallthru
        _
      // Predicated region
      $region45: #{block_forward.6} parent=39 // pred_check
        %p1089 = pneg %p172
      $region46: #{block_forward.6} parent=39 // pred_check_branch
        %1091 = sbr.rel (%p1089) target = $region48
      $region47: #{block_forward.6} parent=39 // pred_region
        _
      $region48: #{block_forward.6} parent=39 // pred_fallthru
        _
    $region40: #{block_forward.6} parent=5 // pred_fallthru
      _
    %p1092 = scmp.le.s32.totalorder 2, %s13
    // Predicated region
    $region49: #{block_forward.6} parent=5 // pred_check
      %p1093 = pneg %p1092
    $region50: #{block_forward.6} parent=5 // pred_check_branch
      %1095 = sbr.rel (%p1093) target = $region52
    $region51: #{block_forward.6} parent=5 // pred_region
      %s1096 = ssub.s32 %s13, 2
      // Predicated region
      $region53: #{block_forward.6} parent=51 // pred_check
        %p1097 = pneg %p152
      $region54: #{block_forward.6} parent=51 // pred_check_branch
        %1099 = sbr.rel (%p1097) target = $region56
      $region55: #{block_forward.6} parent=51 // pred_region
        %p1100 = scmp.lt.s32.totalorder %s19, 1
        %s1101 = scalar_select %p1100, %s19, 1
        %s1102 = smul.addr %s1101, 36
        %s1103 = smul.addr %s1102, 4
        %s1104 = scalar_lea.vmem %s5, %s1103
      $region56: #{block_forward.6} parent=51 // pred_fallthru
        _
      // Predicated region
      $region57: #{block_forward.6} parent=51 // pred_check
        %p1105 = pneg %p178
      $region58: #{block_forward.6} parent=51 // pred_check_branch
        %1107 = sbr.rel (%p1105) target = $region60
      $region59: #{block_forward.6} parent=51 // pred_region
        %p1108 = scmp.lt.s32.totalorder %s19, 1
        %s1109 = scalar_select %p1108, %s19, 1
        %s1110 = smul.addr %s1109, 2
        %s1111 = scalar_lea.vmem %s6, %s1110
      $region60: #{block_forward.6} parent=51 // pred_fallthru
        _
    $region52: #{block_forward.6} parent=5 // pred_fallthru
      _
  $region6: #{block_forward.6} parent=0 // loop_footer
    %s17 = sadd.s32 1, %s13
  $region7: #{block_forward.6} parent=0 // loop_footer_branch
    %12 = sbr.rel target = $region3
  $region8: #{block_forward.6} parent=0 // loop_exit
    _

// kernel: block_forward.5
$region0: #{block_forward.5}
  #allocation0 [shape = 'u32[]', space=smem, size = 0x4, offset = 0x4, fixed_abs, tag = 'smem constant byte address 0x4 - core index']
  #allocation1 [shape = 'u32[72,128]{1,0:T(1,128)}', space=vmem, size = 0x9000, scoped, tag = 'internal scratch']
  #allocation2 [shape = 'f32[328,128]{1,0:T(8,128)}', space=vmem, size = 0x29000, scoped, tag = 'scratch operand']
  %s0 = inlined_call_operand.vmem [shape: bf16[2,328,128], index: 0, kind: input, shape index: {}]
  %s1 = inlined_call_operand.vmem [shape: f32[1,128], index: 1, kind: input, shape index: {}]
  %s2 = inlined_call_operand.vmem [shape: f32[1,128], index: 2, kind: input, shape index: {}]
  %s3 = inlined_call_operand.vmem [shape: f32[328,1], index: 3, kind: input, shape index: {}]
  %s4 = inlined_call_operand.vmem [shape: f32[288,1], index: 4, kind: input, shape index: {}]
  %s5 = inlined_call_operand.vmem [shape: bf16[9,128,128], index: 5, kind: input, shape index: {}]
  %s6 = inlined_call_operand.vmem [shape: bf16[2,288,128], index: 6, kind: output, shape index: {0}]
  %s7 = inlined_call_operand.vmem [shape: f32[2,2,128], index: 7, kind: output, shape index: {1}]
  %8 = xla_tuple %s6, %s7
  %s9 = sld [smem:[#allocation0]]
  $region65: #{block_forward.5} parent=0
    _
  %s11 = ssub.s32 1, %s9
  %s12 = scalar_select 0, %s11, %s9
  loop: start=0, step=1, limit=4
  $region2: #{block_forward.5} parent=0 // loop_pre_header
    _
  $region3: #{block_forward.5} parent=0 // loop_header
    %s14 = sphi 0, %s18
    %p15 = scmp.ge.s32.totalorder %s14, 4
    %s24 = sphi 0, %s26
    %s27 = sphi 0, %s24
    %s28 = sphi 0, %s27
    %s44 = sphi 0, %s28
    %s48 = sphi 0, %s48
    %s50 = sphi 0, %s48
    %s51 = sphi 0, %s50
    %s65 = sphi 0, %s51
    %s69 = sphi 0, %s69
    %s71 = sphi 0, %s69
    %s72 = sphi 0, %s71
    %s86 = sphi 0, %s72
    %s90 = sphi 0, %s90
    %s92 = sphi 0, %s90
    %s93 = sphi 0, %s92
    %s107 = sphi 0, %s93
    %s111 = sphi 0, %s111
    %s113 = sphi 0, %s111
    %s114 = sphi 0, %s113
    %s128 = sphi 0, %s114
    %s132 = sphi 0, %s132
    %s134 = sphi 0, %s132
    %s135 = sphi 0, %s134
    %s149 = sphi 0, %s135
    %s155 = sphi 0, %s157
    %s158 = sphi 0, %s155
    %s159 = sphi 0, %s158
    %s175 = sphi 0, %s159
    %s181 = sphi 0, %s183
    %s184 = sphi 0, %s181
    %s185 = sphi 0, %s184
    %s201 = sphi 0, %s185
  $region4: #{block_forward.5} parent=0 // loop_header_branch
    %17 = sbr.rel (%p15) target = $region8
  $region5: #{block_forward.5} parent=0 // loop_body
    %s19 = ssub.s32 %s14, 1
    %s20 = ssub.s32 %s14, 2
    %s21 = sadd.s32 %s14, 1
    %s22 = ssub.s32 %s14, %s21
    %p23 = scmp.eq.s32.totalorder %s22, 0
    %s25 = sadd.s32 %s24, 1
    %s26 = scalar_select %p23, %s24, %s25
    %p29 = pneg %p23
    %p30 = scmp.eq.s32.totalorder %s14, 1
    %p31 = por %p29, %p30
    %p32 = scmp.ne.s32.totalorder %s24, %s27
    %p33 = scmp.eq.s32.totalorder %s14, 0
    %p34 = por %p32, %p33
    %p35 = scmp.ne.s32.totalorder %s24, %s27
    %p36 = scmp.eq.s32.totalorder %s19, 1
    %p37 = por %p35, %p36
    %p38 = scmp.ne.s32.totalorder %s27, %s28
    %p39 = scmp.eq.s32.totalorder %s19, 0
    %p40 = por %p38, %p39
    %p41 = scmp.ne.s32.totalorder %s27, %s28
    %p42 = scmp.eq.s32.totalorder %s20, 1
    %p43 = por %p41, %p42
    %p45 = scmp.ne.s32.totalorder %s28, %s44
    %p46 = scmp.eq.s32.totalorder %s20, 0
    %p47 = por %p45, %p46
    %s49 = sadd.s32 %s48, 1
    %p52 = scmp.eq.s32.totalorder %s14, 1
    %p53 = scmp.ne.s32.totalorder %s48, %s50
    %p54 = scmp.eq.s32.totalorder %s14, 0
    %p55 = por %p53, %p54
    %p56 = scmp.ne.s32.totalorder %s48, %s50
    %p57 = scmp.eq.s32.totalorder %s19, 1
    %p58 = por %p56, %p57
    %p59 = scmp.ne.s32.totalorder %s50, %s51
    %p60 = scmp.eq.s32.totalorder %s19, 0
    %p61 = por %p59, %p60
    %p62 = scmp.ne.s32.totalorder %s50, %s51
    %p63 = scmp.eq.s32.totalorder %s20, 1
    %p64 = por %p62, %p63
    %p66 = scmp.ne.s32.totalorder %s51, %s65
    %p67 = scmp.eq.s32.totalorder %s20, 0
    %p68 = por %p66, %p67
    %s70 = sadd.s32 %s69, 1
    %p73 = scmp.eq.s32.totalorder %s14, 1
    %p74 = scmp.ne.s32.totalorder %s69, %s71
    %p75 = scmp.eq.s32.totalorder %s14, 0
    %p76 = por %p74, %p75
    %p77 = scmp.ne.s32.totalorder %s69, %s71
    %p78 = scmp.eq.s32.totalorder %s19, 1
    %p79 = por %p77, %p78
    %p80 = scmp.ne.s32.totalorder %s71, %s72
    %p81 = scmp.eq.s32.totalorder %s19, 0
    %p82 = por %p80, %p81
    %p83 = scmp.ne.s32.totalorder %s71, %s72
    %p84 = scmp.eq.s32.totalorder %s20, 1
    %p85 = por %p83, %p84
    %p87 = scmp.ne.s32.totalorder %s72, %s86
    %p88 = scmp.eq.s32.totalorder %s20, 0
    %p89 = por %p87, %p88
    %s91 = sadd.s32 %s90, 1
    %p94 = scmp.eq.s32.totalorder %s14, 1
    %p95 = scmp.ne.s32.totalorder %s90, %s92
    %p96 = scmp.eq.s32.totalorder %s14, 0
    %p97 = por %p95, %p96
    %p98 = scmp.ne.s32.totalorder %s90, %s92
    %p99 = scmp.eq.s32.totalorder %s19, 1
    %p100 = por %p98, %p99
    %p101 = scmp.ne.s32.totalorder %s92, %s93
    %p102 = scmp.eq.s32.totalorder %s19, 0
    %p103 = por %p101, %p102
    %p104 = scmp.ne.s32.totalorder %s92, %s93
    %p105 = scmp.eq.s32.totalorder %s20, 1
    %p106 = por %p104, %p105
    %p108 = scmp.ne.s32.totalorder %s93, %s107
    %p109 = scmp.eq.s32.totalorder %s20, 0
    %p110 = por %p108, %p109
    %s112 = sadd.s32 %s111, 1
    %p115 = scmp.eq.s32.totalorder %s14, 1
    %p116 = scmp.ne.s32.totalorder %s111, %s113
    %p117 = scmp.eq.s32.totalorder %s14, 0
    %p118 = por %p116, %p117
    %p119 = scmp.ne.s32.totalorder %s111, %s113
    %p120 = scmp.eq.s32.totalorder %s19, 1
    %p121 = por %p119, %p120
    %p122 = scmp.ne.s32.totalorder %s113, %s114
    %p123 = scmp.eq.s32.totalorder %s19, 0
    %p124 = por %p122, %p123
    %p125 = scmp.ne.s32.totalorder %s113, %s114
    %p126 = scmp.eq.s32.totalorder %s20, 1
    %p127 = por %p125, %p126
    %p129 = scmp.ne.s32.totalorder %s114, %s128
    %p130 = scmp.eq.s32.totalorder %s20, 0
    %p131 = por %p129, %p130
    %s133 = sadd.s32 %s132, 1
    %p136 = scmp.eq.s32.totalorder %s14, 1
    %p137 = scmp.ne.s32.totalorder %s132, %s134
    %p138 = scmp.eq.s32.totalorder %s14, 0
    %p139 = por %p137, %p138
    %p140 = scmp.ne.s32.totalorder %s132, %s134
    %p141 = scmp.eq.s32.totalorder %s19, 1
    %p142 = por %p140, %p141
    %p143 = scmp.ne.s32.totalorder %s134, %s135
    %p144 = scmp.eq.s32.totalorder %s19, 0
    %p145 = por %p143, %p144
    %p146 = scmp.ne.s32.totalorder %s134, %s135
    %p147 = scmp.eq.s32.totalorder %s20, 1
    %p148 = por %p146, %p147
    %p150 = scmp.ne.s32.totalorder %s135, %s149
    %p151 = scmp.eq.s32.totalorder %s20, 0
    %p152 = por %p150, %p151
    %s153 = ssub.s32 %s14, %s21
    %p154 = scmp.eq.s32.totalorder %s153, 0
    %s156 = sadd.s32 %s155, 1
    %s157 = scalar_select %p154, %s155, %s156
    %p160 = pneg %p154
    %p161 = scmp.eq.s32.totalorder %s14, 1
    %p162 = por %p160, %p161
    %p163 = scmp.ne.s32.totalorder %s155, %s158
    %p164 = scmp.eq.s32.totalorder %s14, 0
    %p165 = por %p163, %p164
    %p166 = scmp.ne.s32.totalorder %s155, %s158
    %p167 = scmp.eq.s32.totalorder %s19, 1
    %p168 = por %p166, %p167
    %p169 = scmp.ne.s32.totalorder %s158, %s159
    %p170 = scmp.eq.s32.totalorder %s19, 0
    %p171 = por %p169, %p170
    %p172 = scmp.ne.s32.totalorder %s158, %s159
    %p173 = scmp.eq.s32.totalorder %s20, 1
    %p174 = por %p172, %p173
    %p176 = scmp.ne.s32.totalorder %s159, %s175
    %p177 = scmp.eq.s32.totalorder %s20, 0
    %p178 = por %p176, %p177
    %s179 = ssub.s32 %s14, %s21
    %p180 = scmp.eq.s32.totalorder %s179, 0
    %s182 = sadd.s32 %s181, 1
    %s183 = scalar_select %p180, %s181, %s182
    %p186 = pneg %p180
    %p187 = scmp.eq.s32.totalorder %s14, 1
    %p188 = por %p186, %p187
    %p189 = scmp.ne.s32.totalorder %s181, %s184
    %p190 = scmp.eq.s32.totalorder %s14, 0
    %p191 = por %p189, %p190
    %p192 = scmp.ne.s32.totalorder %s181, %s184
    %p193 = scmp.eq.s32.totalorder %s19, 1
    %p194 = por %p192, %p193
    %p195 = scmp.ne.s32.totalorder %s184, %s185
    %p196 = scmp.eq.s32.totalorder %s19, 0
    %p197 = por %p195, %p196
    %p198 = scmp.ne.s32.totalorder %s184, %s185
    %p199 = scmp.eq.s32.totalorder %s20, 1
    %p200 = por %p198, %p199
    %p202 = scmp.ne.s32.totalorder %s185, %s201
    %p203 = scmp.eq.s32.totalorder %s20, 0
    %p204 = por %p202, %p203
    %p205 = scmp.le.s32.totalorder 1, %s14
    %p206 = scmp.lt.s32.totalorder %s14, 3
    %p207 = pnand %p205, %p206
    %p208 = pneg %p207
    // Predicated region
    $region9: #{block_forward.5} parent=5 // pred_check
      _
    $region10: #{block_forward.5} parent=5 // pred_check_branch
      %210 = sbr.rel (%p207) target = $region12
    $region11: #{block_forward.5} parent=5 // pred_region
      %s211 = ssub.s32 %s14, 1
      // Predicated region
      $region13: #{block_forward.5} parent=11 // pred_check
        %p212 = pneg %p61
      $region14: #{block_forward.5} parent=11 // pred_check_branch
        %214 = sbr.rel (%p212) target = $region16
      $region15: #{block_forward.5} parent=11 // pred_region
        _
      $region16: #{block_forward.5} parent=11 // pred_fallthru
        _
      // Predicated region
      $region17: #{block_forward.5} parent=11 // pred_check
        %p215 = pneg %p82
      $region18: #{block_forward.5} parent=11 // pred_check_branch
        %217 = sbr.rel (%p215) target = $region20
      $region19: #{block_forward.5} parent=11 // pred_region
        _
      $region20: #{block_forward.5} parent=11 // pred_fallthru
        _
      // Predicated region
      $region21: #{block_forward.5} parent=11 // pred_check
        %p218 = pneg %p103
      $region22: #{block_forward.5} parent=11 // pred_check_branch
        %220 = sbr.rel (%p218) target = $region24
      $region23: #{block_forward.5} parent=11 // pred_region
        _
      $region24: #{block_forward.5} parent=11 // pred_fallthru
        _
      // Predicated region
      $region25: #{block_forward.5} parent=11 // pred_check
        %p221 = pneg %p124
      $region26: #{block_forward.5} parent=11 // pred_check_branch
        %223 = sbr.rel (%p221) target = $region28
      $region27: #{block_forward.5} parent=11 // pred_region
        _
      $region28: #{block_forward.5} parent=11 // pred_fallthru
        _
      // Predicated region
      $region29: #{block_forward.5} parent=11 // pred_check
        %p224 = pneg %p145
      $region30: #{block_forward.5} parent=11 // pred_check_branch
        %226 = sbr.rel (%p224) target = $region32
      $region31: #{block_forward.5} parent=11 // pred_region
        _
      $region32: #{block_forward.5} parent=11 // pred_fallthru
        _
    $region12: #{block_forward.5} parent=5 // pred_fallthru
      _
    %p227 = scmp.lt.s32.totalorder %s14, 2
    // Predicated region
    $region33: #{block_forward.5} parent=5 // pred_check
      %p228 = pneg %p227
    $region34: #{block_forward.5} parent=5 // pred_check_branch
      %230 = sbr.rel (%p228) target = $region36
    $region35: #{block_forward.5} parent=5 // pred_region
      // Predicated region
      $region37: #{block_forward.5} parent=35 // pred_check
        %p231 = pneg %p34
      $region38: #{block_forward.5} parent=35 // pred_check_branch
        %233 = sbr.rel (%p231) target = $region40
      $region39: #{block_forward.5} parent=35 // pred_region
        %p234 = scmp.lt.s32.totalorder %s14, 1
        %s235 = scalar_select %p234, %s14, 1
        %s236 = smul.addr %s235, 41
        %s237 = smul.addr %s236, 4
        %s238 = scalar_lea.vmem %s0, %s237
      $region40: #{block_forward.5} parent=35 // pred_fallthru
        _
    $region36: #{block_forward.5} parent=5 // pred_fallthru
      _
    %p239 = scmp.le.s32.totalorder 1, %s14
    %p240 = scmp.lt.s32.totalorder %s14, 3
    %p241 = pnand %p239, %p240
    %p242 = pneg %p241
    // Predicated region
    $region41: #{block_forward.5} parent=5 // pred_check
      _
    $region42: #{block_forward.5} parent=5 // pred_check_branch
      %244 = sbr.rel (%p241) target = $region44
    $region43: #{block_forward.5} parent=5 // pred_region
      %s245 = ssub.s32 %s14, 1
      %p246 = scmp.lt.s32.totalorder %s19, 1
      %s247 = scalar_select %p246, %s19, 1
      %s248 = smul.addr %s247, 41
      %s249 = smul.addr %s248, 4
      %s250 = scalar_lea.vmem %s0, %s249
      %p251 = pneg %p40
      %p252 = pneg %p37
      %p253 = pneg %p61
      %p254 = pneg %p58
      %p255 = pneg %p82
      %p256 = pneg %p79
      %p257 = pneg %p103
      %p258 = pneg %p100
      %p259 = pneg %p124
      %p260 = pneg %p121
      %p261 = pneg %p145
      %p262 = pneg %p142
      %p263 = pneg %p171
      %p264 = pneg %p168
      %p265 = scmp.lt.s32.totalorder %s19, 1
      %s266 = scalar_select %p265, %s19, 1
      %s267 = smul.addr %s266, 36
      %s268 = smul.addr %s267, 4
      %s269 = scalar_lea.vmem %s6, %s268
      %p270 = pneg %p197
      %p271 = pneg %p194
      %p272 = scmp.lt.s32.totalorder %s19, 1
      %s273 = scalar_select %p272, %s19, 1
      %s274 = smul.addr %s273, 2
      %s275 = scalar_lea.vmem %s7, %s274
      %p276 = scmp.lt.s32.totalorder %s19, 1
      %s277 = scalar_select %p276, %s19, 1
      %s278 = smul.addr %s277, 41
      %s279 = smul.addr %s278, 4
      %s280 = scalar_lea.vmem %s0, %s279
      %p281 = scmp.lt.s32.totalorder %s19, 1
      %s282 = scalar_select %p281, %s19, 1
      %s283 = smul.addr %s282, 36
      %s284 = smul.addr %s283, 4
      %s285 = scalar_lea.vmem %s6, %s284
      %p286 = scmp.lt.s32.totalorder %s19, 1
      %s287 = scalar_select %p286, %s19, 1
      %s288 = smul.addr %s287, 2
      %s289 = scalar_lea.vmem %s7, %s288
      %v290 = vld [vmem:[%s280] sm:$0xf]
      %v291 = vld [vmem:[%s280 + $0x4] sm:$0xf]
      %v292 = vld [vmem:[%s280 + $0x8] sm:$0xf]
      %v293 = vld [vmem:[%s280 + $0xc] sm:$0xf]
      %v294 = vld [vmem:[%s280 + $0x10] sm:$0xf]
      %v295 = vld [vmem:[%s280 + $0x14] sm:$0xf]
      %v296 = vld [vmem:[%s280 + $0x18] sm:$0xf]
      %v297 = vld [vmem:[%s280 + $0x1c] sm:$0xf]
      %v298 = vld [vmem:[%s280 + $0x20] sm:$0xf]
      %v299 = vld [vmem:[%s280 + $0x24] sm:$0xf]
      %v300 = vld [vmem:[%s280 + $0x28] sm:$0xf]
      %v301 = vld [vmem:[%s280 + $0x2c] sm:$0xf]
      %v302 = vld [vmem:[%s280 + $0x30] sm:$0xf]
      %v303 = vld [vmem:[%s280 + $0x34] sm:$0xf]
      %v304 = vld [vmem:[%s280 + $0x38] sm:$0xf]
      %v305 = vld [vmem:[%s280 + $0x3c] sm:$0xf]
      %v306 = vld [vmem:[%s280 + $0x40] sm:$0xf]
      %v307 = vld [vmem:[%s280 + $0x44] sm:$0xf]
      %v308 = vld [vmem:[%s280 + $0x48] sm:$0xf]
      %v309 = vld [vmem:[%s280 + $0x4c] sm:$0xf]
      %v310 = vld [vmem:[%s280 + $0x50] sm:$0xf]
      %v311 = vld [vmem:[%s280 + $0x54] sm:$0xf]
      %v312 = vld [vmem:[%s280 + $0x58] sm:$0xf]
      %v313 = vld [vmem:[%s280 + $0x5c] sm:$0xf]
      %v314 = vld [vmem:[%s280 + $0x60] sm:$0xf]
      %v315 = vld [vmem:[%s280 + $0x64] sm:$0xf]
      %v316 = vld [vmem:[%s280 + $0x68] sm:$0xf]
      %v317 = vld [vmem:[%s280 + $0x6c] sm:$0xf]
      %v318 = vld [vmem:[%s280 + $0x70] sm:$0xf]
      %v319 = vld [vmem:[%s280 + $0x74] sm:$0xf]
      %v320 = vld [vmem:[%s280 + $0x78] sm:$0xf]
      %v321 = vld [vmem:[%s280 + $0x7c] sm:$0xf]
      %v322 = vld [vmem:[%s280 + $0x80] sm:$0xf]
      %v323 = vld [vmem:[%s280 + $0x84] sm:$0xf]
      %v324 = vld [vmem:[%s280 + $0x88] sm:$0xf]
      %v325 = vld [vmem:[%s280 + $0x8c] sm:$0xf]
      %v326 = vld [vmem:[%s280 + $0x90] sm:$0xf]
      %v327 = vld [vmem:[%s280 + $0x94] sm:$0xf]
      %v328 = vld [vmem:[%s280 + $0x98] sm:$0xf]
      %v329 = vld [vmem:[%s280 + $0x9c] sm:$0xf]
      %v330 = vld [vmem:[%s280 + $0xa0] sm:$0xf]
      %v331 = vunpack.c.l.bf16 %v290
      %v332 = vunpack.c.l.bf16 %v291
      %v333 = vunpack.c.l.bf16 %v292
      %v334 = vunpack.c.l.bf16 %v293
      %v335 = vunpack.c.l.bf16 %v294
      %v336 = vunpack.c.l.bf16 %v295
      %v337 = vunpack.c.l.bf16 %v296
      %v338 = vunpack.c.l.bf16 %v297
      %v339 = vunpack.c.l.bf16 %v298
      %v340 = vunpack.c.l.bf16 %v299
      %v341 = vunpack.c.l.bf16 %v300
      %v342 = vunpack.c.l.bf16 %v301
      %v343 = vunpack.c.l.bf16 %v302
      %v344 = vunpack.c.l.bf16 %v303
      %v345 = vunpack.c.l.bf16 %v304
      %v346 = vunpack.c.l.bf16 %v305
      %v347 = vunpack.c.l.bf16 %v306
      %v348 = vunpack.c.l.bf16 %v307
      %v349 = vunpack.c.l.bf16 %v308
      %v350 = vunpack.c.l.bf16 %v309
      %v351 = vunpack.c.l.bf16 %v310
      %v352 = vunpack.c.l.bf16 %v311
      %v353 = vunpack.c.l.bf16 %v312
      %v354 = vunpack.c.l.bf16 %v313
      %v355 = vunpack.c.l.bf16 %v314
      %v356 = vunpack.c.l.bf16 %v315
      %v357 = vunpack.c.l.bf16 %v316
      %v358 = vunpack.c.l.bf16 %v317
      %v359 = vunpack.c.l.bf16 %v318
      %v360 = vunpack.c.l.bf16 %v319
      %v361 = vunpack.c.l.bf16 %v320
      %v362 = vunpack.c.l.bf16 %v321
      %v363 = vunpack.c.l.bf16 %v322
      %v364 = vunpack.c.l.bf16 %v323
      %v365 = vunpack.c.l.bf16 %v324
      %v366 = vunpack.c.l.bf16 %v325
      %v367 = vunpack.c.l.bf16 %v326
      %v368 = vunpack.c.l.bf16 %v327
      %v369 = vunpack.c.l.bf16 %v328
      %v370 = vunpack.c.l.bf16 %v329
      %v371 = vunpack.c.l.bf16 %v330
      %v372 = vld [vmem:[%s1] sm:$0x1]
      %v374 = vperm.slane %v372, 0
      %v376 = vmul.f32 %v331, %v374
      %v377 = vmul.f32 %v332, %v374
      %v378 = vmul.f32 %v333, %v374
      %v379 = vmul.f32 %v334, %v374
      %v380 = vmul.f32 %v335, %v374
      %v381 = vmul.f32 %v336, %v374
      %v382 = vmul.f32 %v337, %v374
      %v383 = vmul.f32 %v338, %v374
      %v384 = vmul.f32 %v339, %v374
      %v385 = vmul.f32 %v340, %v374
      %v386 = vmul.f32 %v341, %v374
      %v387 = vmul.f32 %v342, %v374
      %v388 = vmul.f32 %v343, %v374
      %v389 = vmul.f32 %v344, %v374
      %v390 = vmul.f32 %v345, %v374
      %v391 = vmul.f32 %v346, %v374
      %v392 = vmul.f32 %v347, %v374
      %v393 = vmul.f32 %v348, %v374
      %v394 = vmul.f32 %v349, %v374
      %v395 = vmul.f32 %v350, %v374
      %v396 = vmul.f32 %v351, %v374
      %v397 = vmul.f32 %v352, %v374
      %v398 = vmul.f32 %v353, %v374
      %v399 = vmul.f32 %v354, %v374
      %v400 = vmul.f32 %v355, %v374
      %v401 = vmul.f32 %v356, %v374
      %v402 = vmul.f32 %v357, %v374
      %v403 = vmul.f32 %v358, %v374
      %v404 = vmul.f32 %v359, %v374
      %v405 = vmul.f32 %v360, %v374
      %v406 = vmul.f32 %v361, %v374
      %v407 = vmul.f32 %v362, %v374
      %v408 = vmul.f32 %v363, %v374
      %v409 = vmul.f32 %v364, %v374
      %v410 = vmul.f32 %v365, %v374
      %v411 = vmul.f32 %v366, %v374
      %v412 = vmul.f32 %v367, %v374
      %v413 = vmul.f32 %v368, %v374
      %v414 = vmul.f32 %v369, %v374
      %v415 = vmul.f32 %v370, %v374
      %v416 = vmul.f32 %v371, %v374
      %v417 = vld [vmem:[%s2] sm:$0x1]
      %v419 = vperm.slane %v417, 0
      %v421 = vadd.f32 %v376, %v419
      %v422 = vadd.f32 %v377, %v419
      %v423 = vadd.f32 %v378, %v419
      %v424 = vadd.f32 %v379, %v419
      %v425 = vadd.f32 %v380, %v419
      %v426 = vadd.f32 %v381, %v419
      %v427 = vadd.f32 %v382, %v419
      %v428 = vadd.f32 %v383, %v419
      %v429 = vadd.f32 %v384, %v419
      %v430 = vadd.f32 %v385, %v419
      %v431 = vadd.f32 %v386, %v419
      %v432 = vadd.f32 %v387, %v419
      %v433 = vadd.f32 %v388, %v419
      %v434 = vadd.f32 %v389, %v419
      %v435 = vadd.f32 %v390, %v419
      %v436 = vadd.f32 %v391, %v419
      %v437 = vadd.f32 %v392, %v419
      %v438 = vadd.f32 %v393, %v419
      %v439 = vadd.f32 %v394, %v419
      %v440 = vadd.f32 %v395, %v419
      %v441 = vadd.f32 %v396, %v419
      %v442 = vadd.f32 %v397, %v419
      %v443 = vadd.f32 %v398, %v419
      %v444 = vadd.f32 %v399, %v419
      %v445 = vadd.f32 %v400, %v419
      %v446 = vadd.f32 %v401, %v419
      %v447 = vadd.f32 %v402, %v419
      %v448 = vadd.f32 %v403, %v419
      %v449 = vadd.f32 %v404, %v419
      %v450 = vadd.f32 %v405, %v419
      %v451 = vadd.f32 %v406, %v419
      %v452 = vadd.f32 %v407, %v419
      %v453 = vadd.f32 %v408, %v419
      %v454 = vadd.f32 %v409, %v419
      %v455 = vadd.f32 %v410, %v419
      %v456 = vadd.f32 %v411, %v419
      %v457 = vadd.f32 %v412, %v419
      %v458 = vadd.f32 %v413, %v419
      %v459 = vadd.f32 %v414, %v419
      %v460 = vadd.f32 %v415, %v419
      %v461 = vadd.f32 %v416, %v419
      %v462 = vmax.f32 %v421, 0.0
      %v463 = vmax.f32 %v422, 0.0
      %v464 = vmax.f32 %v423, 0.0
      %v465 = vmax.f32 %v424, 0.0
      %v466 = vmax.f32 %v425, 0.0
      %v467 = vmax.f32 %v426, 0.0
      %v468 = vmax.f32 %v427, 0.0
      %v469 = vmax.f32 %v428, 0.0
      %v470 = vmax.f32 %v429, 0.0
      %v471 = vmax.f32 %v430, 0.0
      %v472 = vmax.f32 %v431, 0.0
      %v473 = vmax.f32 %v432, 0.0
      %v474 = vmax.f32 %v433, 0.0
      %v475 = vmax.f32 %v434, 0.0
      %v476 = vmax.f32 %v435, 0.0
      %v477 = vmax.f32 %v436, 0.0
      %v478 = vmax.f32 %v437, 0.0
      %v479 = vmax.f32 %v438, 0.0
      %v480 = vmax.f32 %v439, 0.0
      %v481 = vmax.f32 %v440, 0.0
      %v482 = vmax.f32 %v441, 0.0
      %v483 = vmax.f32 %v442, 0.0
      %v484 = vmax.f32 %v443, 0.0
      %v485 = vmax.f32 %v444, 0.0
      %v486 = vmax.f32 %v445, 0.0
      %v487 = vmax.f32 %v446, 0.0
      %v488 = vmax.f32 %v447, 0.0
      %v489 = vmax.f32 %v448, 0.0
      %v490 = vmax.f32 %v449, 0.0
      %v491 = vmax.f32 %v450, 0.0
      %v492 = vmax.f32 %v451, 0.0
      %v493 = vmax.f32 %v452, 0.0
      %v494 = vmax.f32 %v453, 0.0
      %v495 = vmax.f32 %v454, 0.0
      %v496 = vmax.f32 %v455, 0.0
      %v497 = vmax.f32 %v456, 0.0
      %v498 = vmax.f32 %v457, 0.0
      %v499 = vmax.f32 %v458, 0.0
      %v500 = vmax.f32 %v459, 0.0
      %v501 = vmax.f32 %v460, 0.0
      %v502 = vmax.f32 %v461, 0.0
      %v503 = vld [vmem:[%s3] sm:$0xff]
      %v504 = vld [vmem:[%s3 + $0x8] sm:$0xff]
      %v505 = vld [vmem:[%s3 + $0x10] sm:$0xff]
      %v506 = vld [vmem:[%s3 + $0x18] sm:$0xff]
      %v507 = vld [vmem:[%s3 + $0x20] sm:$0xff]
      %v508 = vld [vmem:[%s3 + $0x28] sm:$0xff]
      %v509 = vld [vmem:[%s3 + $0x30] sm:$0xff]
      %v510 = vld [vmem:[%s3 + $0x38] sm:$0xff]
      %v511 = vld [vmem:[%s3 + $0x40] sm:$0xff]
      %v512 = vld [vmem:[%s3 + $0x48] sm:$0xff]
      %v513 = vld [vmem:[%s3 + $0x50] sm:$0xff]
      %v514 = vld [vmem:[%s3 + $0x58] sm:$0xff]
      %v515 = vld [vmem:[%s3 + $0x60] sm:$0xff]
      %v516 = vld [vmem:[%s3 + $0x68] sm:$0xff]
      %v517 = vld [vmem:[%s3 + $0x70] sm:$0xff]
      %v518 = vld [vmem:[%s3 + $0x78] sm:$0xff]
      %v519 = vld [vmem:[%s3 + $0x80] sm:$0xff]
      %v520 = vld [vmem:[%s3 + $0x88] sm:$0xff]
      %v521 = vld [vmem:[%s3 + $0x90] sm:$0xff]
      %v522 = vld [vmem:[%s3 + $0x98] sm:$0xff]
      %v523 = vld [vmem:[%s3 + $0xa0] sm:$0xff]
      %v524 = vld [vmem:[%s3 + $0xa8] sm:$0xff]
      %v525 = vld [vmem:[%s3 + $0xb0] sm:$0xff]
      %v526 = vld [vmem:[%s3 + $0xb8] sm:$0xff]
      %v527 = vld [vmem:[%s3 + $0xc0] sm:$0xff]
      %v528 = vld [vmem:[%s3 + $0xc8] sm:$0xff]
      %v529 = vld [vmem:[%s3 + $0xd0] sm:$0xff]
      %v530 = vld [vmem:[%s3 + $0xd8] sm:$0xff]
      %v531 = vld [vmem:[%s3 + $0xe0] sm:$0xff]
      %v532 = vld [vmem:[%s3 + $0xe8] sm:$0xff]
      %v533 = vld [vmem:[%s3 + $0xf0] sm:$0xff]
      %v534 = vld [vmem:[%s3 + $0xf8] sm:$0xff]
      %v535 = vld [vmem:[%s3 + $0x100] sm:$0xff]
      %v536 = vld [vmem:[%s3 + $0x108] sm:$0xff]
      %v537 = vld [vmem:[%s3 + $0x110] sm:$0xff]
      %v538 = vld [vmem:[%s3 + $0x118] sm:$0xff]
      %v539 = vld [vmem:[%s3 + $0x120] sm:$0xff]
      %v540 = vld [vmem:[%s3 + $0x128] sm:$0xff]
      %v541 = vld [vmem:[%s3 + $0x130] sm:$0xff]
      %v542 = vld [vmem:[%s3 + $0x138] sm:$0xff]
      %v543 = vld [vmem:[%s3 + $0x140] sm:$0xff]
      %545 = vset.pattern.permute.xlu0 0
      %546 = vperm.xlu0 %545, %v503
      %v547 = vpop.permute.xlu0 %546
      %550 = vset.pattern.permute.xlu0 0
      %551 = vperm.xlu0 %550, %v504
      %v552 = vpop.permute.xlu0 %551
      %555 = vset.pattern.permute.xlu0 0
      %556 = vperm.xlu0 %555, %v505
      %v557 = vpop.permute.xlu0 %556
      %560 = vset.pattern.permute.xlu0 0
      %561 = vperm.xlu0 %560, %v506
      %v562 = vpop.permute.xlu0 %561
      %565 = vset.pattern.permute.xlu0 0
      %566 = vperm.xlu0 %565, %v507
      %v567 = vpop.permute.xlu0 %566
      %570 = vset.pattern.permute.xlu0 0
      %571 = vperm.xlu0 %570, %v508
      %v572 = vpop.permute.xlu0 %571
      %575 = vset.pattern.permute.xlu0 0
      %576 = vperm.xlu0 %575, %v509
      %v577 = vpop.permute.xlu0 %576
      %580 = vset.pattern.permute.xlu0 0
      %581 = vperm.xlu0 %580, %v510
      %v582 = vpop.permute.xlu0 %581
      %585 = vset.pattern.permute.xlu0 0
      %586 = vperm.xlu0 %585, %v511
      %v587 = vpop.permute.xlu0 %586
      %590 = vset.pattern.permute.xlu0 0
      %591 = vperm.xlu0 %590, %v512
      %v592 = vpop.permute.xlu0 %591
      %595 = vset.pattern.permute.xlu0 0
      %596 = vperm.xlu0 %595, %v513
      %v597 = vpop.permute.xlu0 %596
      %600 = vset.pattern.permute.xlu0 0
      %601 = vperm.xlu0 %600, %v514
      %v602 = vpop.permute.xlu0 %601
      %605 = vset.pattern.permute.xlu0 0
      %606 = vperm.xlu0 %605, %v515
      %v607 = vpop.permute.xlu0 %606
      %610 = vset.pattern.permute.xlu0 0
      %611 = vperm.xlu0 %610, %v516
      %v612 = vpop.permute.xlu0 %611
      %615 = vset.pattern.permute.xlu0 0
      %616 = vperm.xlu0 %615, %v517
      %v617 = vpop.permute.xlu0 %616
      %620 = vset.pattern.permute.xlu0 0
      %621 = vperm.xlu0 %620, %v518
      %v622 = vpop.permute.xlu0 %621
      %625 = vset.pattern.permute.xlu0 0
      %626 = vperm.xlu0 %625, %v519
      %v627 = vpop.permute.xlu0 %626
      %630 = vset.pattern.permute.xlu0 0
      %631 = vperm.xlu0 %630, %v520
      %v632 = vpop.permute.xlu0 %631
      %635 = vset.pattern.permute.xlu0 0
      %636 = vperm.xlu0 %635, %v521
      %v637 = vpop.permute.xlu0 %636
      %640 = vset.pattern.permute.xlu0 0
      %641 = vperm.xlu0 %640, %v522
      %v642 = vpop.permute.xlu0 %641
      %645 = vset.pattern.permute.xlu0 0
      %646 = vperm.xlu0 %645, %v523
      %v647 = vpop.permute.xlu0 %646
      %650 = vset.pattern.permute.xlu0 0
      %651 = vperm.xlu0 %650, %v524
      %v652 = vpop.permute.xlu0 %651
      %655 = vset.pattern.permute.xlu0 0
      %656 = vperm.xlu0 %655, %v525
      %v657 = vpop.permute.xlu0 %656
      %660 = vset.pattern.permute.xlu0 0
      %661 = vperm.xlu0 %660, %v526
      %v662 = vpop.permute.xlu0 %661
      %665 = vset.pattern.permute.xlu0 0
      %666 = vperm.xlu0 %665, %v527
      %v667 = vpop.permute.xlu0 %666
      %670 = vset.pattern.permute.xlu0 0
      %671 = vperm.xlu0 %670, %v528
      %v672 = vpop.permute.xlu0 %671
      %675 = vset.pattern.permute.xlu0 0
      %676 = vperm.xlu0 %675, %v529
      %v677 = vpop.permute.xlu0 %676
      %680 = vset.pattern.permute.xlu0 0
      %681 = vperm.xlu0 %680, %v530
      %v682 = vpop.permute.xlu0 %681
      %685 = vset.pattern.permute.xlu0 0
      %686 = vperm.xlu0 %685, %v531
      %v687 = vpop.permute.xlu0 %686
      %690 = vset.pattern.permute.xlu0 0
      %691 = vperm.xlu0 %690, %v532
      %v692 = vpop.permute.xlu0 %691
      %695 = vset.pattern.permute.xlu0 0
      %696 = vperm.xlu0 %695, %v533
      %v697 = vpop.permute.xlu0 %696
      %700 = vset.pattern.permute.xlu0 0
      %701 = vperm.xlu0 %700, %v534
      %v702 = vpop.permute.xlu0 %701
      %705 = vset.pattern.permute.xlu0 0
      %706 = vperm.xlu0 %705, %v535
      %v707 = vpop.permute.xlu0 %706
      %710 = vset.pattern.permute.xlu0 0
      %711 = vperm.xlu0 %710, %v536
      %v712 = vpop.permute.xlu0 %711
      %715 = vset.pattern.permute.xlu0 0
      %716 = vperm.xlu0 %715, %v537
      %v717 = vpop.permute.xlu0 %716
      %720 = vset.pattern.permute.xlu0 0
      %721 = vperm.xlu0 %720, %v538
      %v722 = vpop.permute.xlu0 %721
      %725 = vset.pattern.permute.xlu0 0
      %726 = vperm.xlu0 %725, %v539
      %v727 = vpop.permute.xlu0 %726
      %730 = vset.pattern.permute.xlu0 0
      %731 = vperm.xlu0 %730, %v540
      %v732 = vpop.permute.xlu0 %731
      %735 = vset.pattern.permute.xlu0 0
      %736 = vperm.xlu0 %735, %v541
      %v737 = vpop.permute.xlu0 %736
      %740 = vset.pattern.permute.xlu0 0
      %741 = vperm.xlu0 %740, %v542
      %v742 = vpop.permute.xlu0 %741
      %745 = vset.pattern.permute.xlu0 0
      %746 = vperm.xlu0 %745, %v543
      %v747 = vpop.permute.xlu0 %746
      %v749 = vmul.f32 %v462, %v547
      %v750 = vmul.f32 %v463, %v552
      %v751 = vmul.f32 %v464, %v557
      %v752 = vmul.f32 %v465, %v562
      %v753 = vmul.f32 %v466, %v567
      %v754 = vmul.f32 %v467, %v572
      %v755 = vmul.f32 %v468, %v577
      %v756 = vmul.f32 %v469, %v582
      %v757 = vmul.f32 %v470, %v587
      %v758 = vmul.f32 %v471, %v592
      %v759 = vmul.f32 %v472, %v597
      %v760 = vmul.f32 %v473, %v602
      %v761 = vmul.f32 %v474, %v607
      %v762 = vmul.f32 %v475, %v612
      %v763 = vmul.f32 %v476, %v617
      %v764 = vmul.f32 %v477, %v622
      %v765 = vmul.f32 %v478, %v627
      %v766 = vmul.f32 %v479, %v632
      %v767 = vmul.f32 %v480, %v637
      %v768 = vmul.f32 %v481, %v642
      %v769 = vmul.f32 %v482, %v647
      %v770 = vmul.f32 %v483, %v652
      %v771 = vmul.f32 %v484, %v657
      %v772 = vmul.f32 %v485, %v662
      %v773 = vmul.f32 %v486, %v667
      %v774 = vmul.f32 %v487, %v672
      %v775 = vmul.f32 %v488, %v677
      %v776 = vmul.f32 %v489, %v682
      %v777 = vmul.f32 %v490, %v687
      %v778 = vmul.f32 %v491, %v692
      %v779 = vmul.f32 %v492, %v697
      %v780 = vmul.f32 %v493, %v702
      %v781 = vmul.f32 %v494, %v707
      %v782 = vmul.f32 %v495, %v712
      %v783 = vmul.f32 %v496, %v717
      %v784 = vmul.f32 %v497, %v722
      %v785 = vmul.f32 %v498, %v727
      %v786 = vmul.f32 %v499, %v732
      %v787 = vmul.f32 %v500, %v737
      %v788 = vmul.f32 %v501, %v742
      %v789 = vmul.f32 %v502, %v747
      %790 = vst [vmem:[#allocation2] sm:$0xff] %v749
      %791 = vst [vmem:[#allocation2 + $0x8] sm:$0xff] %v750
      %792 = vst [vmem:[#allocation2 + $0x10] sm:$0xff] %v751
      %793 = vst [vmem:[#allocation2 + $0x18] sm:$0xff] %v752
      %794 = vst [vmem:[#allocation2 + $0x20] sm:$0xff] %v753
      %795 = vst [vmem:[#allocation2 + $0x28] sm:$0xff] %v754
      %796 = vst [vmem:[#allocation2 + $0x30] sm:$0xff] %v755
      %797 = vst [vmem:[#allocation2 + $0x38] sm:$0xff] %v756
      %798 = vst [vmem:[#allocation2 + $0x40] sm:$0xff] %v757
      %799 = vst [vmem:[#allocation2 + $0x48] sm:$0xff] %v758
      %800 = vst [vmem:[#allocation2 + $0x50] sm:$0xff] %v759
      %801 = vst [vmem:[#allocation2 + $0x58] sm:$0xff] %v760
      %802 = vst [vmem:[#allocation2 + $0x60] sm:$0xff] %v761
      %803 = vst [vmem:[#allocation2 + $0x68] sm:$0xff] %v762
      %804 = vst [vmem:[#allocation2 + $0x70] sm:$0xff] %v763
      %805 = vst [vmem:[#allocation2 + $0x78] sm:$0xff] %v764
      %806 = vst [vmem:[#allocation2 + $0x80] sm:$0xff] %v765
      %807 = vst [vmem:[#allocation2 + $0x88] sm:$0xff] %v766
      %808 = vst [vmem:[#allocation2 + $0x90] sm:$0xff] %v767
      %809 = vst [vmem:[#allocation2 + $0x98] sm:$0xff] %v768
      %810 = vst [vmem:[#allocation2 + $0xa0] sm:$0xff] %v769
      %811 = vst [vmem:[#allocation2 + $0xa8] sm:$0xff] %v770
      %812 = vst [vmem:[#allocation2 + $0xb0] sm:$0xff] %v771
      %813 = vst [vmem:[#allocation2 + $0xb8] sm:$0xff] %v772
      %814 = vst [vmem:[#allocation2 + $0xc0] sm:$0xff] %v773
      %815 = vst [vmem:[#allocation2 + $0xc8] sm:$0xff] %v774
      %816 = vst [vmem:[#allocation2 + $0xd0] sm:$0xff] %v775
      %817 = vst [vmem:[#allocation2 + $0xd8] sm:$0xff] %v776
      %818 = vst [vmem:[#allocation2 + $0xe0] sm:$0xff] %v777
      %819 = vst [vmem:[#allocation2 + $0xe8] sm:$0xff] %v778
      %820 = vst [vmem:[#allocation2 + $0xf0] sm:$0xff] %v779
      %821 = vst [vmem:[#allocation2 + $0xf8] sm:$0xff] %v780
      %822 = vst [vmem:[#allocation2 + $0x100] sm:$0xff] %v781
      %823 = vst [vmem:[#allocation2 + $0x108] sm:$0xff] %v782
      %824 = vst [vmem:[#allocation2 + $0x110] sm:$0xff] %v783
      %825 = vst [vmem:[#allocation2 + $0x118] sm:$0xff] %v784
      %826 = vst [vmem:[#allocation2 + $0x120] sm:$0xff] %v785
      %827 = vst [vmem:[#allocation2 + $0x128] sm:$0xff] %v786
      %828 = vst [vmem:[#allocation2 + $0x130] sm:$0xff] %v787
      %829 = vst [vmem:[#allocation2 + $0x138] sm:$0xff] %v788
      %830 = vst [vmem:[#allocation2 + $0x140] sm:$0xff] %v789
      %v831 = vld [vmem:[#allocation2] sm:$0xff]
      %v832 = vld [vmem:[#allocation2 + $0x8] sm:$0xff]
      %v833 = vld [vmem:[#allocation2 + $0x10] sm:$0xff]
      %v834 = vld [vmem:[#allocation2 + $0x18] sm:$0xff]
      %v835 = vld [vmem:[#allocation2 + $0x20] sm:$0xff]
      %v836 = vld [vmem:[#allocation2 + $0x28] sm:$0xff]
      %v837 = vld [vmem:[#allocation2 + $0x30] sm:$0xff]
      %v838 = vld [vmem:[#allocation2 + $0x38] sm:$0xff]
      %v839 = vld [vmem:[#allocation2 + $0x40] sm:$0xff]
      %v840 = vld [vmem:[#allocation2 + $0x48] sm:$0xff]
      %v841 = vld [vmem:[#allocation2 + $0x50] sm:$0xff]
      %v842 = vld [vmem:[#allocation2 + $0x58] sm:$0xff]
      %v843 = vld [vmem:[#allocation2 + $0x60] sm:$0xff]
      %v844 = vld [vmem:[#allocation2 + $0x68] sm:$0xff]
      %v845 = vld [vmem:[#allocation2 + $0x70] sm:$0xff]
      %v846 = vld [vmem:[#allocation2 + $0x78] sm:$0xff]
      %v847 = vld [vmem:[#allocation2 + $0x80] sm:$0xff]
      %v848 = vld [vmem:[#allocation2 + $0x88] sm:$0xff]
      %v849 = vld [vmem:[#allocation2 + $0x90] sm:$0xff]
      %v850 = vld [vmem:[#allocation2 + $0x98] sm:$0xff]
      %v851 = vld [vmem:[#allocation2 + $0xa0] sm:$0xff]
      %v852 = vld [vmem:[#allocation2 + $0xa8] sm:$0xff]
      %v853 = vld [vmem:[#allocation2 + $0xb0] sm:$0xff]
      %v854 = vld [vmem:[#allocation2 + $0xb8] sm:$0xff]
      %v855 = vld [vmem:[#allocation2 + $0xc0] sm:$0xff]
      %v856 = vld [vmem:[#allocation2 + $0xc8] sm:$0xff]
      %v857 = vld [vmem:[#allocation2 + $0xd0] sm:$0xff]
      %v858 = vld [vmem:[#allocation2 + $0xd8] sm:$0xff]
      %v859 = vld [vmem:[#allocation2 + $0xe0] sm:$0xff]
      %v860 = vld [vmem:[#allocation2 + $0xe8] sm:$0xff]
      %v861 = vld [vmem:[#allocation2 + $0xf0] sm:$0xff]
      %v862 = vld [vmem:[#allocation2 + $0xf8] sm:$0xff]
      %v863 = vld [vmem:[#allocation2 + $0x100] sm:$0xff]
      %v864 = vld [vmem:[#allocation2 + $0x108] sm:$0xff]
      %v865 = vld [vmem:[#allocation2 + $0x110] sm:$0xff]
      %v866 = vld [vmem:[#allocation2 + $0x118] sm:$0xff]
      %v867 = vpack.c.bf16 %v832, %v831
      %v868 = vpack.c.bf16 %v834, %v833
      %v869 = vpack.c.bf16 %v836, %v835
      %v870 = vpack.c.bf16 %v838, %v837
      %v871 = vpack.c.bf16 %v840, %v839
      %v872 = vpack.c.bf16 %v842, %v841
      %v873 = vpack.c.bf16 %v844, %v843
      %v874 = vpack.c.bf16 %v846, %v845
      %v875 = vpack.c.bf16 %v848, %v847
      %v876 = vpack.c.bf16 %v850, %v849
      %v877 = vpack.c.bf16 %v852, %v851
      %v878 = vpack.c.bf16 %v854, %v853
      %v879 = vpack.c.bf16 %v856, %v855
      %v880 = vpack.c.bf16 %v858, %v857
      %v881 = vpack.c.bf16 %v860, %v859
      %v882 = vpack.c.bf16 %v862, %v861
      %v883 = vpack.c.bf16 %v864, %v863
      %v884 = vpack.c.bf16 %v866, %v865
      %v885 = vld [vmem:[%s5] sm:$0xf]
      %v886 = vld [vmem:[%s5 + $0x4] sm:$0xf]
      %v887 = vld [vmem:[%s5 + $0x8] sm:$0xf]
      %v888 = vld [vmem:[%s5 + $0xc] sm:$0xf]
      %v889 = vld [vmem:[%s5 + $0x10] sm:$0xf]
      %v890 = vld [vmem:[%s5 + $0x14] sm:$0xf]
      %v891 = vld [vmem:[%s5 + $0x18] sm:$0xf]
      %v892 = vld [vmem:[%s5 + $0x1c] sm:$0xf]
      %v893 = vld [vmem:[%s5 + $0x20] sm:$0xf]
      %v894 = vld [vmem:[%s5 + $0x24] sm:$0xf]
      %v895 = vld [vmem:[%s5 + $0x28] sm:$0xf]
      %v896 = vld [vmem:[%s5 + $0x2c] sm:$0xf]
      %v897 = vld [vmem:[%s5 + $0x30] sm:$0xf]
      %v898 = vld [vmem:[%s5 + $0x34] sm:$0xf]
      %v899 = vld [vmem:[%s5 + $0x38] sm:$0xf]
      %v900 = vld [vmem:[%s5 + $0x3c] sm:$0xf]
      %v901 = vld [vmem:[#allocation2 + $0x1] sm:$0xff]
      %v902 = vld [vmem:[#allocation2 + $0x9] sm:$0xff]
      %v903 = vld [vmem:[#allocation2 + $0x11] sm:$0xff]
      %v904 = vld [vmem:[#allocation2 + $0x19] sm:$0xff]
      %v905 = vld [vmem:[#allocation2 + $0x21] sm:$0xff]
      %v906 = vld [vmem:[#allocation2 + $0x29] sm:$0xff]
      %v907 = vld [vmem:[#allocation2 + $0x31] sm:$0xff]
      %v908 = vld [vmem:[#allocation2 + $0x39] sm:$0xff]
      %v909 = vld [vmem:[#allocation2 + $0x41] sm:$0xff]
      %v910 = vld [vmem:[#allocation2 + $0x49] sm:$0xff]
      %v911 = vld [vmem:[#allocation2 + $0x51] sm:$0xff]
      %v912 = vld [vmem:[#allocation2 + $0x59] sm:$0xff]
      %v913 = vld [vmem:[#allocation2 + $0x61] sm:$0xff]
      %v914 = vld [vmem:[#allocation2 + $0x69] sm:$0xff]
      %v915 = vld [vmem:[#allocation2 + $0x71] sm:$0xff]
      %v916 = vld [vmem:[#allocation2 + $0x79] sm:$0xff]
      %v917 = vld [vmem:[#allocation2 + $0x81] sm:$0xff]
      %v918 = vld [vmem:[#allocation2 + $0x89] sm:$0xff]
      %v919 = vld [vmem:[#allocation2 + $0x91] sm:$0xff]
      %v920 = vld [vmem:[#allocation2 + $0x99] sm:$0xff]
      %v921 = vld [vmem:[#allocation2 + $0xa1] sm:$0xff]
      %v922 = vld [vmem:[#allocation2 + $0xa9] sm:$0xff]
      %v923 = vld [vmem:[#allocation2 + $0xb1] sm:$0xff]
      %v924 = vld [vmem:[#allocation2 + $0xb9] sm:$0xff]
      %v925 = vld [vmem:[#allocation2 + $0xc1] sm:$0xff]
      %v926 = vld [vmem:[#allocation2 + $0xc9] sm:$0xff]
      %v927 = vld [vmem:[#allocation2 + $0xd1] sm:$0xff]
      %v928 = vld [vmem:[#allocation2 + $0xd9] sm:$0xff]
      %v929 = vld [vmem:[#allocation2 + $0xe1] sm:$0xff]
      %v930 = vld [vmem:[#allocation2 + $0xe9] sm:$0xff]
      %v931 = vld [vmem:[#allocation2 + $0xf1] sm:$0xff]
      %v932 = vld [vmem:[#allocation2 + $0xf9] sm:$0xff]
      %v933 = vld [vmem:[#allocation2 + $0x101] sm:$0xff]
      %v934 = vld [vmem:[#allocation2 + $0x109] sm:$0xff]
      %v935 = vld [vmem:[#allocation2 + $0x111] sm:$0xff]
      %v936 = vld [vmem:[#allocation2 + $0x119] sm:$0xff]
      %v937 = vpack.c.bf16 %v902, %v901
      %v938 = vpack.c.bf16 %v904, %v903
      %v939 = vpack.c.bf16 %v906, %v905
      %v940 = vpack.c.bf16 %v908, %v907
      %v941 = vpack.c.bf16 %v910, %v909
      %v942 = vpack.c.bf16 %v912, %v911
      %v943 = vpack.c.bf16 %v914, %v913
      %v944 = vpack.c.bf16 %v916, %v915
      %v945 = vpack.c.bf16 %v918, %v917
      %v946 = vpack.c.bf16 %v920, %v919
      %v947 = vpack.c.bf16 %v922, %v921
      %v948 = vpack.c.bf16 %v924, %v923
      %v949 = vpack.c.bf16 %v926, %v925
      %v950 = vpack.c.bf16 %v928, %v927
      %v951 = vpack.c.bf16 %v930, %v929
      %v952 = vpack.c.bf16 %v932, %v931
      %v953 = vpack.c.bf16 %v934, %v933
      %v954 = vpack.c.bf16 %v936, %v935
      %s955 = scalar_lea.vmem %s5, 64
      %v956 = vld [vmem:[%s955] sm:$0xf]
      %v957 = vld [vmem:[%s955 + $0x4] sm:$0xf]
      %v958 = vld [vmem:[%s955 + $0x8] sm:$0xf]
      %v959 = vld [vmem:[%s955 + $0xc] sm:$0xf]
      %v960 = vld [vmem:[%s955 + $0x10] sm:$0xf]
      %v961 = vld [vmem:[%s955 + $0x14] sm:$0xf]
      %v962 = vld [vmem:[%s955 + $0x18] sm:$0xf]
      %v963 = vld [vmem:[%s955 + $0x1c] sm:$0xf]
      %v964 = vld [vmem:[%s955 + $0x20] sm:$0xf]
      %v965 = vld [vmem:[%s955 + $0x24] sm:$0xf]
      %v966 = vld [vmem:[%s955 + $0x28] sm:$0xf]
      %v967 = vld [vmem:[%s955 + $0x2c] sm:$0xf]
      %v968 = vld [vmem:[%s955 + $0x30] sm:$0xf]
      %v969 = vld [vmem:[%s955 + $0x34] sm:$0xf]
      %v970 = vld [vmem:[%s955 + $0x38] sm:$0xf]
      %v971 = vld [vmem:[%s955 + $0x3c] sm:$0xf]
      %v988 = vunpack.c.l.b16 %v956
      %v989 = vunpack.c.l.b16 %v957
      %v990 = vunpack.c.l.b16 %v958
      %v991 = vunpack.c.l.b16 %v959
      %v992 = vunpack.c.l.b16 %v960
      %v993 = vunpack.c.l.b16 %v961
      %v994 = vunpack.c.l.b16 %v962
      %v995 = vunpack.c.l.b16 %v963
      %v996 = vunpack.c.l.b16 %v964
      %v997 = vunpack.c.l.b16 %v965
      %v998 = vunpack.c.l.b16 %v966
      %v999 = vunpack.c.l.b16 %v967
      %v1000 = vunpack.c.l.b16 %v968
      %v1001 = vunpack.c.l.b16 %v969
      %v1002 = vunpack.c.l.b16 %v970
      %v1003 = vunpack.c.l.b16 %v971
      %v1004 = vpack.c.b16 %v989, %v988
      %v1005 = vpack.c.b16 %v991, %v990
      %v1006 = vpack.c.b16 %v993, %v992
      %v1007 = vpack.c.b16 %v995, %v994
      %v1008 = vpack.c.b16 %v997, %v996
      %v1009 = vpack.c.b16 %v999, %v998
      %v1010 = vpack.c.b16 %v1001, %v1000
      %v1011 = vpack.c.b16 %v1003, %v1002
      %1020 = vmatpush.bf16.msra.mxu0 %v1011
      %1021 = vmatpush.bf16.msra.mxu0 %v1010
      %1022 = vmatpush.bf16.msra.mxu0 %v1009
      %1023 = vmatpush.bf16.msra.mxu0 %v1008
      %1024 = vmatpush.bf16.msra.mxu0 %v1007
      %1025 = vmatpush.bf16.msra.mxu0 %v1006
      %1026 = vmatpush.bf16.msra.mxu0 %v1005
      %1027 = vmatpush.bf16.msra.mxu0 %v1004
      %1028 = vmatmul.bf16.gmra.mxu0 %v937
      %v1029 = vpop.f32.mrf.mxu0
      %v1030 = vadd.f32 0.0, %v1029
      %v1031 = vpop.f32.mrf.mxu0
      %v1032 = vadd.f32 0.0, %v1031
      %1033 = vmatmul.bf16.gmra.mxu0 %v938
      %v1034 = vpop.f32.mrf.mxu0
      %v1035 = vadd.f32 0.0, %v1034
      %v1036 = vpop.f32.mrf.mxu0
      %v1037 = vadd.f32 0.0, %v1036
      %1038 = vmatmul.bf16.gmra.mxu0 %v939
      %v1039 = vpop.f32.mrf.mxu0
      %v1040 = vadd.f32 0.0, %v1039
      %v1041 = vpop.f32.mrf.mxu0
      %v1042 = vadd.f32 0.0, %v1041
      %1043 = vmatmul.bf16.gmra.mxu0 %v940
      %v1044 = vpop.f32.mrf.mxu0
      %v1045 = vadd.f32 0.0, %v1044
      %v1046 = vpop.f32.mrf.mxu0
      %v1047 = vadd.f32 0.0, %v1046
      %1048 = vmatmul.bf16.gmra.mxu0 %v941
      %v1049 = vpop.f32.mrf.mxu0
      %v1050 = vadd.f32 0.0, %v1049
      %v1051 = vpop.f32.mrf.mxu0
      %v1052 = vadd.f32 0.0, %v1051
      %1053 = vmatmul.bf16.gmra.mxu0 %v942
      %v1054 = vpop.f32.mrf.mxu0
      %v1055 = vadd.f32 0.0, %v1054
      %v1056 = vpop.f32.mrf.mxu0
      %v1057 = vadd.f32 0.0, %v1056
      %1058 = vmatmul.bf16.gmra.mxu0 %v943
      %v1059 = vpop.f32.mrf.mxu0
      %v1060 = vadd.f32 0.0, %v1059
      %v1061 = vpop.f32.mrf.mxu0
      %v1062 = vadd.f32 0.0, %v1061
      %1063 = vmatmul.bf16.gmra.mxu0 %v944
      %v1064 = vpop.f32.mrf.mxu0
      %v1065 = vadd.f32 0.0, %v1064
      %v1066 = vpop.f32.mrf.mxu0
      %v1067 = vadd.f32 0.0, %v1066
      %1068 = vmatmul.bf16.gmra.mxu0 %v945
      %v1069 = vpop.f32.mrf.mxu0
      %v1070 = vadd.f32 0.0, %v1069
      %v1071 = vpop.f32.mrf.mxu0
      %v1072 = vadd.f32 0.0, %v1071
      %1073 = vmatmul.bf16.gmra.mxu0 %v946
      %v1074 = vpop.f32.mrf.mxu0
      %v1075 = vadd.f32 0.0, %v1074
      %v1076 = vpop.f32.mrf.mxu0
      %v1077 = vadd.f32 0.0, %v1076
      %1078 = vmatmul.bf16.gmra.mxu0 %v947
      %v1079 = vpop.f32.mrf.mxu0
      %v1080 = vadd.f32 0.0, %v1079
      %v1081 = vpop.f32.mrf.mxu0
      %v1082 = vadd.f32 0.0, %v1081
      %1083 = vmatmul.bf16.gmra.mxu0 %v948
      %v1084 = vpop.f32.mrf.mxu0
      %v1085 = vadd.f32 0.0, %v1084
      %v1086 = vpop.f32.mrf.mxu0
      %v1087 = vadd.f32 0.0, %v1086
      %1088 = vmatmul.bf16.gmra.mxu0 %v949
      %v1089 = vpop.f32.mrf.mxu0
      %v1090 = vadd.f32 0.0, %v1089
      %v1091 = vpop.f32.mrf.mxu0
      %v1092 = vadd.f32 0.0, %v1091
      %1093 = vmatmul.bf16.gmra.mxu0 %v950
      %v1094 = vpop.f32.mrf.mxu0
      %v1095 = vadd.f32 0.0, %v1094
      %v1096 = vpop.f32.mrf.mxu0
      %v1097 = vadd.f32 0.0, %v1096
      %1098 = vmatmul.bf16.gmra.mxu0 %v951
      %v1099 = vpop.f32.mrf.mxu0
      %v1100 = vadd.f32 0.0, %v1099
      %v1101 = vpop.f32.mrf.mxu0
      %v1102 = vadd.f32 0.0, %v1101
      %1103 = vmatmul.bf16.gmra.mxu0 %v952
      %v1104 = vpop.f32.mrf.mxu0
      %v1105 = vadd.f32 0.0, %v1104
      %v1106 = vpop.f32.mrf.mxu0
      %v1107 = vadd.f32 0.0, %v1106
      %1108 = vmatmul.bf16.gmra.mxu0 %v953
      %v1109 = vpop.f32.mrf.mxu0
      %v1110 = vadd.f32 0.0, %v1109
      %v1111 = vpop.f32.mrf.mxu0
      %v1112 = vadd.f32 0.0, %v1111
      %1113 = vmatmul.bf16.gmra.mxu0 %v954
      %v1114 = vpop.f32.mrf.mxu0
      %v1115 = vadd.f32 0.0, %v1114
      %v1116 = vpop.f32.mrf.mxu0
      %v1117 = vadd.f32 0.0, %v1116
      %1118 = vdwg.mxu0
      %v1135 = vunpack.c.l.b16 %v885
      %v1136 = vunpack.c.l.b16 %v886
      %v1137 = vunpack.c.l.b16 %v887
      %v1138 = vunpack.c.l.b16 %v888
      %v1139 = vunpack.c.l.b16 %v889
      %v1140 = vunpack.c.l.b16 %v890
      %v1141 = vunpack.c.l.b16 %v891
      %v1142 = vunpack.c.l.b16 %v892
      %v1143 = vunpack.c.l.b16 %v893
      %v1144 = vunpack.c.l.b16 %v894
      %v1145 = vunpack.c.l.b16 %v895
      %v1146 = vunpack.c.l.b16 %v896
      %v1147 = vunpack.c.l.b16 %v897
      %v1148 = vunpack.c.l.b16 %v898
      %v1149 = vunpack.c.l.b16 %v899
      %v1150 = vunpack.c.l.b16 %v900
      %v1151 = vpack.c.b16 %v1136, %v1135
      %v1152 = vpack.c.b16 %v1138, %v1137
      %v1153 = vpack.c.b16 %v1140, %v1139
      %v1154 = vpack.c.b16 %v1142, %v1141
      %v1155 = vpack.c.b16 %v1144, %v1143
      %v1156 = vpack.c.b16 %v1146, %v1145
      %v1157 = vpack.c.b16 %v1148, %v1147
      %v1158 = vpack.c.b16 %v1150, %v1149
      %1167 = vmatpush.bf16.msra.mxu0 %v1158
      %1168 = vmatpush.bf16.msra.mxu0 %v1157
      %1169 = vmatpush.bf16.msra.mxu0 %v1156
      %1170 = vmatpush.bf16.msra.mxu0 %v1155
      %1171 = vmatpush.bf16.msra.mxu0 %v1154
      %1172 = vmatpush.bf16.msra.mxu0 %v1153
      %1173 = vmatpush.bf16.msra.mxu0 %v1152
      %1174 = vmatpush.bf16.msra.mxu0 %v1151
      %1175 = vmatmul.bf16.gmra.mxu0 %v867
      %v1176 = vpop.f32.mrf.mxu0
      %v1177 = vadd.f32 %v1030, %v1176
      %v1178 = vpop.f32.mrf.mxu0
      %v1179 = vadd.f32 %v1032, %v1178
      %1180 = vmatmul.bf16.gmra.mxu0 %v868
      %v1181 = vpop.f32.mrf.mxu0
      %v1182 = vadd.f32 %v1035, %v1181
      %v1183 = vpop.f32.mrf.mxu0
      %v1184 = vadd.f32 %v1037, %v1183
      %1185 = vmatmul.bf16.gmra.mxu0 %v869
      %v1186 = vpop.f32.mrf.mxu0
      %v1187 = vadd.f32 %v1040, %v1186
      %v1188 = vpop.f32.mrf.mxu0
      %v1189 = vadd.f32 %v1042, %v1188
      %1190 = vmatmul.bf16.gmra.mxu0 %v870
      %v1191 = vpop.f32.mrf.mxu0
      %v1192 = vadd.f32 %v1045, %v1191
      %v1193 = vpop.f32.mrf.mxu0
      %v1194 = vadd.f32 %v1047, %v1193
      %1195 = vmatmul.bf16.gmra.mxu0 %v871
      %v1196 = vpop.f32.mrf.mxu0
      %v1197 = vadd.f32 %v1050, %v1196
      %v1198 = vpop.f32.mrf.mxu0
      %v1199 = vadd.f32 %v1052, %v1198
      %1200 = vmatmul.bf16.gmra.mxu0 %v872
      %v1201 = vpop.f32.mrf.mxu0
      %v1202 = vadd.f32 %v1055, %v1201
      %v1203 = vpop.f32.mrf.mxu0
      %v1204 = vadd.f32 %v1057, %v1203
      %1205 = vmatmul.bf16.gmra.mxu0 %v873
      %v1206 = vpop.f32.mrf.mxu0
      %v1207 = vadd.f32 %v1060, %v1206
      %v1208 = vpop.f32.mrf.mxu0
      %v1209 = vadd.f32 %v1062, %v1208
      %1210 = vmatmul.bf16.gmra.mxu0 %v874
      %v1211 = vpop.f32.mrf.mxu0
      %v1212 = vadd.f32 %v1065, %v1211
      %v1213 = vpop.f32.mrf.mxu0
      %v1214 = vadd.f32 %v1067, %v1213
      %1215 = vmatmul.bf16.gmra.mxu0 %v875
      %v1216 = vpop.f32.mrf.mxu0
      %v1217 = vadd.f32 %v1070, %v1216
      %v1218 = vpop.f32.mrf.mxu0
      %v1219 = vadd.f32 %v1072, %v1218
      %1220 = vmatmul.bf16.gmra.mxu0 %v876
      %v1221 = vpop.f32.mrf.mxu0
      %v1222 = vadd.f32 %v1075, %v1221
      %v1223 = vpop.f32.mrf.mxu0
      %v1224 = vadd.f32 %v1077, %v1223
      %1225 = vmatmul.bf16.gmra.mxu0 %v877
      %v1226 = vpop.f32.mrf.mxu0
      %v1227 = vadd.f32 %v1080, %v1226
      %v1228 = vpop.f32.mrf.mxu0
      %v1229 = vadd.f32 %v1082, %v1228
      %1230 = vmatmul.bf16.gmra.mxu0 %v878
      %v1231 = vpop.f32.mrf.mxu0
      %v1232 = vadd.f32 %v1085, %v1231
      %v1233 = vpop.f32.mrf.mxu0
      %v1234 = vadd.f32 %v1087, %v1233
      %1235 = vmatmul.bf16.gmra.mxu0 %v879
      %v1236 = vpop.f32.mrf.mxu0
      %v1237 = vadd.f32 %v1090, %v1236
      %v1238 = vpop.f32.mrf.mxu0
      %v1239 = vadd.f32 %v1092, %v1238
      %1240 = vmatmul.bf16.gmra.mxu0 %v880
      %v1241 = vpop.f32.mrf.mxu0
      %v1242 = vadd.f32 %v1095, %v1241
      %v1243 = vpop.f32.mrf.mxu0
      %v1244 = vadd.f32 %v1097, %v1243
      %1245 = vmatmul.bf16.gmra.mxu0 %v881
      %v1246 = vpop.f32.mrf.mxu0
      %v1247 = vadd.f32 %v1100, %v1246
      %v1248 = vpop.f32.mrf.mxu0
      %v1249 = vadd.f32 %v1102, %v1248
      %1250 = vmatmul.bf16.gmra.mxu0 %v882
      %v1251 = vpop.f32.mrf.mxu0
      %v1252 = vadd.f32 %v1105, %v1251
      %v1253 = vpop.f32.mrf.mxu0
      %v1254 = vadd.f32 %v1107, %v1253
      %1255 = vmatmul.bf16.gmra.mxu0 %v883
      %v1256 = vpop.f32.mrf.mxu0
      %v1257 = vadd.f32 %v1110, %v1256
      %v1258 = vpop.f32.mrf.mxu0
      %v1259 = vadd.f32 %v1112, %v1258
      %1260 = vmatmul.bf16.gmra.mxu0 %v884
      %v1261 = vpop.f32.mrf.mxu0
      %v1262 = vadd.f32 %v1115, %v1261
      %v1263 = vpop.f32.mrf.mxu0
      %v1264 = vadd.f32 %v1117, %v1263
      %1265 = vdwg.mxu0
      %v1266 = vld [vmem:[#allocation2 + $0x2] sm:$0xff]
      %v1267 = vld [vmem:[#allocation2 + $0xa] sm:$0xff]
      %v1268 = vld [vmem:[#allocation2 + $0x12] sm:$0xff]
      %v1269 = vld [vmem:[#allocation2 + $0x1a] sm:$0xff]
      %v1270 = vld [vmem:[#allocation2 + $0x22] sm:$0xff]
      %v1271 = vld [vmem:[#allocation2 + $0x2a] sm:$0xff]
      %v1272 = vld [vmem:[#allocation2 + $0x32] sm:$0xff]
      %v1273 = vld [vmem:[#allocation2 + $0x3a] sm:$0xff]
      %v1274 = vld [vmem:[#allocation2 + $0x42] sm:$0xff]
      %v1275 = vld [vmem:[#allocation2 + $0x4a] sm:$0xff]
      %v1276 = vld [vmem:[#allocation2 + $0x52] sm:$0xff]
      %v1277 = vld [vmem:[#allocation2 + $0x5a] sm:$0xff]
      %v1278 = vld [vmem:[#allocation2 + $0x62] sm:$0xff]
      %v1279 = vld [vmem:[#allocation2 + $0x6a] sm:$0xff]
      %v1280 = vld [vmem:[#allocation2 + $0x72] sm:$0xff]
      %v1281 = vld [vmem:[#allocation2 + $0x7a] sm:$0xff]
      %v1282 = vld [vmem:[#allocation2 + $0x82] sm:$0xff]
      %v1283 = vld [vmem:[#allocation2 + $0x8a] sm:$0xff]
      %v1284 = vld [vmem:[#allocation2 + $0x92] sm:$0xff]
      %v1285 = vld [vmem:[#allocation2 + $0x9a] sm:$0xff]
      %v1286 = vld [vmem:[#allocation2 + $0xa2] sm:$0xff]
      %v1287 = vld [vmem:[#allocation2 + $0xaa] sm:$0xff]
      %v1288 = vld [vmem:[#allocation2 + $0xb2] sm:$0xff]
      %v1289 = vld [vmem:[#allocation2 + $0xba] sm:$0xff]
      %v1290 = vld [vmem:[#allocation2 + $0xc2] sm:$0xff]
      %v1291 = vld [vmem:[#allocation2 + $0xca] sm:$0xff]
      %v1292 = vld [vmem:[#allocation2 + $0xd2] sm:$0xff]
      %v1293 = vld [vmem:[#allocation2 + $0xda] sm:$0xff]
      %v1294 = vld [vmem:[#allocation2 + $0xe2] sm:$0xff]
      %v1295 = vld [vmem:[#allocation2 + $0xea] sm:$0xff]
      %v1296 = vld [vmem:[#allocation2 + $0xf2] sm:$0xff]
      %v1297 = vld [vmem:[#allocation2 + $0xfa] sm:$0xff]
      %v1298 = vld [vmem:[#allocation2 + $0x102] sm:$0xff]
      %v1299 = vld [vmem:[#allocation2 + $0x10a] sm:$0xff]
      %v1300 = vld [vmem:[#allocation2 + $0x112] sm:$0xff]
      %v1301 = vld [vmem:[#allocation2 + $0x11a] sm:$0xff]
      %v1302 = vpack.c.bf16 %v1267, %v1266
      %v1303 = vpack.c.bf16 %v1269, %v1268
      %v1304 = vpack.c.bf16 %v1271, %v1270
      %v1305 = vpack.c.bf16 %v1273, %v1272
      %v1306 = vpack.c.bf16 %v1275, %v1274
      %v1307 = vpack.c.bf16 %v1277, %v1276
      %v1308 = vpack.c.bf16 %v1279, %v1278
      %v1309 = vpack.c.bf16 %v1281, %v1280
      %v1310 = vpack.c.bf16 %v1283, %v1282
      %v1311 = vpack.c.bf16 %v1285, %v1284
      %v1312 = vpack.c.bf16 %v1287, %v1286
      %v1313 = vpack.c.bf16 %v1289, %v1288
      %v1314 = vpack.c.bf16 %v1291, %v1290
      %v1315 = vpack.c.bf16 %v1293, %v1292
      %v1316 = vpack.c.bf16 %v1295, %v1294
      %v1317 = vpack.c.bf16 %v1297, %v1296
      %v1318 = vpack.c.bf16 %v1299, %v1298
      %v1319 = vpack.c.bf16 %v1301, %v1300
      %s1320 = scalar_lea.vmem %s5, 128
      %v1321 = vld [vmem:[%s1320] sm:$0xf]
      %v1322 = vld [vmem:[%s1320 + $0x4] sm:$0xf]
      %v1323 = vld [vmem:[%s1320 + $0x8] sm:$0xf]
      %v1324 = vld [vmem:[%s1320 + $0xc] sm:$0xf]
      %v1325 = vld [vmem:[%s1320 + $0x10] sm:$0xf]
      %v1326 = vld [vmem:[%s1320 + $0x14] sm:$0xf]
      %v1327 = vld [vmem:[%s1320 + $0x18] sm:$0xf]
      %v1328 = vld [vmem:[%s1320 + $0x1c] sm:$0xf]
      %v1329 = vld [vmem:[%s1320 + $0x20] sm:$0xf]
      %v1330 = vld [vmem:[%s1320 + $0x24] sm:$0xf]
      %v1331 = vld [vmem:[%s1320 + $0x28] sm:$0xf]
      %v1332 = vld [vmem:[%s1320 + $0x2c] sm:$0xf]
      %v1333 = vld [vmem:[%s1320 + $0x30] sm:$0xf]
      %v1334 = vld [vmem:[%s1320 + $0x34] sm:$0xf]
      %v1335 = vld [vmem:[%s1320 + $0x38] sm:$0xf]
      %v1336 = vld [vmem:[%s1320 + $0x3c] sm:$0xf]
      %v1353 = vunpack.c.l.b16 %v1321
      %v1354 = vunpack.c.l.b16 %v1322
      %v1355 = vunpack.c.l.b16 %v1323
      %v1356 = vunpack.c.l.b16 %v1324
      %v1357 = vunpack.c.l.b16 %v1325
      %v1358 = vunpack.c.l.b16 %v1326
      %v1359 = vunpack.c.l.b16 %v1327
      %v1360 = vunpack.c.l.b16 %v1328
      %v1361 = vunpack.c.l.b16 %v1329
      %v1362 = vunpack.c.l.b16 %v1330
      %v1363 = vunpack.c.l.b16 %v1331
      %v1364 = vunpack.c.l.b16 %v1332
      %v1365 = vunpack.c.l.b16 %v1333
      %v1366 = vunpack.c.l.b16 %v1334
      %v1367 = vunpack.c.l.b16 %v1335
      %v1368 = vunpack.c.l.b16 %v1336
      %v1369 = vpack.c.b16 %v1354, %v1353
      %v1370 = vpack.c.b16 %v1356, %v1355
      %v1371 = vpack.c.b16 %v1358, %v1357
      %v1372 = vpack.c.b16 %v1360, %v1359
      %v1373 = vpack.c.b16 %v1362, %v1361
      %v1374 = vpack.c.b16 %v1364, %v1363
      %v1375 = vpack.c.b16 %v1366, %v1365
      %v1376 = vpack.c.b16 %v1368, %v1367
      %1385 = vmatpush.bf16.msra.mxu0 %v1376
      %1386 = vmatpush.bf16.msra.mxu0 %v1375
      %1387 = vmatpush.bf16.msra.mxu0 %v1374
      %1388 = vmatpush.bf16.msra.mxu0 %v1373
      %1389 = vmatpush.bf16.msra.mxu0 %v1372
      %1390 = vmatpush.bf16.msra.mxu0 %v1371
      %1391 = vmatpush.bf16.msra.mxu0 %v1370
      %1392 = vmatpush.bf16.msra.mxu0 %v1369
      %1393 = vmatmul.bf16.gmra.mxu0 %v1302
      %v1394 = vpop.f32.mrf.mxu0
      %v1395 = vadd.f32 0.0, %v1394
      %v1396 = vpop.f32.mrf.mxu0
      %v1397 = vadd.f32 0.0, %v1396
      %1398 = vmatmul.bf16.gmra.mxu0 %v1303
      %v1399 = vpop.f32.mrf.mxu0
      %v1400 = vadd.f32 0.0, %v1399
      %v1401 = vpop.f32.mrf.mxu0
      %v1402 = vadd.f32 0.0, %v1401
      %1403 = vmatmul.bf16.gmra.mxu0 %v1304
      %v1404 = vpop.f32.mrf.mxu0
      %v1405 = vadd.f32 0.0, %v1404
      %v1406 = vpop.f32.mrf.mxu0
      %v1407 = vadd.f32 0.0, %v1406
      %1408 = vmatmul.bf16.gmra.mxu0 %v1305
      %v1409 = vpop.f32.mrf.mxu0
      %v1410 = vadd.f32 0.0, %v1409
      %v1411 = vpop.f32.mrf.mxu0
      %v1412 = vadd.f32 0.0, %v1411
      %1413 = vmatmul.bf16.gmra.mxu0 %v1306
      %v1414 = vpop.f32.mrf.mxu0
      %v1415 = vadd.f32 0.0, %v1414
      %v1416 = vpop.f32.mrf.mxu0
      %v1417 = vadd.f32 0.0, %v1416
      %1418 = vmatmul.bf16.gmra.mxu0 %v1307
      %v1419 = vpop.f32.mrf.mxu0
      %v1420 = vadd.f32 0.0, %v1419
      %v1421 = vpop.f32.mrf.mxu0
      %v1422 = vadd.f32 0.0, %v1421
      %1423 = vmatmul.bf16.gmra.mxu0 %v1308
      %v1424 = vpop.f32.mrf.mxu0
      %v1425 = vadd.f32 0.0, %v1424
      %v1426 = vpop.f32.mrf.mxu0
      %v1427 = vadd.f32 0.0, %v1426
      %1428 = vmatmul.bf16.gmra.mxu0 %v1309
      %v1429 = vpop.f32.mrf.mxu0
      %v1430 = vadd.f32 0.0, %v1429
      %v1431 = vpop.f32.mrf.mxu0
      %v1432 = vadd.f32 0.0, %v1431
      %1433 = vmatmul.bf16.gmra.mxu0 %v1310
      %v1434 = vpop.f32.mrf.mxu0
      %v1435 = vadd.f32 0.0, %v1434
      %v1436 = vpop.f32.mrf.mxu0
      %v1437 = vadd.f32 0.0, %v1436
      %1438 = vmatmul.bf16.gmra.mxu0 %v1311
      %v1439 = vpop.f32.mrf.mxu0
      %v1440 = vadd.f32 0.0, %v1439
      %v1441 = vpop.f32.mrf.mxu0
      %v1442 = vadd.f32 0.0, %v1441
      %1443 = vmatmul.bf16.gmra.mxu0 %v1312
      %v1444 = vpop.f32.mrf.mxu0
      %v1445 = vadd.f32 0.0, %v1444
      %v1446 = vpop.f32.mrf.mxu0
      %v1447 = vadd.f32 0.0, %v1446
      %1448 = vmatmul.bf16.gmra.mxu0 %v1313
      %v1449 = vpop.f32.mrf.mxu0
      %v1450 = vadd.f32 0.0, %v1449
      %v1451 = vpop.f32.mrf.mxu0
      %v1452 = vadd.f32 0.0, %v1451
      %1453 = vmatmul.bf16.gmra.mxu0 %v1314
      %v1454 = vpop.f32.mrf.mxu0
      %v1455 = vadd.f32 0.0, %v1454
      %v1456 = vpop.f32.mrf.mxu0
      %v1457 = vadd.f32 0.0, %v1456
      %1458 = vmatmul.bf16.gmra.mxu0 %v1315
      %v1459 = vpop.f32.mrf.mxu0
      %v1460 = vadd.f32 0.0, %v1459
      %v1461 = vpop.f32.mrf.mxu0
      %v1462 = vadd.f32 0.0, %v1461
      %1463 = vmatmul.bf16.gmra.mxu0 %v1316
      %v1464 = vpop.f32.mrf.mxu0
      %v1465 = vadd.f32 0.0, %v1464
      %v1466 = vpop.f32.mrf.mxu0
      %v1467 = vadd.f32 0.0, %v1466
      %1468 = vmatmul.bf16.gmra.mxu0 %v1317
      %v1469 = vpop.f32.mrf.mxu0
      %v1470 = vadd.f32 0.0, %v1469
      %v1471 = vpop.f32.mrf.mxu0
      %v1472 = vadd.f32 0.0, %v1471
      %1473 = vmatmul.bf16.gmra.mxu0 %v1318
      %v1474 = vpop.f32.mrf.mxu0
      %v1475 = vadd.f32 0.0, %v1474
      %v1476 = vpop.f32.mrf.mxu0
      %v1477 = vadd.f32 0.0, %v1476
      %1478 = vmatmul.bf16.gmra.mxu0 %v1319
      %v1479 = vpop.f32.mrf.mxu0
      %v1480 = vadd.f32 0.0, %v1479
      %v1481 = vpop.f32.mrf.mxu0
      %v1482 = vadd.f32 0.0, %v1481
      %1483 = vdwg.mxu0
      %v1484 = vadd.f32 %v1177, %v1395
      %v1485 = vadd.f32 %v1179, %v1397
      %v1486 = vadd.f32 %v1182, %v1400
      %v1487 = vadd.f32 %v1184, %v1402
      %v1488 = vadd.f32 %v1187, %v1405
      %v1489 = vadd.f32 %v1189, %v1407
      %v1490 = vadd.f32 %v1192, %v1410
      %v1491 = vadd.f32 %v1194, %v1412
      %v1492 = vadd.f32 %v1197, %v1415
      %v1493 = vadd.f32 %v1199, %v1417
      %v1494 = vadd.f32 %v1202, %v1420
      %v1495 = vadd.f32 %v1204, %v1422
      %v1496 = vadd.f32 %v1207, %v1425
      %v1497 = vadd.f32 %v1209, %v1427
      %v1498 = vadd.f32 %v1212, %v1430
      %v1499 = vadd.f32 %v1214, %v1432
      %v1500 = vadd.f32 %v1217, %v1435
      %v1501 = vadd.f32 %v1219, %v1437
      %v1502 = vadd.f32 %v1222, %v1440
      %v1503 = vadd.f32 %v1224, %v1442
      %v1504 = vadd.f32 %v1227, %v1445
      %v1505 = vadd.f32 %v1229, %v1447
      %v1506 = vadd.f32 %v1232, %v1450
      %v1507 = vadd.f32 %v1234, %v1452
      %v1508 = vadd.f32 %v1237, %v1455
      %v1509 = vadd.f32 %v1239, %v1457
      %v1510 = vadd.f32 %v1242, %v1460
      %v1511 = vadd.f32 %v1244, %v1462
      %v1512 = vadd.f32 %v1247, %v1465
      %v1513 = vadd.f32 %v1249, %v1467
      %v1514 = vadd.f32 %v1252, %v1470
      %v1515 = vadd.f32 %v1254, %v1472
      %v1516 = vadd.f32 %v1257, %v1475
      %v1517 = vadd.f32 %v1259, %v1477
      %v1518 = vadd.f32 %v1262, %v1480
      %v1519 = vadd.f32 %v1264, %v1482
      %v1520 = vld [vmem:[#allocation2 + $0x12] sm:$0xff]
      %v1521 = vld [vmem:[#allocation2 + $0x1a] sm:$0xff]
      %v1522 = vld [vmem:[#allocation2 + $0x22] sm:$0xff]
      %v1523 = vld [vmem:[#allocation2 + $0x2a] sm:$0xff]
      %v1524 = vld [vmem:[#allocation2 + $0x32] sm:$0xff]
      %v1525 = vld [vmem:[#allocation2 + $0x3a] sm:$0xff]
      %v1526 = vld [vmem:[#allocation2 + $0x42] sm:$0xff]
      %v1527 = vld [vmem:[#allocation2 + $0x4a] sm:$0xff]
      %v1528 = vld [vmem:[#allocation2 + $0x52] sm:$0xff]
      %v1529 = vld [vmem:[#allocation2 + $0x5a] sm:$0xff]
      %v1530 = vld [vmem:[#allocation2 + $0x62] sm:$0xff]
      %v1531 = vld [vmem:[#allocation2 + $0x6a] sm:$0xff]
      %v1532 = vld [vmem:[#allocation2 + $0x72] sm:$0xff]
      %v1533 = vld [vmem:[#allocation2 + $0x7a] sm:$0xff]
      %v1534 = vld [vmem:[#allocation2 + $0x82] sm:$0xff]
      %v1535 = vld [vmem:[#allocation2 + $0x8a] sm:$0xff]
      %v1536 = vld [vmem:[#allocation2 + $0x92] sm:$0xff]
      %v1537 = vld [vmem:[#allocation2 + $0x9a] sm:$0xff]
      %v1538 = vld [vmem:[#allocation2 + $0xa2] sm:$0xff]
      %v1539 = vld [vmem:[#allocation2 + $0xaa] sm:$0xff]
      %v1540 = vld [vmem:[#allocation2 + $0xb2] sm:$0xff]
      %v1541 = vld [vmem:[#allocation2 + $0xba] sm:$0xff]
      %v1542 = vld [vmem:[#allocation2 + $0xc2] sm:$0xff]
      %v1543 = vld [vmem:[#allocation2 + $0xca] sm:$0xff]
      %v1544 = vld [vmem:[#allocation2 + $0xd2] sm:$0xff]
      %v1545 = vld [vmem:[#allocation2 + $0xda] sm:$0xff]
      %v1546 = vld [vmem:[#allocation2 + $0xe2] sm:$0xff]
      %v1547 = vld [vmem:[#allocation2 + $0xea] sm:$0xff]
      %v1548 = vld [vmem:[#allocation2 + $0xf2] sm:$0xff]
      %v1549 = vld [vmem:[#allocation2 + $0xfa] sm:$0xff]
      %v1550 = vld [vmem:[#allocation2 + $0x102] sm:$0xff]
      %v1551 = vld [vmem:[#allocation2 + $0x10a] sm:$0xff]
      %v1552 = vld [vmem:[#allocation2 + $0x112] sm:$0xff]
      %v1553 = vld [vmem:[#allocation2 + $0x11a] sm:$0xff]
      %v1554 = vld [vmem:[#allocation2 + $0x122] sm:$0xff]
      %v1555 = vld [vmem:[#allocation2 + $0x12a] sm:$0xff]
      %v1556 = vpack.c.bf16 %v1521, %v1520
      %v1557 = vpack.c.bf16 %v1523, %v1522
      %v1558 = vpack.c.bf16 %v1525, %v1524
      %v1559 = vpack.c.bf16 %v1527, %v1526
      %v1560 = vpack.c.bf16 %v1529, %v1528
      %v1561 = vpack.c.bf16 %v1531, %v1530
      %v1562 = vpack.c.bf16 %v1533, %v1532
      %v1563 = vpack.c.bf16 %v1535, %v1534
      %v1564 = vpack.c.bf16 %v1537, %v1536
      %v1565 = vpack.c.bf16 %v1539, %v1538
      %v1566 = vpack.c.bf16 %v1541, %v1540
      %v1567 = vpack.c.bf16 %v1543, %v1542
      %v1568 = vpack.c.bf16 %v1545, %v1544
      %v1569 = vpack.c.bf16 %v1547, %v1546
      %v1570 = vpack.c.bf16 %v1549, %v1548
      %v1571 = vpack.c.bf16 %v1551, %v1550
      %v1572 = vpack.c.bf16 %v1553, %v1552
      %v1573 = vpack.c.bf16 %v1555, %v1554
      %s1574 = scalar_lea.vmem %s5, 192
      %v1575 = vld [vmem:[%s1574] sm:$0xf]
      %v1576 = vld [vmem:[%s1574 + $0x4] sm:$0xf]
      %v1577 = vld [vmem:[%s1574 + $0x8] sm:$0xf]
      %v1578 = vld [vmem:[%s1574 + $0xc] sm:$0xf]
      %v1579 = vld [vmem:[%s1574 + $0x10] sm:$0xf]
      %v1580 = vld [vmem:[%s1574 + $0x14] sm:$0xf]
      %v1581 = vld [vmem:[%s1574 + $0x18] sm:$0xf]
      %v1582 = vld [vmem:[%s1574 + $0x1c] sm:$0xf]
      %v1583 = vld [vmem:[%s1574 + $0x20] sm:$0xf]
      %v1584 = vld [vmem:[%s1574 + $0x24] sm:$0xf]
      %v1585 = vld [vmem:[%s1574 + $0x28] sm:$0xf]
      %v1586 = vld [vmem:[%s1574 + $0x2c] sm:$0xf]
      %v1587 = vld [vmem:[%s1574 + $0x30] sm:$0xf]
      %v1588 = vld [vmem:[%s1574 + $0x34] sm:$0xf]
      %v1589 = vld [vmem:[%s1574 + $0x38] sm:$0xf]
      %v1590 = vld [vmem:[%s1574 + $0x3c] sm:$0xf]
      %v1607 = vunpack.c.l.b16 %v1575
      %v1608 = vunpack.c.l.b16 %v1576
      %v1609 = vunpack.c.l.b16 %v1577
      %v1610 = vunpack.c.l.b16 %v1578
      %v1611 = vunpack.c.l.b16 %v1579
      %v1612 = vunpack.c.l.b16 %v1580
      %v1613 = vunpack.c.l.b16 %v1581
      %v1614 = vunpack.c.l.b16 %v1582
      %v1615 = vunpack.c.l.b16 %v1583
      %v1616 = vunpack.c.l.b16 %v1584
      %v1617 = vunpack.c.l.b16 %v1585
      %v1618 = vunpack.c.l.b16 %v1586
      %v1619 = vunpack.c.l.b16 %v1587
      %v1620 = vunpack.c.l.b16 %v1588
      %v1621 = vunpack.c.l.b16 %v1589
      %v1622 = vunpack.c.l.b16 %v1590
      %v1623 = vpack.c.b16 %v1608, %v1607
      %v1624 = vpack.c.b16 %v1610, %v1609
      %v1625 = vpack.c.b16 %v1612, %v1611
      %v1626 = vpack.c.b16 %v1614, %v1613
      %v1627 = vpack.c.b16 %v1616, %v1615
      %v1628 = vpack.c.b16 %v1618, %v1617
      %v1629 = vpack.c.b16 %v1620, %v1619
      %v1630 = vpack.c.b16 %v1622, %v1621
      %1639 = vmatpush.bf16.msra.mxu0 %v1630
      %1640 = vmatpush.bf16.msra.mxu0 %v1629
      %1641 = vmatpush.bf16.msra.mxu0 %v1628
      %1642 = vmatpush.bf16.msra.mxu0 %v1627
      %1643 = vmatpush.bf16.msra.mxu0 %v1626
      %1644 = vmatpush.bf16.msra.mxu0 %v1625
      %1645 = vmatpush.bf16.msra.mxu0 %v1624
      %1646 = vmatpush.bf16.msra.mxu0 %v1623
      %1647 = vmatmul.bf16.gmra.mxu0 %v1556
      %v1648 = vpop.f32.mrf.mxu0
      %v1649 = vadd.f32 0.0, %v1648
      %v1650 = vpop.f32.mrf.mxu0
      %v1651 = vadd.f32 0.0, %v1650
      %1652 = vmatmul.bf16.gmra.mxu0 %v1557
      %v1653 = vpop.f32.mrf.mxu0
      %v1654 = vadd.f32 0.0, %v1653
      %v1655 = vpop.f32.mrf.mxu0
      %v1656 = vadd.f32 0.0, %v1655
      %1657 = vmatmul.bf16.gmra.mxu0 %v1558
      %v1658 = vpop.f32.mrf.mxu0
      %v1659 = vadd.f32 0.0, %v1658
      %v1660 = vpop.f32.mrf.mxu0
      %v1661 = vadd.f32 0.0, %v1660
      %1662 = vmatmul.bf16.gmra.mxu0 %v1559
      %v1663 = vpop.f32.mrf.mxu0
      %v1664 = vadd.f32 0.0, %v1663
      %v1665 = vpop.f32.mrf.mxu0
      %v1666 = vadd.f32 0.0, %v1665
      %1667 = vmatmul.bf16.gmra.mxu0 %v1560
      %v1668 = vpop.f32.mrf.mxu0
      %v1669 = vadd.f32 0.0, %v1668
      %v1670 = vpop.f32.mrf.mxu0
      %v1671 = vadd.f32 0.0, %v1670
      %1672 = vmatmul.bf16.gmra.mxu0 %v1561
      %v1673 = vpop.f32.mrf.mxu0
      %v1674 = vadd.f32 0.0, %v1673
      %v1675 = vpop.f32.mrf.mxu0
      %v1676 = vadd.f32 0.0, %v1675
      %1677 = vmatmul.bf16.gmra.mxu0 %v1562
      %v1678 = vpop.f32.mrf.mxu0
      %v1679 = vadd.f32 0.0, %v1678
      %v1680 = vpop.f32.mrf.mxu0
      %v1681 = vadd.f32 0.0, %v1680
      %1682 = vmatmul.bf16.gmra.mxu0 %v1563
      %v1683 = vpop.f32.mrf.mxu0
      %v1684 = vadd.f32 0.0, %v1683
      %v1685 = vpop.f32.mrf.mxu0
      %v1686 = vadd.f32 0.0, %v1685
      %1687 = vmatmul.bf16.gmra.mxu0 %v1564
      %v1688 = vpop.f32.mrf.mxu0
      %v1689 = vadd.f32 0.0, %v1688
      %v1690 = vpop.f32.mrf.mxu0
      %v1691 = vadd.f32 0.0, %v1690
      %1692 = vmatmul.bf16.gmra.mxu0 %v1565
      %v1693 = vpop.f32.mrf.mxu0
      %v1694 = vadd.f32 0.0, %v1693
      %v1695 = vpop.f32.mrf.mxu0
      %v1696 = vadd.f32 0.0, %v1695
      %1697 = vmatmul.bf16.gmra.mxu0 %v1566
      %v1698 = vpop.f32.mrf.mxu0
      %v1699 = vadd.f32 0.0, %v1698
      %v1700 = vpop.f32.mrf.mxu0
      %v1701 = vadd.f32 0.0, %v1700
      %1702 = vmatmul.bf16.gmra.mxu0 %v1567
      %v1703 = vpop.f32.mrf.mxu0
      %v1704 = vadd.f32 0.0, %v1703
      %v1705 = vpop.f32.mrf.mxu0
      %v1706 = vadd.f32 0.0, %v1705
      %1707 = vmatmul.bf16.gmra.mxu0 %v1568
      %v1708 = vpop.f32.mrf.mxu0
      %v1709 = vadd.f32 0.0, %v1708
      %v1710 = vpop.f32.mrf.mxu0
      %v1711 = vadd.f32 0.0, %v1710
      %1712 = vmatmul.bf16.gmra.mxu0 %v1569
      %v1713 = vpop.f32.mrf.mxu0
      %v1714 = vadd.f32 0.0, %v1713
      %v1715 = vpop.f32.mrf.mxu0
      %v1716 = vadd.f32 0.0, %v1715
      %1717 = vmatmul.bf16.gmra.mxu0 %v1570
      %v1718 = vpop.f32.mrf.mxu0
      %v1719 = vadd.f32 0.0, %v1718
      %v1720 = vpop.f32.mrf.mxu0
      %v1721 = vadd.f32 0.0, %v1720
      %1722 = vmatmul.bf16.gmra.mxu0 %v1571
      %v1723 = vpop.f32.mrf.mxu0
      %v1724 = vadd.f32 0.0, %v1723
      %v1725 = vpop.f32.mrf.mxu0
      %v1726 = vadd.f32 0.0, %v1725
      %1727 = vmatmul.bf16.gmra.mxu0 %v1572
      %v1728 = vpop.f32.mrf.mxu0
      %v1729 = vadd.f32 0.0, %v1728
      %v1730 = vpop.f32.mrf.mxu0
      %v1731 = vadd.f32 0.0, %v1730
      %1732 = vmatmul.bf16.gmra.mxu0 %v1573
      %v1733 = vpop.f32.mrf.mxu0
      %v1734 = vadd.f32 0.0, %v1733
      %v1735 = vpop.f32.mrf.mxu0
      %v1736 = vadd.f32 0.0, %v1735
      %1737 = vdwg.mxu0
      %v1738 = vadd.f32 %v1484, %v1649
      %v1739 = vadd.f32 %v1485, %v1651
      %v1740 = vadd.f32 %v1486, %v1654
      %v1741 = vadd.f32 %v1487, %v1656
      %v1742 = vadd.f32 %v1488, %v1659
      %v1743 = vadd.f32 %v1489, %v1661
      %v1744 = vadd.f32 %v1490, %v1664
      %v1745 = vadd.f32 %v1491, %v1666
      %v1746 = vadd.f32 %v1492, %v1669
      %v1747 = vadd.f32 %v1493, %v1671
      %v1748 = vadd.f32 %v1494, %v1674
      %v1749 = vadd.f32 %v1495, %v1676
      %v1750 = vadd.f32 %v1496, %v1679
      %v1751 = vadd.f32 %v1497, %v1681
      %v1752 = vadd.f32 %v1498, %v1684
      %v1753 = vadd.f32 %v1499, %v1686
      %v1754 = vadd.f32 %v1500, %v1689
      %v1755 = vadd.f32 %v1501, %v1691
      %v1756 = vadd.f32 %v1502, %v1694
      %v1757 = vadd.f32 %v1503, %v1696
      %v1758 = vadd.f32 %v1504, %v1699
      %v1759 = vadd.f32 %v1505, %v1701
      %v1760 = vadd.f32 %v1506, %v1704
      %v1761 = vadd.f32 %v1507, %v1706
      %v1762 = vadd.f32 %v1508, %v1709
      %v1763 = vadd.f32 %v1509, %v1711
      %v1764 = vadd.f32 %v1510, %v1714
      %v1765 = vadd.f32 %v1511, %v1716
      %v1766 = vadd.f32 %v1512, %v1719
      %v1767 = vadd.f32 %v1513, %v1721
      %v1768 = vadd.f32 %v1514, %v1724
      %v1769 = vadd.f32 %v1515, %v1726
      %v1770 = vadd.f32 %v1516, %v1729
      %v1771 = vadd.f32 %v1517, %v1731
      %v1772 = vadd.f32 %v1518, %v1734
      %v1773 = vadd.f32 %v1519, %v1736
      %v1774 = vld [vmem:[#allocation2 + $0x13] sm:$0xff]
      %v1775 = vld [vmem:[#allocation2 + $0x1b] sm:$0xff]
      %v1776 = vld [vmem:[#allocation2 + $0x23] sm:$0xff]
      %v1777 = vld [vmem:[#allocation2 + $0x2b] sm:$0xff]
      %v1778 = vld [vmem:[#allocation2 + $0x33] sm:$0xff]
      %v1779 = vld [vmem:[#allocation2 + $0x3b] sm:$0xff]
      %v1780 = vld [vmem:[#allocation2 + $0x43] sm:$0xff]
      %v1781 = vld [vmem:[#allocation2 + $0x4b] sm:$0xff]
      %v1782 = vld [vmem:[#allocation2 + $0x53] sm:$0xff]
      %v1783 = vld [vmem:[#allocation2 + $0x5b] sm:$0xff]
      %v1784 = vld [vmem:[#allocation2 + $0x63] sm:$0xff]
      %v1785 = vld [vmem:[#allocation2 + $0x6b] sm:$0xff]
      %v1786 = vld [vmem:[#allocation2 + $0x73] sm:$0xff]
      %v1787 = vld [vmem:[#allocation2 + $0x7b] sm:$0xff]
      %v1788 = vld [vmem:[#allocation2 + $0x83] sm:$0xff]
      %v1789 = vld [vmem:[#allocation2 + $0x8b] sm:$0xff]
      %v1790 = vld [vmem:[#allocation2 + $0x93] sm:$0xff]
      %v1791 = vld [vmem:[#allocation2 + $0x9b] sm:$0xff]
      %v1792 = vld [vmem:[#allocation2 + $0xa3] sm:$0xff]
      %v1793 = vld [vmem:[#allocation2 + $0xab] sm:$0xff]
      %v1794 = vld [vmem:[#allocation2 + $0xb3] sm:$0xff]
      %v1795 = vld [vmem:[#allocation2 + $0xbb] sm:$0xff]
      %v1796 = vld [vmem:[#allocation2 + $0xc3] sm:$0xff]
      %v1797 = vld [vmem:[#allocation2 + $0xcb] sm:$0xff]
      %v1798 = vld [vmem:[#allocation2 + $0xd3] sm:$0xff]
      %v1799 = vld [vmem:[#allocation2 + $0xdb] sm:$0xff]
      %v1800 = vld [vmem:[#allocation2 + $0xe3] sm:$0xff]
      %v1801 = vld [vmem:[#allocation2 + $0xeb] sm:$0xff]
      %v1802 = vld [vmem:[#allocation2 + $0xf3] sm:$0xff]
      %v1803 = vld [vmem:[#allocation2 + $0xfb] sm:$0xff]
      %v1804 = vld [vmem:[#allocation2 + $0x103] sm:$0xff]
      %v1805 = vld [vmem:[#allocation2 + $0x10b] sm:$0xff]
      %v1806 = vld [vmem:[#allocation2 + $0x113] sm:$0xff]
      %v1807 = vld [vmem:[#allocation2 + $0x11b] sm:$0xff]
      %v1808 = vld [vmem:[#allocation2 + $0x123] sm:$0xff]
      %v1809 = vld [vmem:[#allocation2 + $0x12b] sm:$0xff]
      %v1810 = vpack.c.bf16 %v1775, %v1774
      %v1811 = vpack.c.bf16 %v1777, %v1776
      %v1812 = vpack.c.bf16 %v1779, %v1778
      %v1813 = vpack.c.bf16 %v1781, %v1780
      %v1814 = vpack.c.bf16 %v1783, %v1782
      %v1815 = vpack.c.bf16 %v1785, %v1784
      %v1816 = vpack.c.bf16 %v1787, %v1786
      %v1817 = vpack.c.bf16 %v1789, %v1788
      %v1818 = vpack.c.bf16 %v1791, %v1790
      %v1819 = vpack.c.bf16 %v1793, %v1792
      %v1820 = vpack.c.bf16 %v1795, %v1794
      %v1821 = vpack.c.bf16 %v1797, %v1796
      %v1822 = vpack.c.bf16 %v1799, %v1798
      %v1823 = vpack.c.bf16 %v1801, %v1800
      %v1824 = vpack.c.bf16 %v1803, %v1802
      %v1825 = vpack.c.bf16 %v1805, %v1804
      %v1826 = vpack.c.bf16 %v1807, %v1806
      %v1827 = vpack.c.bf16 %v1809, %v1808
      %s1828 = scalar_lea.vmem %s5, 256
      %v1829 = vld [vmem:[%s1828] sm:$0xf]
      %v1830 = vld [vmem:[%s1828 + $0x4] sm:$0xf]
      %v1831 = vld [vmem:[%s1828 + $0x8] sm:$0xf]
      %v1832 = vld [vmem:[%s1828 + $0xc] sm:$0xf]
      %v1833 = vld [vmem:[%s1828 + $0x10] sm:$0xf]
      %v1834 = vld [vmem:[%s1828 + $0x14] sm:$0xf]
      %v1835 = vld [vmem:[%s1828 + $0x18] sm:$0xf]
      %v1836 = vld [vmem:[%s1828 + $0x1c] sm:$0xf]
      %v1837 = vld [vmem:[%s1828 + $0x20] sm:$0xf]
      %v1838 = vld [vmem:[%s1828 + $0x24] sm:$0xf]
      %v1839 = vld [vmem:[%s1828 + $0x28] sm:$0xf]
      %v1840 = vld [vmem:[%s1828 + $0x2c] sm:$0xf]
      %v1841 = vld [vmem:[%s1828 + $0x30] sm:$0xf]
      %v1842 = vld [vmem:[%s1828 + $0x34] sm:$0xf]
      %v1843 = vld [vmem:[%s1828 + $0x38] sm:$0xf]
      %v1844 = vld [vmem:[%s1828 + $0x3c] sm:$0xf]
      %v1861 = vunpack.c.l.b16 %v1829
      %v1862 = vunpack.c.l.b16 %v1830
      %v1863 = vunpack.c.l.b16 %v1831
      %v1864 = vunpack.c.l.b16 %v1832
      %v1865 = vunpack.c.l.b16 %v1833
      %v1866 = vunpack.c.l.b16 %v1834
      %v1867 = vunpack.c.l.b16 %v1835
      %v1868 = vunpack.c.l.b16 %v1836
      %v1869 = vunpack.c.l.b16 %v1837
      %v1870 = vunpack.c.l.b16 %v1838
      %v1871 = vunpack.c.l.b16 %v1839
      %v1872 = vunpack.c.l.b16 %v1840
      %v1873 = vunpack.c.l.b16 %v1841
      %v1874 = vunpack.c.l.b16 %v1842
      %v1875 = vunpack.c.l.b16 %v1843
      %v1876 = vunpack.c.l.b16 %v1844
      %v1877 = vpack.c.b16 %v1862, %v1861
      %v1878 = vpack.c.b16 %v1864, %v1863
      %v1879 = vpack.c.b16 %v1866, %v1865
      %v1880 = vpack.c.b16 %v1868, %v1867
      %v1881 = vpack.c.b16 %v1870, %v1869
      %v1882 = vpack.c.b16 %v1872, %v1871
      %v1883 = vpack.c.b16 %v1874, %v1873
      %v1884 = vpack.c.b16 %v1876, %v1875
      %1893 = vmatpush.bf16.msra.mxu0 %v1884
      %1894 = vmatpush.bf16.msra.mxu0 %v1883
      %1895 = vmatpush.bf16.msra.mxu0 %v1882
      %1896 = vmatpush.bf16.msra.mxu0 %v1881
      %1897 = vmatpush.bf16.msra.mxu0 %v1880
      %1898 = vmatpush.bf16.msra.mxu0 %v1879
      %1899 = vmatpush.bf16.msra.mxu0 %v1878
      %1900 = vmatpush.bf16.msra.mxu0 %v1877
      %1901 = vmatmul.bf16.gmra.mxu0 %v1810
      %v1902 = vpop.f32.mrf.mxu0
      %v1903 = vadd.f32 0.0, %v1902
      %v1904 = vpop.f32.mrf.mxu0
      %v1905 = vadd.f32 0.0, %v1904
      %1906 = vmatmul.bf16.gmra.mxu0 %v1811
      %v1907 = vpop.f32.mrf.mxu0
      %v1908 = vadd.f32 0.0, %v1907
      %v1909 = vpop.f32.mrf.mxu0
      %v1910 = vadd.f32 0.0, %v1909
      %1911 = vmatmul.bf16.gmra.mxu0 %v1812
      %v1912 = vpop.f32.mrf.mxu0
      %v1913 = vadd.f32 0.0, %v1912
      %v1914 = vpop.f32.mrf.mxu0
      %v1915 = vadd.f32 0.0, %v1914
      %1916 = vmatmul.bf16.gmra.mxu0 %v1813
      %v1917 = vpop.f32.mrf.mxu0
      %v1918 = vadd.f32 0.0, %v1917
      %v1919 = vpop.f32.mrf.mxu0
      %v1920 = vadd.f32 0.0, %v1919
      %1921 = vmatmul.bf16.gmra.mxu0 %v1814
      %v1922 = vpop.f32.mrf.mxu0
      %v1923 = vadd.f32 0.0, %v1922
      %v1924 = vpop.f32.mrf.mxu0
      %v1925 = vadd.f32 0.0, %v1924
      %1926 = vmatmul.bf16.gmra.mxu0 %v1815
      %v1927 = vpop.f32.mrf.mxu0
      %v1928 = vadd.f32 0.0, %v1927
      %v1929 = vpop.f32.mrf.mxu0
      %v1930 = vadd.f32 0.0, %v1929
      %1931 = vmatmul.bf16.gmra.mxu0 %v1816
      %v1932 = vpop.f32.mrf.mxu0
      %v1933 = vadd.f32 0.0, %v1932
      %v1934 = vpop.f32.mrf.mxu0
      %v1935 = vadd.f32 0.0, %v1934
      %1936 = vmatmul.bf16.gmra.mxu0 %v1817
      %v1937 = vpop.f32.mrf.mxu0
      %v1938 = vadd.f32 0.0, %v1937
      %v1939 = vpop.f32.mrf.mxu0
      %v1940 = vadd.f32 0.0, %v1939
      %1941 = vmatmul.bf16.gmra.mxu0 %v1818
      %v1942 = vpop.f32.mrf.mxu0
      %v1943 = vadd.f32 0.0, %v1942
      %v1944 = vpop.f32.mrf.mxu0
      %v1945 = vadd.f32 0.0, %v1944
      %1946 = vmatmul.bf16.gmra.mxu0 %v1819
      %v1947 = vpop.f32.mrf.mxu0
      %v1948 = vadd.f32 0.0, %v1947
      %v1949 = vpop.f32.mrf.mxu0
      %v1950 = vadd.f32 0.0, %v1949
      %1951 = vmatmul.bf16.gmra.mxu0 %v1820
      %v1952 = vpop.f32.mrf.mxu0
      %v1953 = vadd.f32 0.0, %v1952
      %v1954 = vpop.f32.mrf.mxu0
      %v1955 = vadd.f32 0.0, %v1954
      %1956 = vmatmul.bf16.gmra.mxu0 %v1821
      %v1957 = vpop.f32.mrf.mxu0
      %v1958 = vadd.f32 0.0, %v1957
      %v1959 = vpop.f32.mrf.mxu0
      %v1960 = vadd.f32 0.0, %v1959
      %1961 = vmatmul.bf16.gmra.mxu0 %v1822
      %v1962 = vpop.f32.mrf.mxu0
      %v1963 = vadd.f32 0.0, %v1962
      %v1964 = vpop.f32.mrf.mxu0
      %v1965 = vadd.f32 0.0, %v1964
      %1966 = vmatmul.bf16.gmra.mxu0 %v1823
      %v1967 = vpop.f32.mrf.mxu0
      %v1968 = vadd.f32 0.0, %v1967
      %v1969 = vpop.f32.mrf.mxu0
      %v1970 = vadd.f32 0.0, %v1969
      %1971 = vmatmul.bf16.gmra.mxu0 %v1824
      %v1972 = vpop.f32.mrf.mxu0
      %v1973 = vadd.f32 0.0, %v1972
      %v1974 = vpop.f32.mrf.mxu0
      %v1975 = vadd.f32 0.0, %v1974
      %1976 = vmatmul.bf16.gmra.mxu0 %v1825
      %v1977 = vpop.f32.mrf.mxu0
      %v1978 = vadd.f32 0.0, %v1977
      %v1979 = vpop.f32.mrf.mxu0
      %v1980 = vadd.f32 0.0, %v1979
      %1981 = vmatmul.bf16.gmra.mxu0 %v1826
      %v1982 = vpop.f32.mrf.mxu0
      %v1983 = vadd.f32 0.0, %v1982
      %v1984 = vpop.f32.mrf.mxu0
      %v1985 = vadd.f32 0.0, %v1984
      %1986 = vmatmul.bf16.gmra.mxu0 %v1827
      %v1987 = vpop.f32.mrf.mxu0
      %v1988 = vadd.f32 0.0, %v1987
      %v1989 = vpop.f32.mrf.mxu0
      %v1990 = vadd.f32 0.0, %v1989
      %1991 = vdwg.mxu0
      %v1992 = vadd.f32 %v1738, %v1903
      %v1993 = vadd.f32 %v1739, %v1905
      %v1994 = vadd.f32 %v1740, %v1908
      %v1995 = vadd.f32 %v1741, %v1910
      %v1996 = vadd.f32 %v1742, %v1913
      %v1997 = vadd.f32 %v1743, %v1915
      %v1998 = vadd.f32 %v1744, %v1918
      %v1999 = vadd.f32 %v1745, %v1920
      %v2000 = vadd.f32 %v1746, %v1923
      %v2001 = vadd.f32 %v1747, %v1925
      %v2002 = vadd.f32 %v1748, %v1928
      %v2003 = vadd.f32 %v1749, %v1930
      %v2004 = vadd.f32 %v1750, %v1933
      %v2005 = vadd.f32 %v1751, %v1935
      %v2006 = vadd.f32 %v1752, %v1938
      %v2007 = vadd.f32 %v1753, %v1940
      %v2008 = vadd.f32 %v1754, %v1943
      %v2009 = vadd.f32 %v1755, %v1945
      %v2010 = vadd.f32 %v1756, %v1948
      %v2011 = vadd.f32 %v1757, %v1950
      %v2012 = vadd.f32 %v1758, %v1953
      %v2013 = vadd.f32 %v1759, %v1955
      %v2014 = vadd.f32 %v1760, %v1958
      %v2015 = vadd.f32 %v1761, %v1960
      %v2016 = vadd.f32 %v1762, %v1963
      %v2017 = vadd.f32 %v1763, %v1965
      %v2018 = vadd.f32 %v1764, %v1968
      %v2019 = vadd.f32 %v1765, %v1970
      %v2020 = vadd.f32 %v1766, %v1973
      %v2021 = vadd.f32 %v1767, %v1975
      %v2022 = vadd.f32 %v1768, %v1978
      %v2023 = vadd.f32 %v1769, %v1980
      %v2024 = vadd.f32 %v1770, %v1983
      %v2025 = vadd.f32 %v1771, %v1985
      %v2026 = vadd.f32 %v1772, %v1988
      %v2027 = vadd.f32 %v1773, %v1990
      %v2028 = vld [vmem:[#allocation2 + $0x14] sm:$0xff]
      %v2029 = vld [vmem:[#allocation2 + $0x1c] sm:$0xff]
      %v2030 = vld [vmem:[#allocation2 + $0x24] sm:$0xff]
      %v2031 = vld [vmem:[#allocation2 + $0x2c] sm:$0xff]
      %v2032 = vld [vmem:[#allocation2 + $0x34] sm:$0xff]
      %v2033 = vld [vmem:[#allocation2 + $0x3c] sm:$0xff]
      %v2034 = vld [vmem:[#allocation2 + $0x44] sm:$0xff]
      %v2035 = vld [vmem:[#allocation2 + $0x4c] sm:$0xff]
      %v2036 = vld [vmem:[#allocation2 + $0x54] sm:$0xff]
      %v2037 = vld [vmem:[#allocation2 + $0x5c] sm:$0xff]
      %v2038 = vld [vmem:[#allocation2 + $0x64] sm:$0xff]
      %v2039 = vld [vmem:[#allocation2 + $0x6c] sm:$0xff]
      %v2040 = vld [vmem:[#allocation2 + $0x74] sm:$0xff]
      %v2041 = vld [vmem:[#allocation2 + $0x7c] sm:$0xff]
      %v2042 = vld [vmem:[#allocation2 + $0x84] sm:$0xff]
      %v2043 = vld [vmem:[#allocation2 + $0x8c] sm:$0xff]
      %v2044 = vld [vmem:[#allocation2 + $0x94] sm:$0xff]
      %v2045 = vld [vmem:[#allocation2 + $0x9c] sm:$0xff]
      %v2046 = vld [vmem:[#allocation2 + $0xa4] sm:$0xff]
      %v2047 = vld [vmem:[#allocation2 + $0xac] sm:$0xff]
      %v2048 = vld [vmem:[#allocation2 + $0xb4] sm:$0xff]
      %v2049 = vld [vmem:[#allocation2 + $0xbc] sm:$0xff]
      %v2050 = vld [vmem:[#allocation2 + $0xc4] sm:$0xff]
      %v2051 = vld [vmem:[#allocation2 + $0xcc] sm:$0xff]
      %v2052 = vld [vmem:[#allocation2 + $0xd4] sm:$0xff]
      %v2053 = vld [vmem:[#allocation2 + $0xdc] sm:$0xff]
      %v2054 = vld [vmem:[#allocation2 + $0xe4] sm:$0xff]
      %v2055 = vld [vmem:[#allocation2 + $0xec] sm:$0xff]
      %v2056 = vld [vmem:[#allocation2 + $0xf4] sm:$0xff]
      %v2057 = vld [vmem:[#allocation2 + $0xfc] sm:$0xff]
      %v2058 = vld [vmem:[#allocation2 + $0x104] sm:$0xff]
      %v2059 = vld [vmem:[#allocation2 + $0x10c] sm:$0xff]
      %v2060 = vld [vmem:[#allocation2 + $0x114] sm:$0xff]
      %v2061 = vld [vmem:[#allocation2 + $0x11c] sm:$0xff]
      %v2062 = vld [vmem:[#allocation2 + $0x124] sm:$0xff]
      %v2063 = vld [vmem:[#allocation2 + $0x12c] sm:$0xff]
      %v2064 = vpack.c.bf16 %v2029, %v2028
      %v2065 = vpack.c.bf16 %v2031, %v2030
      %v2066 = vpack.c.bf16 %v2033, %v2032
      %v2067 = vpack.c.bf16 %v2035, %v2034
      %v2068 = vpack.c.bf16 %v2037, %v2036
      %v2069 = vpack.c.bf16 %v2039, %v2038
      %v2070 = vpack.c.bf16 %v2041, %v2040
      %v2071 = vpack.c.bf16 %v2043, %v2042
      %v2072 = vpack.c.bf16 %v2045, %v2044
      %v2073 = vpack.c.bf16 %v2047, %v2046
      %v2074 = vpack.c.bf16 %v2049, %v2048
      %v2075 = vpack.c.bf16 %v2051, %v2050
      %v2076 = vpack.c.bf16 %v2053, %v2052
      %v2077 = vpack.c.bf16 %v2055, %v2054
      %v2078 = vpack.c.bf16 %v2057, %v2056
      %v2079 = vpack.c.bf16 %v2059, %v2058
      %v2080 = vpack.c.bf16 %v2061, %v2060
      %v2081 = vpack.c.bf16 %v2063, %v2062
      %s2082 = scalar_lea.vmem %s5, 320
      %v2083 = vld [vmem:[%s2082] sm:$0xf]
      %v2084 = vld [vmem:[%s2082 + $0x4] sm:$0xf]
      %v2085 = vld [vmem:[%s2082 + $0x8] sm:$0xf]
      %v2086 = vld [vmem:[%s2082 + $0xc] sm:$0xf]
      %v2087 = vld [vmem:[%s2082 + $0x10] sm:$0xf]
      %v2088 = vld [vmem:[%s2082 + $0x14] sm:$0xf]
      %v2089 = vld [vmem:[%s2082 + $0x18] sm:$0xf]
      %v2090 = vld [vmem:[%s2082 + $0x1c] sm:$0xf]
      %v2091 = vld [vmem:[%s2082 + $0x20] sm:$0xf]
      %v2092 = vld [vmem:[%s2082 + $0x24] sm:$0xf]
      %v2093 = vld [vmem:[%s2082 + $0x28] sm:$0xf]
      %v2094 = vld [vmem:[%s2082 + $0x2c] sm:$0xf]
      %v2095 = vld [vmem:[%s2082 + $0x30] sm:$0xf]
      %v2096 = vld [vmem:[%s2082 + $0x34] sm:$0xf]
      %v2097 = vld [vmem:[%s2082 + $0x38] sm:$0xf]
      %v2098 = vld [vmem:[%s2082 + $0x3c] sm:$0xf]
      %v2115 = vunpack.c.l.b16 %v2083
      %v2116 = vunpack.c.l.b16 %v2084
      %v2117 = vunpack.c.l.b16 %v2085
      %v2118 = vunpack.c.l.b16 %v2086
      %v2119 = vunpack.c.l.b16 %v2087
      %v2120 = vunpack.c.l.b16 %v2088
      %v2121 = vunpack.c.l.b16 %v2089
      %v2122 = vunpack.c.l.b16 %v2090
      %v2123 = vunpack.c.l.b16 %v2091
      %v2124 = vunpack.c.l.b16 %v2092
      %v2125 = vunpack.c.l.b16 %v2093
      %v2126 = vunpack.c.l.b16 %v2094
      %v2127 = vunpack.c.l.b16 %v2095
      %v2128 = vunpack.c.l.b16 %v2096
      %v2129 = vunpack.c.l.b16 %v2097
      %v2130 = vunpack.c.l.b16 %v2098
      %v2131 = vpack.c.b16 %v2116, %v2115
      %v2132 = vpack.c.b16 %v2118, %v2117
      %v2133 = vpack.c.b16 %v2120, %v2119
      %v2134 = vpack.c.b16 %v2122, %v2121
      %v2135 = vpack.c.b16 %v2124, %v2123
      %v2136 = vpack.c.b16 %v2126, %v2125
      %v2137 = vpack.c.b16 %v2128, %v2127
      %v2138 = vpack.c.b16 %v2130, %v2129
      %2147 = vmatpush.bf16.msra.mxu0 %v2138
      %2148 = vmatpush.bf16.msra.mxu0 %v2137
      %2149 = vmatpush.bf16.msra.mxu0 %v2136
      %2150 = vmatpush.bf16.msra.mxu0 %v2135
      %2151 = vmatpush.bf16.msra.mxu0 %v2134
      %2152 = vmatpush.bf16.msra.mxu0 %v2133
      %2153 = vmatpush.bf16.msra.mxu0 %v2132
      %2154 = vmatpush.bf16.msra.mxu0 %v2131
      %2155 = vmatmul.bf16.gmra.mxu0 %v2064
      %v2156 = vpop.f32.mrf.mxu0
      %v2157 = vadd.f32 0.0, %v2156
      %v2158 = vpop.f32.mrf.mxu0
      %v2159 = vadd.f32 0.0, %v2158
      %2160 = vmatmul.bf16.gmra.mxu0 %v2065
      %v2161 = vpop.f32.mrf.mxu0
      %v2162 = vadd.f32 0.0, %v2161
      %v2163 = vpop.f32.mrf.mxu0
      %v2164 = vadd.f32 0.0, %v2163
      %2165 = vmatmul.bf16.gmra.mxu0 %v2066
      %v2166 = vpop.f32.mrf.mxu0
      %v2167 = vadd.f32 0.0, %v2166
      %v2168 = vpop.f32.mrf.mxu0
      %v2169 = vadd.f32 0.0, %v2168
      %2170 = vmatmul.bf16.gmra.mxu0 %v2067
      %v2171 = vpop.f32.mrf.mxu0
      %v2172 = vadd.f32 0.0, %v2171
      %v2173 = vpop.f32.mrf.mxu0
      %v2174 = vadd.f32 0.0, %v2173
      %2175 = vmatmul.bf16.gmra.mxu0 %v2068
      %v2176 = vpop.f32.mrf.mxu0
      %v2177 = vadd.f32 0.0, %v2176
      %v2178 = vpop.f32.mrf.mxu0
      %v2179 = vadd.f32 0.0, %v2178
      %2180 = vmatmul.bf16.gmra.mxu0 %v2069
      %v2181 = vpop.f32.mrf.mxu0
      %v2182 = vadd.f32 0.0, %v2181
      %v2183 = vpop.f32.mrf.mxu0
      %v2184 = vadd.f32 0.0, %v2183
      %2185 = vmatmul.bf16.gmra.mxu0 %v2070
      %v2186 = vpop.f32.mrf.mxu0
      %v2187 = vadd.f32 0.0, %v2186
      %v2188 = vpop.f32.mrf.mxu0
      %v2189 = vadd.f32 0.0, %v2188
      %2190 = vmatmul.bf16.gmra.mxu0 %v2071
      %v2191 = vpop.f32.mrf.mxu0
      %v2192 = vadd.f32 0.0, %v2191
      %v2193 = vpop.f32.mrf.mxu0
      %v2194 = vadd.f32 0.0, %v2193
      %2195 = vmatmul.bf16.gmra.mxu0 %v2072
      %v2196 = vpop.f32.mrf.mxu0
      %v2197 = vadd.f32 0.0, %v2196
      %v2198 = vpop.f32.mrf.mxu0
      %v2199 = vadd.f32 0.0, %v2198
      %2200 = vmatmul.bf16.gmra.mxu0 %v2073
      %v2201 = vpop.f32.mrf.mxu0
      %v2202 = vadd.f32 0.0, %v2201
      %v2203 = vpop.f32.mrf.mxu0
      %v2204 = vadd.f32 0.0, %v2203
      %2205 = vmatmul.bf16.gmra.mxu0 %v2074
      %v2206 = vpop.f32.mrf.mxu0
      %v2207 = vadd.f32 0.0, %v2206
      %v2208 = vpop.f32.mrf.mxu0
      %v2209 = vadd.f32 0.0, %v2208
      %2210 = vmatmul.bf16.gmra.mxu0 %v2075
      %v2211 = vpop.f32.mrf.mxu0
      %v2212 = vadd.f32 0.0, %v2211
      %v2213 = vpop.f32.mrf.mxu0
      %v2214 = vadd.f32 0.0, %v2213
      %2215 = vmatmul.bf16.gmra.mxu0 %v2076
      %v2216 = vpop.f32.mrf.mxu0
      %v2217 = vadd.f32 0.0, %v2216
      %v2218 = vpop.f32.mrf.mxu0
      %v2219 = vadd.f32 0.0, %v2218
      %2220 = vmatmul.bf16.gmra.mxu0 %v2077
      %v2221 = vpop.f32.mrf.mxu0
      %v2222 = vadd.f32 0.0, %v2221
      %v2223 = vpop.f32.mrf.mxu0
      %v2224 = vadd.f32 0.0, %v2223
      %2225 = vmatmul.bf16.gmra.mxu0 %v2078
      %v2226 = vpop.f32.mrf.mxu0
      %v2227 = vadd.f32 0.0, %v2226
      %v2228 = vpop.f32.mrf.mxu0
      %v2229 = vadd.f32 0.0, %v2228
      %2230 = vmatmul.bf16.gmra.mxu0 %v2079
      %v2231 = vpop.f32.mrf.mxu0
      %v2232 = vadd.f32 0.0, %v2231
      %v2233 = vpop.f32.mrf.mxu0
      %v2234 = vadd.f32 0.0, %v2233
      %2235 = vmatmul.bf16.gmra.mxu0 %v2080
      %v2236 = vpop.f32.mrf.mxu0
      %v2237 = vadd.f32 0.0, %v2236
      %v2238 = vpop.f32.mrf.mxu0
      %v2239 = vadd.f32 0.0, %v2238
      %2240 = vmatmul.bf16.gmra.mxu0 %v2081
      %v2241 = vpop.f32.mrf.mxu0
      %v2242 = vadd.f32 0.0, %v2241
      %v2243 = vpop.f32.mrf.mxu0
      %v2244 = vadd.f32 0.0, %v2243
      %2245 = vdwg.mxu0
      %v2246 = vadd.f32 %v1992, %v2157
      %v2247 = vadd.f32 %v1993, %v2159
      %v2248 = vadd.f32 %v1994, %v2162
      %v2249 = vadd.f32 %v1995, %v2164
      %v2250 = vadd.f32 %v1996, %v2167
      %v2251 = vadd.f32 %v1997, %v2169
      %v2252 = vadd.f32 %v1998, %v2172
      %v2253 = vadd.f32 %v1999, %v2174
      %v2254 = vadd.f32 %v2000, %v2177
      %v2255 = vadd.f32 %v2001, %v2179
      %v2256 = vadd.f32 %v2002, %v2182
      %v2257 = vadd.f32 %v2003, %v2184
      %v2258 = vadd.f32 %v2004, %v2187
      %v2259 = vadd.f32 %v2005, %v2189
      %v2260 = vadd.f32 %v2006, %v2192
      %v2261 = vadd.f32 %v2007, %v2194
      %v2262 = vadd.f32 %v2008, %v2197
      %v2263 = vadd.f32 %v2009, %v2199
      %v2264 = vadd.f32 %v2010, %v2202
      %v2265 = vadd.f32 %v2011, %v2204
      %v2266 = vadd.f32 %v2012, %v2207
      %v2267 = vadd.f32 %v2013, %v2209
      %v2268 = vadd.f32 %v2014, %v2212
      %v2269 = vadd.f32 %v2015, %v2214
      %v2270 = vadd.f32 %v2016, %v2217
      %v2271 = vadd.f32 %v2017, %v2219
      %v2272 = vadd.f32 %v2018, %v2222
      %v2273 = vadd.f32 %v2019, %v2224
      %v2274 = vadd.f32 %v2020, %v2227
      %v2275 = vadd.f32 %v2021, %v2229
      %v2276 = vadd.f32 %v2022, %v2232
      %v2277 = vadd.f32 %v2023, %v2234
      %v2278 = vadd.f32 %v2024, %v2237
      %v2279 = vadd.f32 %v2025, %v2239
      %v2280 = vadd.f32 %v2026, %v2242
      %v2281 = vadd.f32 %v2027, %v2244
      %v2282 = vld [vmem:[#allocation2 + $0x24] sm:$0xff]
      %v2283 = vld [vmem:[#allocation2 + $0x2c] sm:$0xff]
      %v2284 = vld [vmem:[#allocation2 + $0x34] sm:$0xff]
      %v2285 = vld [vmem:[#allocation2 + $0x3c] sm:$0xff]
      %v2286 = vld [vmem:[#allocation2 + $0x44] sm:$0xff]
      %v2287 = vld [vmem:[#allocation2 + $0x4c] sm:$0xff]
      %v2288 = vld [vmem:[#allocation2 + $0x54] sm:$0xff]
      %v2289 = vld [vmem:[#allocation2 + $0x5c] sm:$0xff]
      %v2290 = vld [vmem:[#allocation2 + $0x64] sm:$0xff]
      %v2291 = vld [vmem:[#allocation2 + $0x6c] sm:$0xff]
      %v2292 = vld [vmem:[#allocation2 + $0x74] sm:$0xff]
      %v2293 = vld [vmem:[#allocation2 + $0x7c] sm:$0xff]
      %v2294 = vld [vmem:[#allocation2 + $0x84] sm:$0xff]
      %v2295 = vld [vmem:[#allocation2 + $0x8c] sm:$0xff]
      %v2296 = vld [vmem:[#allocation2 + $0x94] sm:$0xff]
      %v2297 = vld [vmem:[#allocation2 + $0x9c] sm:$0xff]
      %v2298 = vld [vmem:[#allocation2 + $0xa4] sm:$0xff]
      %v2299 = vld [vmem:[#allocation2 + $0xac] sm:$0xff]
      %v2300 = vld [vmem:[#allocation2 + $0xb4] sm:$0xff]
      %v2301 = vld [vmem:[#allocation2 + $0xbc] sm:$0xff]
      %v2302 = vld [vmem:[#allocation2 + $0xc4] sm:$0xff]
      %v2303 = vld [vmem:[#allocation2 + $0xcc] sm:$0xff]
      %v2304 = vld [vmem:[#allocation2 + $0xd4] sm:$0xff]
      %v2305 = vld [vmem:[#allocation2 + $0xdc] sm:$0xff]
      %v2306 = vld [vmem:[#allocation2 + $0xe4] sm:$0xff]
      %v2307 = vld [vmem:[#allocation2 + $0xec] sm:$0xff]
      %v2308 = vld [vmem:[#allocation2 + $0xf4] sm:$0xff]
      %v2309 = vld [vmem:[#allocation2 + $0xfc] sm:$0xff]
      %v2310 = vld [vmem:[#allocation2 + $0x104] sm:$0xff]
      %v2311 = vld [vmem:[#allocation2 + $0x10c] sm:$0xff]
      %v2312 = vld [vmem:[#allocation2 + $0x114] sm:$0xff]
      %v2313 = vld [vmem:[#allocation2 + $0x11c] sm:$0xff]
      %v2314 = vld [vmem:[#allocation2 + $0x124] sm:$0xff]
      %v2315 = vld [vmem:[#allocation2 + $0x12c] sm:$0xff]
      %v2316 = vld [vmem:[#allocation2 + $0x134] sm:$0xff]
      %v2317 = vld [vmem:[#allocation2 + $0x13c] sm:$0xff]
      %v2318 = vpack.c.bf16 %v2283, %v2282
      %v2319 = vpack.c.bf16 %v2285, %v2284
      %v2320 = vpack.c.bf16 %v2287, %v2286
      %v2321 = vpack.c.bf16 %v2289, %v2288
      %v2322 = vpack.c.bf16 %v2291, %v2290
      %v2323 = vpack.c.bf16 %v2293, %v2292
      %v2324 = vpack.c.bf16 %v2295, %v2294
      %v2325 = vpack.c.bf16 %v2297, %v2296
      %v2326 = vpack.c.bf16 %v2299, %v2298
      %v2327 = vpack.c.bf16 %v2301, %v2300
      %v2328 = vpack.c.bf16 %v2303, %v2302
      %v2329 = vpack.c.bf16 %v2305, %v2304
      %v2330 = vpack.c.bf16 %v2307, %v2306
      %v2331 = vpack.c.bf16 %v2309, %v2308
      %v2332 = vpack.c.bf16 %v2311, %v2310
      %v2333 = vpack.c.bf16 %v2313, %v2312
      %v2334 = vpack.c.bf16 %v2315, %v2314
      %v2335 = vpack.c.bf16 %v2317, %v2316
      %s2336 = scalar_lea.vmem %s5, 384
      %v2337 = vld [vmem:[%s2336] sm:$0xf]
      %v2338 = vld [vmem:[%s2336 + $0x4] sm:$0xf]
      %v2339 = vld [vmem:[%s2336 + $0x8] sm:$0xf]
      %v2340 = vld [vmem:[%s2336 + $0xc] sm:$0xf]
      %v2341 = vld [vmem:[%s2336 + $0x10] sm:$0xf]
      %v2342 = vld [vmem:[%s2336 + $0x14] sm:$0xf]
      %v2343 = vld [vmem:[%s2336 + $0x18] sm:$0xf]
      %v2344 = vld [vmem:[%s2336 + $0x1c] sm:$0xf]
      %v2345 = vld [vmem:[%s2336 + $0x20] sm:$0xf]
      %v2346 = vld [vmem:[%s2336 + $0x24] sm:$0xf]
      %v2347 = vld [vmem:[%s2336 + $0x28] sm:$0xf]
      %v2348 = vld [vmem:[%s2336 + $0x2c] sm:$0xf]
      %v2349 = vld [vmem:[%s2336 + $0x30] sm:$0xf]
      %v2350 = vld [vmem:[%s2336 + $0x34] sm:$0xf]
      %v2351 = vld [vmem:[%s2336 + $0x38] sm:$0xf]
      %v2352 = vld [vmem:[%s2336 + $0x3c] sm:$0xf]
      %v2369 = vunpack.c.l.b16 %v2337
      %v2370 = vunpack.c.l.b16 %v2338
      %v2371 = vunpack.c.l.b16 %v2339
      %v2372 = vunpack.c.l.b16 %v2340
      %v2373 = vunpack.c.l.b16 %v2341
      %v2374 = vunpack.c.l.b16 %v2342
      %v2375 = vunpack.c.l.b16 %v2343
      %v2376 = vunpack.c.l.b16 %v2344
      %v2377 = vunpack.c.l.b16 %v2345
      %v2378 = vunpack.c.l.b16 %v2346
      %v2379 = vunpack.c.l.b16 %v2347
      %v2380 = vunpack.c.l.b16 %v2348
      %v2381 = vunpack.c.l.b16 %v2349
      %v2382 = vunpack.c.l.b16 %v2350
      %v2383 = vunpack.c.l.b16 %v2351
      %v2384 = vunpack.c.l.b16 %v2352
      %v2385 = vpack.c.b16 %v2370, %v2369
      %v2386 = vpack.c.b16 %v2372, %v2371
      %v2387 = vpack.c.b16 %v2374, %v2373
      %v2388 = vpack.c.b16 %v2376, %v2375
      %v2389 = vpack.c.b16 %v2378, %v2377
      %v2390 = vpack.c.b16 %v2380, %v2379
      %v2391 = vpack.c.b16 %v2382, %v2381
      %v2392 = vpack.c.b16 %v2384, %v2383
      %2401 = vmatpush.bf16.msra.mxu0 %v2392
      %2402 = vmatpush.bf16.msra.mxu0 %v2391
      %2403 = vmatpush.bf16.msra.mxu0 %v2390
      %2404 = vmatpush.bf16.msra.mxu0 %v2389
      %2405 = vmatpush.bf16.msra.mxu0 %v2388
      %2406 = vmatpush.bf16.msra.mxu0 %v2387
      %2407 = vmatpush.bf16.msra.mxu0 %v2386
      %2408 = vmatpush.bf16.msra.mxu0 %v2385
      %2409 = vmatmul.bf16.gmra.mxu0 %v2318
      %v2410 = vpop.f32.mrf.mxu0
      %v2411 = vadd.f32 0.0, %v2410
      %v2412 = vpop.f32.mrf.mxu0
      %v2413 = vadd.f32 0.0, %v2412
      %2414 = vmatmul.bf16.gmra.mxu0 %v2319
      %v2415 = vpop.f32.mrf.mxu0
      %v2416 = vadd.f32 0.0, %v2415
      %v2417 = vpop.f32.mrf.mxu0
      %v2418 = vadd.f32 0.0, %v2417
      %2419 = vmatmul.bf16.gmra.mxu0 %v2320
      %v2420 = vpop.f32.mrf.mxu0
      %v2421 = vadd.f32 0.0, %v2420
      %v2422 = vpop.f32.mrf.mxu0
      %v2423 = vadd.f32 0.0, %v2422
      %2424 = vmatmul.bf16.gmra.mxu0 %v2321
      %v2425 = vpop.f32.mrf.mxu0
      %v2426 = vadd.f32 0.0, %v2425
      %v2427 = vpop.f32.mrf.mxu0
      %v2428 = vadd.f32 0.0, %v2427
      %2429 = vmatmul.bf16.gmra.mxu0 %v2322
      %v2430 = vpop.f32.mrf.mxu0
      %v2431 = vadd.f32 0.0, %v2430
      %v2432 = vpop.f32.mrf.mxu0
      %v2433 = vadd.f32 0.0, %v2432
      %2434 = vmatmul.bf16.gmra.mxu0 %v2323
      %v2435 = vpop.f32.mrf.mxu0
      %v2436 = vadd.f32 0.0, %v2435
      %v2437 = vpop.f32.mrf.mxu0
      %v2438 = vadd.f32 0.0, %v2437
      %2439 = vmatmul.bf16.gmra.mxu0 %v2324
      %v2440 = vpop.f32.mrf.mxu0
      %v2441 = vadd.f32 0.0, %v2440
      %v2442 = vpop.f32.mrf.mxu0
      %v2443 = vadd.f32 0.0, %v2442
      %2444 = vmatmul.bf16.gmra.mxu0 %v2325
      %v2445 = vpop.f32.mrf.mxu0
      %v2446 = vadd.f32 0.0, %v2445
      %v2447 = vpop.f32.mrf.mxu0
      %v2448 = vadd.f32 0.0, %v2447
      %2449 = vmatmul.bf16.gmra.mxu0 %v2326
      %v2450 = vpop.f32.mrf.mxu0
      %v2451 = vadd.f32 0.0, %v2450
      %v2452 = vpop.f32.mrf.mxu0
      %v2453 = vadd.f32 0.0, %v2452
      %2454 = vmatmul.bf16.gmra.mxu0 %v2327
      %v2455 = vpop.f32.mrf.mxu0
      %v2456 = vadd.f32 0.0, %v2455
      %v2457 = vpop.f32.mrf.mxu0
      %v2458 = vadd.f32 0.0, %v2457
      %2459 = vmatmul.bf16.gmra.mxu0 %v2328
      %v2460 = vpop.f32.mrf.mxu0
      %v2461 = vadd.f32 0.0, %v2460
      %v2462 = vpop.f32.mrf.mxu0
      %v2463 = vadd.f32 0.0, %v2462
      %2464 = vmatmul.bf16.gmra.mxu0 %v2329
      %v2465 = vpop.f32.mrf.mxu0
      %v2466 = vadd.f32 0.0, %v2465
      %v2467 = vpop.f32.mrf.mxu0
      %v2468 = vadd.f32 0.0, %v2467
      %2469 = vmatmul.bf16.gmra.mxu0 %v2330
      %v2470 = vpop.f32.mrf.mxu0
      %v2471 = vadd.f32 0.0, %v2470
      %v2472 = vpop.f32.mrf.mxu0
      %v2473 = vadd.f32 0.0, %v2472
      %2474 = vmatmul.bf16.gmra.mxu0 %v2331
      %v2475 = vpop.f32.mrf.mxu0
      %v2476 = vadd.f32 0.0, %v2475
      %v2477 = vpop.f32.mrf.mxu0
      %v2478 = vadd.f32 0.0, %v2477
      %2479 = vmatmul.bf16.gmra.mxu0 %v2332
      %v2480 = vpop.f32.mrf.mxu0
      %v2481 = vadd.f32 0.0, %v2480
      %v2482 = vpop.f32.mrf.mxu0
      %v2483 = vadd.f32 0.0, %v2482
      %2484 = vmatmul.bf16.gmra.mxu0 %v2333
      %v2485 = vpop.f32.mrf.mxu0
      %v2486 = vadd.f32 0.0, %v2485
      %v2487 = vpop.f32.mrf.mxu0
      %v2488 = vadd.f32 0.0, %v2487
      %2489 = vmatmul.bf16.gmra.mxu0 %v2334
      %v2490 = vpop.f32.mrf.mxu0
      %v2491 = vadd.f32 0.0, %v2490
      %v2492 = vpop.f32.mrf.mxu0
      %v2493 = vadd.f32 0.0, %v2492
      %2494 = vmatmul.bf16.gmra.mxu0 %v2335
      %v2495 = vpop.f32.mrf.mxu0
      %v2496 = vadd.f32 0.0, %v2495
      %v2497 = vpop.f32.mrf.mxu0
      %v2498 = vadd.f32 0.0, %v2497
      %2499 = vdwg.mxu0
      %v2500 = vadd.f32 %v2246, %v2411
      %v2501 = vadd.f32 %v2247, %v2413
      %v2502 = vadd.f32 %v2248, %v2416
      %v2503 = vadd.f32 %v2249, %v2418
      %v2504 = vadd.f32 %v2250, %v2421
      %v2505 = vadd.f32 %v2251, %v2423
      %v2506 = vadd.f32 %v2252, %v2426
      %v2507 = vadd.f32 %v2253, %v2428
      %v2508 = vadd.f32 %v2254, %v2431
      %v2509 = vadd.f32 %v2255, %v2433
      %v2510 = vadd.f32 %v2256, %v2436
      %v2511 = vadd.f32 %v2257, %v2438
      %v2512 = vadd.f32 %v2258, %v2441
      %v2513 = vadd.f32 %v2259, %v2443
      %v2514 = vadd.f32 %v2260, %v2446
      %v2515 = vadd.f32 %v2261, %v2448
      %v2516 = vadd.f32 %v2262, %v2451
      %v2517 = vadd.f32 %v2263, %v2453
      %v2518 = vadd.f32 %v2264, %v2456
      %v2519 = vadd.f32 %v2265, %v2458
      %v2520 = vadd.f32 %v2266, %v2461
      %v2521 = vadd.f32 %v2267, %v2463
      %v2522 = vadd.f32 %v2268, %v2466
      %v2523 = vadd.f32 %v2269, %v2468
      %v2524 = vadd.f32 %v2270, %v2471
      %v2525 = vadd.f32 %v2271, %v2473
      %v2526 = vadd.f32 %v2272, %v2476
      %v2527 = vadd.f32 %v2273, %v2478
      %v2528 = vadd.f32 %v2274, %v2481
      %v2529 = vadd.f32 %v2275, %v2483
      %v2530 = vadd.f32 %v2276, %v2486
      %v2531 = vadd.f32 %v2277, %v2488
      %v2532 = vadd.f32 %v2278, %v2491
      %v2533 = vadd.f32 %v2279, %v2493
      %v2534 = vadd.f32 %v2280, %v2496
      %v2535 = vadd.f32 %v2281, %v2498
      %v2536 = vld [vmem:[#allocation2 + $0x25] sm:$0xff]
      %v2537 = vld [vmem:[#allocation2 + $0x2d] sm:$0xff]
      %v2538 = vld [vmem:[#allocation2 + $0x35] sm:$0xff]
      %v2539 = vld [vmem:[#allocation2 + $0x3d] sm:$0xff]
      %v2540 = vld [vmem:[#allocation2 + $0x45] sm:$0xff]
      %v2541 = vld [vmem:[#allocation2 + $0x4d] sm:$0xff]
      %v2542 = vld [vmem:[#allocation2 + $0x55] sm:$0xff]
      %v2543 = vld [vmem:[#allocation2 + $0x5d] sm:$0xff]
      %v2544 = vld [vmem:[#allocation2 + $0x65] sm:$0xff]
      %v2545 = vld [vmem:[#allocation2 + $0x6d] sm:$0xff]
      %v2546 = vld [vmem:[#allocation2 + $0x75] sm:$0xff]
      %v2547 = vld [vmem:[#allocation2 + $0x7d] sm:$0xff]
      %v2548 = vld [vmem:[#allocation2 + $0x85] sm:$0xff]
      %v2549 = vld [vmem:[#allocation2 + $0x8d] sm:$0xff]
      %v2550 = vld [vmem:[#allocation2 + $0x95] sm:$0xff]
      %v2551 = vld [vmem:[#allocation2 + $0x9d] sm:$0xff]
      %v2552 = vld [vmem:[#allocation2 + $0xa5] sm:$0xff]
      %v2553 = vld [vmem:[#allocation2 + $0xad] sm:$0xff]
      %v2554 = vld [vmem:[#allocation2 + $0xb5] sm:$0xff]
      %v2555 = vld [vmem:[#allocation2 + $0xbd] sm:$0xff]
      %v2556 = vld [vmem:[#allocation2 + $0xc5] sm:$0xff]
      %v2557 = vld [vmem:[#allocation2 + $0xcd] sm:$0xff]
      %v2558 = vld [vmem:[#allocation2 + $0xd5] sm:$0xff]
      %v2559 = vld [vmem:[#allocation2 + $0xdd] sm:$0xff]
      %v2560 = vld [vmem:[#allocation2 + $0xe5] sm:$0xff]
      %v2561 = vld [vmem:[#allocation2 + $0xed] sm:$0xff]
      %v2562 = vld [vmem:[#allocation2 + $0xf5] sm:$0xff]
      %v2563 = vld [vmem:[#allocation2 + $0xfd] sm:$0xff]
      %v2564 = vld [vmem:[#allocation2 + $0x105] sm:$0xff]
      %v2565 = vld [vmem:[#allocation2 + $0x10d] sm:$0xff]
      %v2566 = vld [vmem:[#allocation2 + $0x115] sm:$0xff]
      %v2567 = vld [vmem:[#allocation2 + $0x11d] sm:$0xff]
      %v2568 = vld [vmem:[#allocation2 + $0x125] sm:$0xff]
      %v2569 = vld [vmem:[#allocation2 + $0x12d] sm:$0xff]
      %v2570 = vld [vmem:[#allocation2 + $0x135] sm:$0xff]
      %v2571 = vld [vmem:[#allocation2 + $0x13d] sm:$0xff]
      %v2572 = vpack.c.bf16 %v2537, %v2536
      %v2573 = vpack.c.bf16 %v2539, %v2538
      %v2574 = vpack.c.bf16 %v2541, %v2540
      %v2575 = vpack.c.bf16 %v2543, %v2542
      %v2576 = vpack.c.bf16 %v2545, %v2544
      %v2577 = vpack.c.bf16 %v2547, %v2546
      %v2578 = vpack.c.bf16 %v2549, %v2548
      %v2579 = vpack.c.bf16 %v2551, %v2550
      %v2580 = vpack.c.bf16 %v2553, %v2552
      %v2581 = vpack.c.bf16 %v2555, %v2554
      %v2582 = vpack.c.bf16 %v2557, %v2556
      %v2583 = vpack.c.bf16 %v2559, %v2558
      %v2584 = vpack.c.bf16 %v2561, %v2560
      %v2585 = vpack.c.bf16 %v2563, %v2562
      %v2586 = vpack.c.bf16 %v2565, %v2564
      %v2587 = vpack.c.bf16 %v2567, %v2566
      %v2588 = vpack.c.bf16 %v2569, %v2568
      %v2589 = vpack.c.bf16 %v2571, %v2570
      %s2590 = scalar_lea.vmem %s5, 448
      %v2591 = vld [vmem:[%s2590] sm:$0xf]
      %v2592 = vld [vmem:[%s2590 + $0x4] sm:$0xf]
      %v2593 = vld [vmem:[%s2590 + $0x8] sm:$0xf]
      %v2594 = vld [vmem:[%s2590 + $0xc] sm:$0xf]
      %v2595 = vld [vmem:[%s2590 + $0x10] sm:$0xf]
      %v2596 = vld [vmem:[%s2590 + $0x14] sm:$0xf]
      %v2597 = vld [vmem:[%s2590 + $0x18] sm:$0xf]
      %v2598 = vld [vmem:[%s2590 + $0x1c] sm:$0xf]
      %v2599 = vld [vmem:[%s2590 + $0x20] sm:$0xf]
      %v2600 = vld [vmem:[%s2590 + $0x24] sm:$0xf]
      %v2601 = vld [vmem:[%s2590 + $0x28] sm:$0xf]
      %v2602 = vld [vmem:[%s2590 + $0x2c] sm:$0xf]
      %v2603 = vld [vmem:[%s2590 + $0x30] sm:$0xf]
      %v2604 = vld [vmem:[%s2590 + $0x34] sm:$0xf]
      %v2605 = vld [vmem:[%s2590 + $0x38] sm:$0xf]
      %v2606 = vld [vmem:[%s2590 + $0x3c] sm:$0xf]
      %v2623 = vunpack.c.l.b16 %v2591
      %v2624 = vunpack.c.l.b16 %v2592
      %v2625 = vunpack.c.l.b16 %v2593
      %v2626 = vunpack.c.l.b16 %v2594
      %v2627 = vunpack.c.l.b16 %v2595
      %v2628 = vunpack.c.l.b16 %v2596
      %v2629 = vunpack.c.l.b16 %v2597
      %v2630 = vunpack.c.l.b16 %v2598
      %v2631 = vunpack.c.l.b16 %v2599
      %v2632 = vunpack.c.l.b16 %v2600
      %v2633 = vunpack.c.l.b16 %v2601
      %v2634 = vunpack.c.l.b16 %v2602
      %v2635 = vunpack.c.l.b16 %v2603
      %v2636 = vunpack.c.l.b16 %v2604
      %v2637 = vunpack.c.l.b16 %v2605
      %v2638 = vunpack.c.l.b16 %v2606
      %v2639 = vpack.c.b16 %v2624, %v2623
      %v2640 = vpack.c.b16 %v2626, %v2625
      %v2641 = vpack.c.b16 %v2628, %v2627
      %v2642 = vpack.c.b16 %v2630, %v2629
      %v2643 = vpack.c.b16 %v2632, %v2631
      %v2644 = vpack.c.b16 %v2634, %v2633
      %v2645 = vpack.c.b16 %v2636, %v2635
      %v2646 = vpack.c.b16 %v2638, %v2637
      %2655 = vmatpush.bf16.msra.mxu0 %v2646
      %2656 = vmatpush.bf16.msra.mxu0 %v2645
      %2657 = vmatpush.bf16.msra.mxu0 %v2644
      %2658 = vmatpush.bf16.msra.mxu0 %v2643
      %2659 = vmatpush.bf16.msra.mxu0 %v2642
      %2660 = vmatpush.bf16.msra.mxu0 %v2641
      %2661 = vmatpush.bf16.msra.mxu0 %v2640
      %2662 = vmatpush.bf16.msra.mxu0 %v2639
      %2663 = vmatmul.bf16.gmra.mxu0 %v2572
      %v2664 = vpop.f32.mrf.mxu0
      %v2665 = vadd.f32 0.0, %v2664
      %v2666 = vpop.f32.mrf.mxu0
      %v2667 = vadd.f32 0.0, %v2666
      %2668 = vmatmul.bf16.gmra.mxu0 %v2573
      %v2669 = vpop.f32.mrf.mxu0
      %v2670 = vadd.f32 0.0, %v2669
      %v2671 = vpop.f32.mrf.mxu0
      %v2672 = vadd.f32 0.0, %v2671
      %2673 = vmatmul.bf16.gmra.mxu0 %v2574
      %v2674 = vpop.f32.mrf.mxu0
      %v2675 = vadd.f32 0.0, %v2674
      %v2676 = vpop.f32.mrf.mxu0
      %v2677 = vadd.f32 0.0, %v2676
      %2678 = vmatmul.bf16.gmra.mxu0 %v2575
      %v2679 = vpop.f32.mrf.mxu0
      %v2680 = vadd.f32 0.0, %v2679
      %v2681 = vpop.f32.mrf.mxu0
      %v2682 = vadd.f32 0.0, %v2681
      %2683 = vmatmul.bf16.gmra.mxu0 %v2576
      %v2684 = vpop.f32.mrf.mxu0
      %v2685 = vadd.f32 0.0, %v2684
      %v2686 = vpop.f32.mrf.mxu0
      %v2687 = vadd.f32 0.0, %v2686
      %2688 = vmatmul.bf16.gmra.mxu0 %v2577
      %v2689 = vpop.f32.mrf.mxu0
      %v2690 = vadd.f32 0.0, %v2689
      %v2691 = vpop.f32.mrf.mxu0
      %v2692 = vadd.f32 0.0, %v2691
      %2693 = vmatmul.bf16.gmra.mxu0 %v2578
      %v2694 = vpop.f32.mrf.mxu0
      %v2695 = vadd.f32 0.0, %v2694
      %v2696 = vpop.f32.mrf.mxu0
      %v2697 = vadd.f32 0.0, %v2696
      %2698 = vmatmul.bf16.gmra.mxu0 %v2579
      %v2699 = vpop.f32.mrf.mxu0
      %v2700 = vadd.f32 0.0, %v2699
      %v2701 = vpop.f32.mrf.mxu0
      %v2702 = vadd.f32 0.0, %v2701
      %2703 = vmatmul.bf16.gmra.mxu0 %v2580
      %v2704 = vpop.f32.mrf.mxu0
      %v2705 = vadd.f32 0.0, %v2704
      %v2706 = vpop.f32.mrf.mxu0
      %v2707 = vadd.f32 0.0, %v2706
      %2708 = vmatmul.bf16.gmra.mxu0 %v2581
      %v2709 = vpop.f32.mrf.mxu0
      %v2710 = vadd.f32 0.0, %v2709
      %v2711 = vpop.f32.mrf.mxu0
      %v2712 = vadd.f32 0.0, %v2711
      %2713 = vmatmul.bf16.gmra.mxu0 %v2582
      %v2714 = vpop.f32.mrf.mxu0
      %v2715 = vadd.f32 0.0, %v2714
      %v2716 = vpop.f32.mrf.mxu0
      %v2717 = vadd.f32 0.0, %v2716
      %2718 = vmatmul.bf16.gmra.mxu0 %v2583
      %v2719 = vpop.f32.mrf.mxu0
      %v2720 = vadd.f32 0.0, %v2719
      %v2721 = vpop.f32.mrf.mxu0
      %v2722 = vadd.f32 0.0, %v2721
      %2723 = vmatmul.bf16.gmra.mxu0 %v2584
      %v2724 = vpop.f32.mrf.mxu0
      %v2725 = vadd.f32 0.0, %v2724
      %v2726 = vpop.f32.mrf.mxu0
      %v2727 = vadd.f32 0.0, %v2726
      %2728 = vmatmul.bf16.gmra.mxu0 %v2585
      %v2729 = vpop.f32.mrf.mxu0
      %v2730 = vadd.f32 0.0, %v2729
      %v2731 = vpop.f32.mrf.mxu0
      %v2732 = vadd.f32 0.0, %v2731
      %2733 = vmatmul.bf16.gmra.mxu0 %v2586
      %v2734 = vpop.f32.mrf.mxu0
      %v2735 = vadd.f32 0.0, %v2734
      %v2736 = vpop.f32.mrf.mxu0
      %v2737 = vadd.f32 0.0, %v2736
      %2738 = vmatmul.bf16.gmra.mxu0 %v2587
      %v2739 = vpop.f32.mrf.mxu0
      %v2740 = vadd.f32 0.0, %v2739
      %v2741 = vpop.f32.mrf.mxu0
      %v2742 = vadd.f32 0.0, %v2741
      %2743 = vmatmul.bf16.gmra.mxu0 %v2588
      %v2744 = vpop.f32.mrf.mxu0
      %v2745 = vadd.f32 0.0, %v2744
      %v2746 = vpop.f32.mrf.mxu0
      %v2747 = vadd.f32 0.0, %v2746
      %2748 = vmatmul.bf16.gmra.mxu0 %v2589
      %v2749 = vpop.f32.mrf.mxu0
      %v2750 = vadd.f32 0.0, %v2749
      %v2751 = vpop.f32.mrf.mxu0
      %v2752 = vadd.f32 0.0, %v2751
      %2753 = vdwg.mxu0
      %v2754 = vadd.f32 %v2500, %v2665
      %v2755 = vadd.f32 %v2501, %v2667
      %v2756 = vadd.f32 %v2502, %v2670
      %v2757 = vadd.f32 %v2503, %v2672
      %v2758 = vadd.f32 %v2504, %v2675
      %v2759 = vadd.f32 %v2505, %v2677
      %v2760 = vadd.f32 %v2506, %v2680
      %v2761 = vadd.f32 %v2507, %v2682
      %v2762 = vadd.f32 %v2508, %v2685
      %v2763 = vadd.f32 %v2509, %v2687
      %v2764 = vadd.f32 %v2510, %v2690
      %v2765 = vadd.f32 %v2511, %v2692
      %v2766 = vadd.f32 %v2512, %v2695
      %v2767 = vadd.f32 %v2513, %v2697
      %v2768 = vadd.f32 %v2514, %v2700
      %v2769 = vadd.f32 %v2515, %v2702
      %v2770 = vadd.f32 %v2516, %v2705
      %v2771 = vadd.f32 %v2517, %v2707
      %v2772 = vadd.f32 %v2518, %v2710
      %v2773 = vadd.f32 %v2519, %v2712
      %v2774 = vadd.f32 %v2520, %v2715
      %v2775 = vadd.f32 %v2521, %v2717
      %v2776 = vadd.f32 %v2522, %v2720
      %v2777 = vadd.f32 %v2523, %v2722
      %v2778 = vadd.f32 %v2524, %v2725
      %v2779 = vadd.f32 %v2525, %v2727
      %v2780 = vadd.f32 %v2526, %v2730
      %v2781 = vadd.f32 %v2527, %v2732
      %v2782 = vadd.f32 %v2528, %v2735
      %v2783 = vadd.f32 %v2529, %v2737
      %v2784 = vadd.f32 %v2530, %v2740
      %v2785 = vadd.f32 %v2531, %v2742
      %v2786 = vadd.f32 %v2532, %v2745
      %v2787 = vadd.f32 %v2533, %v2747
      %v2788 = vadd.f32 %v2534, %v2750
      %v2789 = vadd.f32 %v2535, %v2752
      %v2790 = vld [vmem:[#allocation2 + $0x26] sm:$0xff]
      %v2791 = vld [vmem:[#allocation2 + $0x2e] sm:$0xff]
      %v2792 = vld [vmem:[#allocation2 + $0x36] sm:$0xff]
      %v2793 = vld [vmem:[#allocation2 + $0x3e] sm:$0xff]
      %v2794 = vld [vmem:[#allocation2 + $0x46] sm:$0xff]
      %v2795 = vld [vmem:[#allocation2 + $0x4e] sm:$0xff]
      %v2796 = vld [vmem:[#allocation2 + $0x56] sm:$0xff]
      %v2797 = vld [vmem:[#allocation2 + $0x5e] sm:$0xff]
      %v2798 = vld [vmem:[#allocation2 + $0x66] sm:$0xff]
      %v2799 = vld [vmem:[#allocation2 + $0x6e] sm:$0xff]
      %v2800 = vld [vmem:[#allocation2 + $0x76] sm:$0xff]
      %v2801 = vld [vmem:[#allocation2 + $0x7e] sm:$0xff]
      %v2802 = vld [vmem:[#allocation2 + $0x86] sm:$0xff]
      %v2803 = vld [vmem:[#allocation2 + $0x8e] sm:$0xff]
      %v2804 = vld [vmem:[#allocation2 + $0x96] sm:$0xff]
      %v2805 = vld [vmem:[#allocation2 + $0x9e] sm:$0xff]
      %v2806 = vld [vmem:[#allocation2 + $0xa6] sm:$0xff]
      %v2807 = vld [vmem:[#allocation2 + $0xae] sm:$0xff]
      %v2808 = vld [vmem:[#allocation2 + $0xb6] sm:$0xff]
      %v2809 = vld [vmem:[#allocation2 + $0xbe] sm:$0xff]
      %v2810 = vld [vmem:[#allocation2 + $0xc6] sm:$0xff]
      %v2811 = vld [vmem:[#allocation2 + $0xce] sm:$0xff]
      %v2812 = vld [vmem:[#allocation2 + $0xd6] sm:$0xff]
      %v2813 = vld [vmem:[#allocation2 + $0xde] sm:$0xff]
      %v2814 = vld [vmem:[#allocation2 + $0xe6] sm:$0xff]
      %v2815 = vld [vmem:[#allocation2 + $0xee] sm:$0xff]
      %v2816 = vld [vmem:[#allocation2 + $0xf6] sm:$0xff]
      %v2817 = vld [vmem:[#allocation2 + $0xfe] sm:$0xff]
      %v2818 = vld [vmem:[#allocation2 + $0x106] sm:$0xff]
      %v2819 = vld [vmem:[#allocation2 + $0x10e] sm:$0xff]
      %v2820 = vld [vmem:[#allocation2 + $0x116] sm:$0xff]
      %v2821 = vld [vmem:[#allocation2 + $0x11e] sm:$0xff]
      %v2822 = vld [vmem:[#allocation2 + $0x126] sm:$0xff]
      %v2823 = vld [vmem:[#allocation2 + $0x12e] sm:$0xff]
      %v2824 = vld [vmem:[#allocation2 + $0x136] sm:$0xff]
      %v2825 = vld [vmem:[#allocation2 + $0x13e] sm:$0xff]
      %v2826 = vpack.c.bf16 %v2791, %v2790
      %v2827 = vpack.c.bf16 %v2793, %v2792
      %v2828 = vpack.c.bf16 %v2795, %v2794
      %v2829 = vpack.c.bf16 %v2797, %v2796
      %v2830 = vpack.c.bf16 %v2799, %v2798
      %v2831 = vpack.c.bf16 %v2801, %v2800
      %v2832 = vpack.c.bf16 %v2803, %v2802
      %v2833 = vpack.c.bf16 %v2805, %v2804
      %v2834 = vpack.c.bf16 %v2807, %v2806
      %v2835 = vpack.c.bf16 %v2809, %v2808
      %v2836 = vpack.c.bf16 %v2811, %v2810
      %v2837 = vpack.c.bf16 %v2813, %v2812
      %v2838 = vpack.c.bf16 %v2815, %v2814
      %v2839 = vpack.c.bf16 %v2817, %v2816
      %v2840 = vpack.c.bf16 %v2819, %v2818
      %v2841 = vpack.c.bf16 %v2821, %v2820
      %v2842 = vpack.c.bf16 %v2823, %v2822
      %v2843 = vpack.c.bf16 %v2825, %v2824
      %s2844 = scalar_lea.vmem %s5, 512
      %v2845 = vld [vmem:[%s2844] sm:$0xf]
      %v2846 = vld [vmem:[%s2844 + $0x4] sm:$0xf]
      %v2847 = vld [vmem:[%s2844 + $0x8] sm:$0xf]
      %v2848 = vld [vmem:[%s2844 + $0xc] sm:$0xf]
      %v2849 = vld [vmem:[%s2844 + $0x10] sm:$0xf]
      %v2850 = vld [vmem:[%s2844 + $0x14] sm:$0xf]
      %v2851 = vld [vmem:[%s2844 + $0x18] sm:$0xf]
      %v2852 = vld [vmem:[%s2844 + $0x1c] sm:$0xf]
      %v2853 = vld [vmem:[%s2844 + $0x20] sm:$0xf]
      %v2854 = vld [vmem:[%s2844 + $0x24] sm:$0xf]
      %v2855 = vld [vmem:[%s2844 + $0x28] sm:$0xf]
      %v2856 = vld [vmem:[%s2844 + $0x2c] sm:$0xf]
      %v2857 = vld [vmem:[%s2844 + $0x30] sm:$0xf]
      %v2858 = vld [vmem:[%s2844 + $0x34] sm:$0xf]
      %v2859 = vld [vmem:[%s2844 + $0x38] sm:$0xf]
      %v2860 = vld [vmem:[%s2844 + $0x3c] sm:$0xf]
      %v2877 = vunpack.c.l.b16 %v2845
      %v2878 = vunpack.c.l.b16 %v2846
      %v2879 = vunpack.c.l.b16 %v2847
      %v2880 = vunpack.c.l.b16 %v2848
      %v2881 = vunpack.c.l.b16 %v2849
      %v2882 = vunpack.c.l.b16 %v2850
      %v2883 = vunpack.c.l.b16 %v2851
      %v2884 = vunpack.c.l.b16 %v2852
      %v2885 = vunpack.c.l.b16 %v2853
      %v2886 = vunpack.c.l.b16 %v2854
      %v2887 = vunpack.c.l.b16 %v2855
      %v2888 = vunpack.c.l.b16 %v2856
      %v2889 = vunpack.c.l.b16 %v2857
      %v2890 = vunpack.c.l.b16 %v2858
      %v2891 = vunpack.c.l.b16 %v2859
      %v2892 = vunpack.c.l.b16 %v2860
      %v2893 = vpack.c.b16 %v2878, %v2877
      %v2894 = vpack.c.b16 %v2880, %v2879
      %v2895 = vpack.c.b16 %v2882, %v2881
      %v2896 = vpack.c.b16 %v2884, %v2883
      %v2897 = vpack.c.b16 %v2886, %v2885
      %v2898 = vpack.c.b16 %v2888, %v2887
      %v2899 = vpack.c.b16 %v2890, %v2889
      %v2900 = vpack.c.b16 %v2892, %v2891
      %2909 = vmatpush.bf16.msra.mxu0 %v2900
      %2910 = vmatpush.bf16.msra.mxu0 %v2899
      %2911 = vmatpush.bf16.msra.mxu0 %v2898
      %2912 = vmatpush.bf16.msra.mxu0 %v2897
      %2913 = vmatpush.bf16.msra.mxu0 %v2896
      %2914 = vmatpush.bf16.msra.mxu0 %v2895
      %2915 = vmatpush.bf16.msra.mxu0 %v2894
      %2916 = vmatpush.bf16.msra.mxu0 %v2893
      %2917 = vmatmul.bf16.gmra.mxu0 %v2826
      %v2918 = vpop.f32.mrf.mxu0
      %v2919 = vadd.f32 0.0, %v2918
      %v2920 = vpop.f32.mrf.mxu0
      %v2921 = vadd.f32 0.0, %v2920
      %2922 = vmatmul.bf16.gmra.mxu0 %v2827
      %v2923 = vpop.f32.mrf.mxu0
      %v2924 = vadd.f32 0.0, %v2923
      %v2925 = vpop.f32.mrf.mxu0
      %v2926 = vadd.f32 0.0, %v2925
      %2927 = vmatmul.bf16.gmra.mxu0 %v2828
      %v2928 = vpop.f32.mrf.mxu0
      %v2929 = vadd.f32 0.0, %v2928
      %v2930 = vpop.f32.mrf.mxu0
      %v2931 = vadd.f32 0.0, %v2930
      %2932 = vmatmul.bf16.gmra.mxu0 %v2829
      %v2933 = vpop.f32.mrf.mxu0
      %v2934 = vadd.f32 0.0, %v2933
      %v2935 = vpop.f32.mrf.mxu0
      %v2936 = vadd.f32 0.0, %v2935
      %2937 = vmatmul.bf16.gmra.mxu0 %v2830
      %v2938 = vpop.f32.mrf.mxu0
      %v2939 = vadd.f32 0.0, %v2938
      %v2940 = vpop.f32.mrf.mxu0
      %v2941 = vadd.f32 0.0, %v2940
      %2942 = vmatmul.bf16.gmra.mxu0 %v2831
      %v2943 = vpop.f32.mrf.mxu0
      %v2944 = vadd.f32 0.0, %v2943
      %v2945 = vpop.f32.mrf.mxu0
      %v2946 = vadd.f32 0.0, %v2945
      %2947 = vmatmul.bf16.gmra.mxu0 %v2832
      %v2948 = vpop.f32.mrf.mxu0
      %v2949 = vadd.f32 0.0, %v2948
      %v2950 = vpop.f32.mrf.mxu0
      %v2951 = vadd.f32 0.0, %v2950
      %2952 = vmatmul.bf16.gmra.mxu0 %v2833
      %v2953 = vpop.f32.mrf.mxu0
      %v2954 = vadd.f32 0.0, %v2953
      %v2955 = vpop.f32.mrf.mxu0
      %v2956 = vadd.f32 0.0, %v2955
      %2957 = vmatmul.bf16.gmra.mxu0 %v2834
      %v2958 = vpop.f32.mrf.mxu0
      %v2959 = vadd.f32 0.0, %v2958
      %v2960 = vpop.f32.mrf.mxu0
      %v2961 = vadd.f32 0.0, %v2960
      %2962 = vmatmul.bf16.gmra.mxu0 %v2835
      %v2963 = vpop.f32.mrf.mxu0
      %v2964 = vadd.f32 0.0, %v2963
      %v2965 = vpop.f32.mrf.mxu0
      %v2966 = vadd.f32 0.0, %v2965
      %2967 = vmatmul.bf16.gmra.mxu0 %v2836
      %v2968 = vpop.f32.mrf.mxu0
      %v2969 = vadd.f32 0.0, %v2968
      %v2970 = vpop.f32.mrf.mxu0
      %v2971 = vadd.f32 0.0, %v2970
      %2972 = vmatmul.bf16.gmra.mxu0 %v2837
      %v2973 = vpop.f32.mrf.mxu0
      %v2974 = vadd.f32 0.0, %v2973
      %v2975 = vpop.f32.mrf.mxu0
      %v2976 = vadd.f32 0.0, %v2975
      %2977 = vmatmul.bf16.gmra.mxu0 %v2838
      %v2978 = vpop.f32.mrf.mxu0
      %v2979 = vadd.f32 0.0, %v2978
      %v2980 = vpop.f32.mrf.mxu0
      %v2981 = vadd.f32 0.0, %v2980
      %2982 = vmatmul.bf16.gmra.mxu0 %v2839
      %v2983 = vpop.f32.mrf.mxu0
      %v2984 = vadd.f32 0.0, %v2983
      %v2985 = vpop.f32.mrf.mxu0
      %v2986 = vadd.f32 0.0, %v2985
      %2987 = vmatmul.bf16.gmra.mxu0 %v2840
      %v2988 = vpop.f32.mrf.mxu0
      %v2989 = vadd.f32 0.0, %v2988
      %v2990 = vpop.f32.mrf.mxu0
      %v2991 = vadd.f32 0.0, %v2990
      %2992 = vmatmul.bf16.gmra.mxu0 %v2841
      %v2993 = vpop.f32.mrf.mxu0
      %v2994 = vadd.f32 0.0, %v2993
      %v2995 = vpop.f32.mrf.mxu0
      %v2996 = vadd.f32 0.0, %v2995
      %2997 = vmatmul.bf16.gmra.mxu0 %v2842
      %v2998 = vpop.f32.mrf.mxu0
      %v2999 = vadd.f32 0.0, %v2998
      %v3000 = vpop.f32.mrf.mxu0
      %v3001 = vadd.f32 0.0, %v3000
      %3002 = vmatmul.bf16.gmra.mxu0 %v2843
      %v3003 = vpop.f32.mrf.mxu0
      %v3004 = vadd.f32 0.0, %v3003
      %v3005 = vpop.f32.mrf.mxu0
      %v3006 = vadd.f32 0.0, %v3005
      %3007 = vdwg.mxu0
      %v3008 = vadd.f32 %v2754, %v2919
      %v3009 = vadd.f32 %v2755, %v2921
      %v3010 = vadd.f32 %v2756, %v2924
      %v3011 = vadd.f32 %v2757, %v2926
      %v3012 = vadd.f32 %v2758, %v2929
      %v3013 = vadd.f32 %v2759, %v2931
      %v3014 = vadd.f32 %v2760, %v2934
      %v3015 = vadd.f32 %v2761, %v2936
      %v3016 = vadd.f32 %v2762, %v2939
      %v3017 = vadd.f32 %v2763, %v2941
      %v3018 = vadd.f32 %v2764, %v2944
      %v3019 = vadd.f32 %v2765, %v2946
      %v3020 = vadd.f32 %v2766, %v2949
      %v3021 = vadd.f32 %v2767, %v2951
      %v3022 = vadd.f32 %v2768, %v2954
      %v3023 = vadd.f32 %v2769, %v2956
      %v3024 = vadd.f32 %v2770, %v2959
      %v3025 = vadd.f32 %v2771, %v2961
      %v3026 = vadd.f32 %v2772, %v2964
      %v3027 = vadd.f32 %v2773, %v2966
      %v3028 = vadd.f32 %v2774, %v2969
      %v3029 = vadd.f32 %v2775, %v2971
      %v3030 = vadd.f32 %v2776, %v2974
      %v3031 = vadd.f32 %v2777, %v2976
      %v3032 = vadd.f32 %v2778, %v2979
      %v3033 = vadd.f32 %v2779, %v2981
      %v3034 = vadd.f32 %v2780, %v2984
      %v3035 = vadd.f32 %v2781, %v2986
      %v3036 = vadd.f32 %v2782, %v2989
      %v3037 = vadd.f32 %v2783, %v2991
      %v3038 = vadd.f32 %v2784, %v2994
      %v3039 = vadd.f32 %v2785, %v2996
      %v3040 = vadd.f32 %v2786, %v2999
      %v3041 = vadd.f32 %v2787, %v3001
      %v3042 = vadd.f32 %v2788, %v3004
      %v3043 = vadd.f32 %v2789, %v3006
      %v3044 = vpack.c.bf16 %v3008, %v3008
      %v3045 = vpack.c.bf16 %v3009, %v3009
      %v3046 = vpack.c.bf16 %v3010, %v3010
      %v3047 = vpack.c.bf16 %v3011, %v3011
      %v3048 = vpack.c.bf16 %v3012, %v3012
      %v3049 = vpack.c.bf16 %v3013, %v3013
      %v3050 = vpack.c.bf16 %v3014, %v3014
      %v3051 = vpack.c.bf16 %v3015, %v3015
      %v3052 = vpack.c.bf16 %v3016, %v3016
      %v3053 = vpack.c.bf16 %v3017, %v3017
      %v3054 = vpack.c.bf16 %v3018, %v3018
      %v3055 = vpack.c.bf16 %v3019, %v3019
      %v3056 = vpack.c.bf16 %v3020, %v3020
      %v3057 = vpack.c.bf16 %v3021, %v3021
      %v3058 = vpack.c.bf16 %v3022, %v3022
      %v3059 = vpack.c.bf16 %v3023, %v3023
      %v3060 = vpack.c.bf16 %v3024, %v3024
      %v3061 = vpack.c.bf16 %v3025, %v3025
      %v3062 = vpack.c.bf16 %v3026, %v3026
      %v3063 = vpack.c.bf16 %v3027, %v3027
      %v3064 = vpack.c.bf16 %v3028, %v3028
      %v3065 = vpack.c.bf16 %v3029, %v3029
      %v3066 = vpack.c.bf16 %v3030, %v3030
      %v3067 = vpack.c.bf16 %v3031, %v3031
      %v3068 = vpack.c.bf16 %v3032, %v3032
      %v3069 = vpack.c.bf16 %v3033, %v3033
      %v3070 = vpack.c.bf16 %v3034, %v3034
      %v3071 = vpack.c.bf16 %v3035, %v3035
      %v3072 = vpack.c.bf16 %v3036, %v3036
      %v3073 = vpack.c.bf16 %v3037, %v3037
      %v3074 = vpack.c.bf16 %v3038, %v3038
      %v3075 = vpack.c.bf16 %v3039, %v3039
      %v3076 = vpack.c.bf16 %v3040, %v3040
      %v3077 = vpack.c.bf16 %v3041, %v3041
      %v3078 = vpack.c.bf16 %v3042, %v3042
      %v3079 = vpack.c.bf16 %v3043, %v3043
      %3080 = vst [vmem:[%s285] sm:$0xf] %v3044
      %3081 = vst [vmem:[%s285 + $0x4] sm:$0xf] %v3045
      %3082 = vst [vmem:[%s285 + $0x8] sm:$0xf] %v3046
      %3083 = vst [vmem:[%s285 + $0xc] sm:$0xf] %v3047
      %3084 = vst [vmem:[%s285 + $0x10] sm:$0xf] %v3048
      %3085 = vst [vmem:[%s285 + $0x14] sm:$0xf] %v3049
      %3086 = vst [vmem:[%s285 + $0x18] sm:$0xf] %v3050
      %3087 = vst [vmem:[%s285 + $0x1c] sm:$0xf] %v3051
      %3088 = vst [vmem:[%s285 + $0x20] sm:$0xf] %v3052
      %3089 = vst [vmem:[%s285 + $0x24] sm:$0xf] %v3053
      %3090 = vst [vmem:[%s285 + $0x28] sm:$0xf] %v3054
      %3091 = vst [vmem:[%s285 + $0x2c] sm:$0xf] %v3055
      %3092 = vst [vmem:[%s285 + $0x30] sm:$0xf] %v3056
      %3093 = vst [vmem:[%s285 + $0x34] sm:$0xf] %v3057
      %3094 = vst [vmem:[%s285 + $0x38] sm:$0xf] %v3058
      %3095 = vst [vmem:[%s285 + $0x3c] sm:$0xf] %v3059
      %3096 = vst [vmem:[%s285 + $0x40] sm:$0xf] %v3060
      %3097 = vst [vmem:[%s285 + $0x44] sm:$0xf] %v3061
      %3098 = vst [vmem:[%s285 + $0x48] sm:$0xf] %v3062
      %3099 = vst [vmem:[%s285 + $0x4c] sm:$0xf] %v3063
      %3100 = vst [vmem:[%s285 + $0x50] sm:$0xf] %v3064
      %3101 = vst [vmem:[%s285 + $0x54] sm:$0xf] %v3065
      %3102 = vst [vmem:[%s285 + $0x58] sm:$0xf] %v3066
      %3103 = vst [vmem:[%s285 + $0x5c] sm:$0xf] %v3067
      %3104 = vst [vmem:[%s285 + $0x60] sm:$0xf] %v3068
      %3105 = vst [vmem:[%s285 + $0x64] sm:$0xf] %v3069
      %3106 = vst [vmem:[%s285 + $0x68] sm:$0xf] %v3070
      %3107 = vst [vmem:[%s285 + $0x6c] sm:$0xf] %v3071
      %3108 = vst [vmem:[%s285 + $0x70] sm:$0xf] %v3072
      %3109 = vst [vmem:[%s285 + $0x74] sm:$0xf] %v3073
      %3110 = vst [vmem:[%s285 + $0x78] sm:$0xf] %v3074
      %3111 = vst [vmem:[%s285 + $0x7c] sm:$0xf] %v3075
      %3112 = vst [vmem:[%s285 + $0x80] sm:$0xf] %v3076
      %3113 = vst [vmem:[%s285 + $0x84] sm:$0xf] %v3077
      %3114 = vst [vmem:[%s285 + $0x88] sm:$0xf] %v3078
      %3115 = vst [vmem:[%s285 + $0x8c] sm:$0xf] %v3079
      %v3116 = vld [vmem:[%s4] sm:$0xff]
      %v3117 = vld [vmem:[%s4 + $0x8] sm:$0xff]
      %v3118 = vld [vmem:[%s4 + $0x10] sm:$0xff]
      %v3119 = vld [vmem:[%s4 + $0x18] sm:$0xff]
      %v3120 = vld [vmem:[%s4 + $0x20] sm:$0xff]
      %v3121 = vld [vmem:[%s4 + $0x28] sm:$0xff]
      %v3122 = vld [vmem:[%s4 + $0x30] sm:$0xff]
      %v3123 = vld [vmem:[%s4 + $0x38] sm:$0xff]
      %v3124 = vld [vmem:[%s4 + $0x40] sm:$0xff]
      %v3125 = vld [vmem:[%s4 + $0x48] sm:$0xff]
      %v3126 = vld [vmem:[%s4 + $0x50] sm:$0xff]
      %v3127 = vld [vmem:[%s4 + $0x58] sm:$0xff]
      %v3128 = vld [vmem:[%s4 + $0x60] sm:$0xff]
      %v3129 = vld [vmem:[%s4 + $0x68] sm:$0xff]
      %v3130 = vld [vmem:[%s4 + $0x70] sm:$0xff]
      %v3131 = vld [vmem:[%s4 + $0x78] sm:$0xff]
      %v3132 = vld [vmem:[%s4 + $0x80] sm:$0xff]
      %v3133 = vld [vmem:[%s4 + $0x88] sm:$0xff]
      %v3134 = vld [vmem:[%s4 + $0x90] sm:$0xff]
      %v3135 = vld [vmem:[%s4 + $0x98] sm:$0xff]
      %v3136 = vld [vmem:[%s4 + $0xa0] sm:$0xff]
      %v3137 = vld [vmem:[%s4 + $0xa8] sm:$0xff]
      %v3138 = vld [vmem:[%s4 + $0xb0] sm:$0xff]
      %v3139 = vld [vmem:[%s4 + $0xb8] sm:$0xff]
      %v3140 = vld [vmem:[%s4 + $0xc0] sm:$0xff]
      %v3141 = vld [vmem:[%s4 + $0xc8] sm:$0xff]
      %v3142 = vld [vmem:[%s4 + $0xd0] sm:$0xff]
      %v3143 = vld [vmem:[%s4 + $0xd8] sm:$0xff]
      %v3144 = vld [vmem:[%s4 + $0xe0] sm:$0xff]
      %v3145 = vld [vmem:[%s4 + $0xe8] sm:$0xff]
      %v3146 = vld [vmem:[%s4 + $0xf0] sm:$0xff]
      %v3147 = vld [vmem:[%s4 + $0xf8] sm:$0xff]
      %v3148 = vld [vmem:[%s4 + $0x100] sm:$0xff]
      %v3149 = vld [vmem:[%s4 + $0x108] sm:$0xff]
      %v3150 = vld [vmem:[%s4 + $0x110] sm:$0xff]
      %v3151 = vld [vmem:[%s4 + $0x118] sm:$0xff]
      %3153 = vset.pattern.permute.xlu0 0
      %3154 = vperm.xlu0 %3153, %v3116
      %v3155 = vpop.permute.xlu0 %3154
      %3158 = vset.pattern.permute.xlu0 0
      %3159 = vperm.xlu0 %3158, %v3117
      %v3160 = vpop.permute.xlu0 %3159
      %3163 = vset.pattern.permute.xlu0 0
      %3164 = vperm.xlu0 %3163, %v3118
      %v3165 = vpop.permute.xlu0 %3164
      %3168 = vset.pattern.permute.xlu0 0
      %3169 = vperm.xlu0 %3168, %v3119
      %v3170 = vpop.permute.xlu0 %3169
      %3173 = vset.pattern.permute.xlu0 0
      %3174 = vperm.xlu0 %3173, %v3120
      %v3175 = vpop.permute.xlu0 %3174
      %3178 = vset.pattern.permute.xlu0 0
      %3179 = vperm.xlu0 %3178, %v3121
      %v3180 = vpop.permute.xlu0 %3179
      %3183 = vset.pattern.permute.xlu0 0
      %3184 = vperm.xlu0 %3183, %v3122
      %v3185 = vpop.permute.xlu0 %3184
      %3188 = vset.pattern.permute.xlu0 0
      %3189 = vperm.xlu0 %3188, %v3123
      %v3190 = vpop.permute.xlu0 %3189
      %3193 = vset.pattern.permute.xlu0 0
      %3194 = vperm.xlu0 %3193, %v3124
      %v3195 = vpop.permute.xlu0 %3194
      %3198 = vset.pattern.permute.xlu0 0
      %3199 = vperm.xlu0 %3198, %v3125
      %v3200 = vpop.permute.xlu0 %3199
      %3203 = vset.pattern.permute.xlu0 0
      %3204 = vperm.xlu0 %3203, %v3126
      %v3205 = vpop.permute.xlu0 %3204
      %3208 = vset.pattern.permute.xlu0 0
      %3209 = vperm.xlu0 %3208, %v3127
      %v3210 = vpop.permute.xlu0 %3209
      %3213 = vset.pattern.permute.xlu0 0
      %3214 = vperm.xlu0 %3213, %v3128
      %v3215 = vpop.permute.xlu0 %3214
      %3218 = vset.pattern.permute.xlu0 0
      %3219 = vperm.xlu0 %3218, %v3129
      %v3220 = vpop.permute.xlu0 %3219
      %3223 = vset.pattern.permute.xlu0 0
      %3224 = vperm.xlu0 %3223, %v3130
      %v3225 = vpop.permute.xlu0 %3224
      %3228 = vset.pattern.permute.xlu0 0
      %3229 = vperm.xlu0 %3228, %v3131
      %v3230 = vpop.permute.xlu0 %3229
      %3233 = vset.pattern.permute.xlu0 0
      %3234 = vperm.xlu0 %3233, %v3132
      %v3235 = vpop.permute.xlu0 %3234
      %3238 = vset.pattern.permute.xlu0 0
      %3239 = vperm.xlu0 %3238, %v3133
      %v3240 = vpop.permute.xlu0 %3239
      %3243 = vset.pattern.permute.xlu0 0
      %3244 = vperm.xlu0 %3243, %v3134
      %v3245 = vpop.permute.xlu0 %3244
      %3248 = vset.pattern.permute.xlu0 0
      %3249 = vperm.xlu0 %3248, %v3135
      %v3250 = vpop.permute.xlu0 %3249
      %3253 = vset.pattern.permute.xlu0 0
      %3254 = vperm.xlu0 %3253, %v3136
      %v3255 = vpop.permute.xlu0 %3254
      %3258 = vset.pattern.permute.xlu0 0
      %3259 = vperm.xlu0 %3258, %v3137
      %v3260 = vpop.permute.xlu0 %3259
      %3263 = vset.pattern.permute.xlu0 0
      %3264 = vperm.xlu0 %3263, %v3138
      %v3265 = vpop.permute.xlu0 %3264
      %3268 = vset.pattern.permute.xlu0 0
      %3269 = vperm.xlu0 %3268, %v3139
      %v3270 = vpop.permute.xlu0 %3269
      %3273 = vset.pattern.permute.xlu0 0
      %3274 = vperm.xlu0 %3273, %v3140
      %v3275 = vpop.permute.xlu0 %3274
      %3278 = vset.pattern.permute.xlu0 0
      %3279 = vperm.xlu0 %3278, %v3141
      %v3280 = vpop.permute.xlu0 %3279
      %3283 = vset.pattern.permute.xlu0 0
      %3284 = vperm.xlu0 %3283, %v3142
      %v3285 = vpop.permute.xlu0 %3284
      %3288 = vset.pattern.permute.xlu0 0
      %3289 = vperm.xlu0 %3288, %v3143
      %v3290 = vpop.permute.xlu0 %3289
      %3293 = vset.pattern.permute.xlu0 0
      %3294 = vperm.xlu0 %3293, %v3144
      %v3295 = vpop.permute.xlu0 %3294
      %3298 = vset.pattern.permute.xlu0 0
      %3299 = vperm.xlu0 %3298, %v3145
      %v3300 = vpop.permute.xlu0 %3299
      %3303 = vset.pattern.permute.xlu0 0
      %3304 = vperm.xlu0 %3303, %v3146
      %v3305 = vpop.permute.xlu0 %3304
      %3308 = vset.pattern.permute.xlu0 0
      %3309 = vperm.xlu0 %3308, %v3147
      %v3310 = vpop.permute.xlu0 %3309
      %3313 = vset.pattern.permute.xlu0 0
      %3314 = vperm.xlu0 %3313, %v3148
      %v3315 = vpop.permute.xlu0 %3314
      %3318 = vset.pattern.permute.xlu0 0
      %3319 = vperm.xlu0 %3318, %v3149
      %v3320 = vpop.permute.xlu0 %3319
      %3323 = vset.pattern.permute.xlu0 0
      %3324 = vperm.xlu0 %3323, %v3150
      %v3325 = vpop.permute.xlu0 %3324
      %3328 = vset.pattern.permute.xlu0 0
      %3329 = vperm.xlu0 %3328, %v3151
      %v3330 = vpop.permute.xlu0 %3329
      %v3332 = vmul.f32 %v3008, %v3155
      %v3333 = vmul.f32 %v3009, %v3160
      %v3334 = vmul.f32 %v3010, %v3165
      %v3335 = vmul.f32 %v3011, %v3170
      %v3336 = vmul.f32 %v3012, %v3175
      %v3337 = vmul.f32 %v3013, %v3180
      %v3338 = vmul.f32 %v3014, %v3185
      %v3339 = vmul.f32 %v3015, %v3190
      %v3340 = vmul.f32 %v3016, %v3195
      %v3341 = vmul.f32 %v3017, %v3200
      %v3342 = vmul.f32 %v3018, %v3205
      %v3343 = vmul.f32 %v3019, %v3210
      %v3344 = vmul.f32 %v3020, %v3215
      %v3345 = vmul.f32 %v3021, %v3220
      %v3346 = vmul.f32 %v3022, %v3225
      %v3347 = vmul.f32 %v3023, %v3230
      %v3348 = vmul.f32 %v3024, %v3235
      %v3349 = vmul.f32 %v3025, %v3240
      %v3350 = vmul.f32 %v3026, %v3245
      %v3351 = vmul.f32 %v3027, %v3250
      %v3352 = vmul.f32 %v3028, %v3255
      %v3353 = vmul.f32 %v3029, %v3260
      %v3354 = vmul.f32 %v3030, %v3265
      %v3355 = vmul.f32 %v3031, %v3270
      %v3356 = vmul.f32 %v3032, %v3275
      %v3357 = vmul.f32 %v3033, %v3280
      %v3358 = vmul.f32 %v3034, %v3285
      %v3359 = vmul.f32 %v3035, %v3290
      %v3360 = vmul.f32 %v3036, %v3295
      %v3361 = vmul.f32 %v3037, %v3300
      %v3362 = vmul.f32 %v3038, %v3305
      %v3363 = vmul.f32 %v3039, %v3310
      %v3364 = vmul.f32 %v3040, %v3315
      %v3365 = vmul.f32 %v3041, %v3320
      %v3366 = vmul.f32 %v3042, %v3325
      %v3367 = vmul.f32 %v3043, %v3330
      %v3368 = vadd.f32 %v3332, %v3333
      %v3369 = vadd.f32 %v3368, %v3334
      %v3370 = vadd.f32 %v3369, %v3335
      %v3371 = vadd.f32 %v3370, %v3336
      %v3372 = vadd.f32 %v3371, %v3337
      %v3373 = vadd.f32 %v3372, %v3338
      %v3374 = vadd.f32 %v3373, %v3339
      %v3375 = vadd.f32 %v3374, %v3340
      %v3376 = vadd.f32 %v3375, %v3341
      %v3377 = vadd.f32 %v3376, %v3342
      %v3378 = vadd.f32 %v3377, %v3343
      %v3379 = vadd.f32 %v3378, %v3344
      %v3380 = vadd.f32 %v3379, %v3345
      %v3381 = vadd.f32 %v3380, %v3346
      %v3382 = vadd.f32 %v3381, %v3347
      %v3383 = vadd.f32 %v3382, %v3348
      %v3384 = vadd.f32 %v3383, %v3349
      %v3385 = vadd.f32 %v3384, %v3350
      %v3386 = vadd.f32 %v3385, %v3351
      %v3387 = vadd.f32 %v3386, %v3352
      %v3388 = vadd.f32 %v3387, %v3353
      %v3389 = vadd.f32 %v3388, %v3354
      %v3390 = vadd.f32 %v3389, %v3355
      %v3391 = vadd.f32 %v3390, %v3356
      %v3392 = vadd.f32 %v3391, %v3357
      %v3393 = vadd.f32 %v3392, %v3358
      %v3394 = vadd.f32 %v3393, %v3359
      %v3395 = vadd.f32 %v3394, %v3360
      %v3396 = vadd.f32 %v3395, %v3361
      %v3397 = vadd.f32 %v3396, %v3362
      %v3398 = vadd.f32 %v3397, %v3363
      %v3399 = vadd.f32 %v3398, %v3364
      %v3400 = vadd.f32 %v3399, %v3365
      %v3401 = vadd.f32 %v3400, %v3366
      %v3402 = vadd.f32 %v3401, %v3367
      %v3403 = vrot.slane %v3402, 4
      %v3404 = vadd.f32 %v3402, %v3403
      %v3405 = vrot.slane %v3404, 2
      %v3406 = vadd.f32 %v3404, %v3405
      %v3407 = vrot.slane %v3406, 1
      %v3408 = vadd.f32 %v3406, %v3407
      %v3409 = vmul.f32 %v3332, %v3008
      %v3410 = vmul.f32 %v3333, %v3009
      %v3411 = vmul.f32 %v3334, %v3010
      %v3412 = vmul.f32 %v3335, %v3011
      %v3413 = vmul.f32 %v3336, %v3012
      %v3414 = vmul.f32 %v3337, %v3013
      %v3415 = vmul.f32 %v3338, %v3014
      %v3416 = vmul.f32 %v3339, %v3015
      %v3417 = vmul.f32 %v3340, %v3016
      %v3418 = vmul.f32 %v3341, %v3017
      %v3419 = vmul.f32 %v3342, %v3018
      %v3420 = vmul.f32 %v3343, %v3019
      %v3421 = vmul.f32 %v3344, %v3020
      %v3422 = vmul.f32 %v3345, %v3021
      %v3423 = vmul.f32 %v3346, %v3022
      %v3424 = vmul.f32 %v3347, %v3023
      %v3425 = vmul.f32 %v3348, %v3024
      %v3426 = vmul.f32 %v3349, %v3025
      %v3427 = vmul.f32 %v3350, %v3026
      %v3428 = vmul.f32 %v3351, %v3027
      %v3429 = vmul.f32 %v3352, %v3028
      %v3430 = vmul.f32 %v3353, %v3029
      %v3431 = vmul.f32 %v3354, %v3030
      %v3432 = vmul.f32 %v3355, %v3031
      %v3433 = vmul.f32 %v3356, %v3032
      %v3434 = vmul.f32 %v3357, %v3033
      %v3435 = vmul.f32 %v3358, %v3034
      %v3436 = vmul.f32 %v3359, %v3035
      %v3437 = vmul.f32 %v3360, %v3036
      %v3438 = vmul.f32 %v3361, %v3037
      %v3439 = vmul.f32 %v3362, %v3038
      %v3440 = vmul.f32 %v3363, %v3039
      %v3441 = vmul.f32 %v3364, %v3040
      %v3442 = vmul.f32 %v3365, %v3041
      %v3443 = vmul.f32 %v3366, %v3042
      %v3444 = vmul.f32 %v3367, %v3043
      %v3445 = vadd.f32 %v3409, %v3410
      %v3446 = vadd.f32 %v3445, %v3411
      %v3447 = vadd.f32 %v3446, %v3412
      %v3448 = vadd.f32 %v3447, %v3413
      %v3449 = vadd.f32 %v3448, %v3414
      %v3450 = vadd.f32 %v3449, %v3415
      %v3451 = vadd.f32 %v3450, %v3416
      %v3452 = vadd.f32 %v3451, %v3417
      %v3453 = vadd.f32 %v3452, %v3418
      %v3454 = vadd.f32 %v3453, %v3419
      %v3455 = vadd.f32 %v3454, %v3420
      %v3456 = vadd.f32 %v3455, %v3421
      %v3457 = vadd.f32 %v3456, %v3422
      %v3458 = vadd.f32 %v3457, %v3423
      %v3459 = vadd.f32 %v3458, %v3424
      %v3460 = vadd.f32 %v3459, %v3425
      %v3461 = vadd.f32 %v3460, %v3426
      %v3462 = vadd.f32 %v3461, %v3427
      %v3463 = vadd.f32 %v3462, %v3428
      %v3464 = vadd.f32 %v3463, %v3429
      %v3465 = vadd.f32 %v3464, %v3430
      %v3466 = vadd.f32 %v3465, %v3431
      %v3467 = vadd.f32 %v3466, %v3432
      %v3468 = vadd.f32 %v3467, %v3433
      %v3469 = vadd.f32 %v3468, %v3434
      %v3470 = vadd.f32 %v3469, %v3435
      %v3471 = vadd.f32 %v3470, %v3436
      %v3472 = vadd.f32 %v3471, %v3437
      %v3473 = vadd.f32 %v3472, %v3438
      %v3474 = vadd.f32 %v3473, %v3439
      %v3475 = vadd.f32 %v3474, %v3440
      %v3476 = vadd.f32 %v3475, %v3441
      %v3477 = vadd.f32 %v3476, %v3442
      %v3478 = vadd.f32 %v3477, %v3443
      %v3479 = vadd.f32 %v3478, %v3444
      %v3480 = vrot.slane %v3479, 4
      %v3481 = vadd.f32 %v3479, %v3480
      %v3482 = vrot.slane %v3481, 2
      %v3483 = vadd.f32 %v3481, %v3482
      %v3484 = vrot.slane %v3483, 1
      %v3485 = vadd.f32 %v3483, %v3484
      %vm3486 = vcmask 1040384
      %v3487 = vsel %vm3486, %v3408, %v3485
      %3488 = vst [vmem:[%s289] sm:$0x3] %v3487
      %p3489 = scmp.lt.s32.totalorder %s19, 1
      %s3490 = scalar_select %p3489, %s19, 1
      %s3491 = smul.addr %s3490, 36
      %s3492 = smul.addr %s3491, 4
      %s3493 = scalar_lea.vmem %s6, %s3492
      %p3494 = scmp.lt.s32.totalorder %s19, 1
      %s3495 = scalar_select %p3494, %s19, 1
      %s3496 = smul.addr %s3495, 2
      %s3497 = scalar_lea.vmem %s7, %s3496
      // Predicated region
      $region45: #{block_forward.5} parent=43 // pred_check
        %p3498 = pneg %p168
      $region46: #{block_forward.5} parent=43 // pred_check_branch
        %3500 = sbr.rel (%p3498) target = $region48
      $region47: #{block_forward.5} parent=43 // pred_region
        _
      $region48: #{block_forward.5} parent=43 // pred_fallthru
        _
      // Predicated region
      $region49: #{block_forward.5} parent=43 // pred_check
        %p3501 = pneg %p194
      $region50: #{block_forward.5} parent=43 // pred_check_branch
        %3503 = sbr.rel (%p3501) target = $region52
      $region51: #{block_forward.5} parent=43 // pred_region
        _
      $region52: #{block_forward.5} parent=43 // pred_fallthru
        _
    $region44: #{block_forward.5} parent=5 // pred_fallthru
      _
    %p3504 = scmp.le.s32.totalorder 2, %s14
    // Predicated region
    $region53: #{block_forward.5} parent=5 // pred_check
      %p3505 = pneg %p3504
    $region54: #{block_forward.5} parent=5 // pred_check_branch
      %3507 = sbr.rel (%p3505) target = $region56
    $region55: #{block_forward.5} parent=5 // pred_region
      %s3508 = ssub.s32 %s14, 2
      // Predicated region
      $region57: #{block_forward.5} parent=55 // pred_check
        %p3509 = pneg %p174
      $region58: #{block_forward.5} parent=55 // pred_check_branch
        %3511 = sbr.rel (%p3509) target = $region60
      $region59: #{block_forward.5} parent=55 // pred_region
        %p3512 = scmp.lt.s32.totalorder %s20, 1
        %s3513 = scalar_select %p3512, %s20, 1
        %s3514 = smul.addr %s3513, 36
        %s3515 = smul.addr %s3514, 4
        %s3516 = scalar_lea.vmem %s6, %s3515
      $region60: #{block_forward.5} parent=55 // pred_fallthru
        _
      // Predicated region
      $region61: #{block_forward.5} parent=55 // pred_check
        %p3517 = pneg %p200
      $region62: #{block_forward.5} parent=55 // pred_check_branch
        %3519 = sbr.rel (%p3517) target = $region64
      $region63: #{block_forward.5} parent=55 // pred_region
        %p3520 = scmp.lt.s32.totalorder %s20, 1
        %s3521 = scalar_select %p3520, %s20, 1
        %s3522 = smul.addr %s3521, 2
        %s3523 = scalar_lea.vmem %s7, %s3522
      $region64: #{block_forward.5} parent=55 // pred_fallthru
        _
    $region56: #{block_forward.5} parent=5 // pred_fallthru
      _
  $region6: #{block_forward.5} parent=0 // loop_footer
    %s18 = sadd.s32 1, %s14
  $region7: #{block_forward.5} parent=0 // loop_footer_branch
    %13 = sbr.rel target = $region3
  $region8: #{block_forward.5} parent=0 // loop_exit
    _

</llo_original>
